<compile_context>
chip_gen: v7x
topology: tpu7x:2x2x1
jax: 0.10.0
libtpu: 0.0.40
codegen_flags: <defaults>
</compile_context>

<pallas_src>
import functools

import jax
import jax.numpy as jnp
from jax.experimental import pallas as pl
from jax.experimental.pallas import tpu as pltpu

K = 3          # 3x3 convolutions
EPS = 1e-5     # PyTorch BatchNorm2d default eps


def _round_up(v, m):
    return ((v + m - 1) // m) * m


def _conv_stats_kernel(*refs, height, width, lpad, fuse_affine_relu):
    """One grid step = one image.

    Optionally applies the previous BN (folded to scale/shift) + ReLU to the
    incoming tile, then a 3x3/stride1/pad1 conv as 9 per-tap
    (Cout,Cin)@(Cin,HW) MXU GEMMs accumulated in f32, and emits the conv
    output tile plus per-image BN partial sums.
    """
    if fuse_affine_relu:
        src_ref, ss_ref, w_ref, y_ref, sum_ref, ssq_ref, xe_ref = refs
    else:
        src_ref, w_ref, y_ref, sum_ref, ssq_ref, xe_ref = refs

    cp = xe_ref.shape[0]
    hw = height * width

    src = src_ref[0]                                   # (Cp, HW) bf16
    if fuse_affine_relu:
        scale = ss_ref[:, 0:1]                         # (Cp, 1) f32
        shift = ss_ref[:, 1:2]
        src = jnp.maximum(src.astype(jnp.float32) * scale + shift, 0.0)
        src = src.astype(xe_ref.dtype)

    # Halo-extended staging buffer: zero ONLY the halo bands; the interior is
    # overwritten every step.  lpad is lane-aligned so the big interior store
    # is an unmasked vst.
    xe_ref[:, :lpad] = jnp.zeros((cp, lpad), xe_ref.dtype)
    xe_ref[:, lpad + hw:] = jnp.zeros((cp, lpad), xe_ref.dtype)
    xe_ref[:, lpad:lpad + hw] = src

    # Boundary masks at (1, HW), broadcast over channels.  Only the dx=+/-1
    # row wrap needs masking; dy taps that leave the image land in the zeroed
    # halo bands.  NOTE: `%` with non-power-of-two W lowers to a multi-op VPU
    # sequence; at production W precompute px in the wrapper instead.
    px = jax.lax.broadcasted_iota(jnp.int32, (1, hw), 1) % width
    dx_ok = {-1: px >= 1, 0: None, 1: px <= width - 2}

    acc = jnp.zeros((cp, hw), jnp.float32)
    taps = [(ky - 1, kx - 1) for ky in range(K) for kx in range(K)]
    for t, (dy, dx) in enumerate(taps):
        s = dy * width + dx
        tap = xe_ref[:, lpad + s:lpad + s + hw]        # (Cp, HW) bf16
        if dx_ok[dx] is not None:
            tap = jnp.where(dx_ok[dx], tap, jnp.zeros_like(tap))
        # M = Cp underfills the MXU at these shapes; acceptable while the
        # kernel is HBM-bound.  On v7x the MRB accumulates these in place.
        acc = acc + jnp.dot(w_ref[t], tap, preferred_element_type=jnp.float32)

    # Per-image BN partials (f32); finalized across the image grid in the
    # wrapper so this grid axis stays "parallel" (megacore-shardable).
    sum_ref[0] = jnp.sum(acc, axis=1, keepdims=True)
    ssq_ref[0] = jnp.sum(acc * acc, axis=1, keepdims=True)
    y_ref[0] = acc.astype(y_ref.dtype)


def _bn_residual_kernel(y_ref, x_ref, ss_ref, out_ref):
    """out = y * scale + shift + identity, accumulated in f32 (no final ReLU)."""
    scale = ss_ref[:, 0:1]
    shift = ss_ref[:, 1:2]
    out_ref[0] = (y_ref[0].astype(jnp.float32) * scale + shift
                  + x_ref[0].astype(jnp.float32))


@jax.jit
def no_relu_basic_resnet_unit(x, w1, b1, g1, be1, w2, b2, g2, be2):
    # Conv bias is exactly cancelled by training-mode BatchNorm's mean
    # subtraction -> dead inputs; accepted for API parity, never shipped to
    # the kernels.
    del b1, b2
    N, C, H, W = x.shape
    assert w1.shape[0] == C and w2.shape[0] == C, \
        "residual add requires in_channels == out_channels"
    HW = H * W
    Cp = _round_up(C, 16)            # pad channels to the bf16 sublane tile
    lpad = _round_up(W + 1, 128)     # halo width, rounded to the lane tile
    count = float(N * HW)
    f32, bf16 = jnp.float32, jnp.bfloat16

    # Channel-padded lane-dense (N, Cp, H*W) bf16 activations.  Keeping N as
    # the leading/grid axis means no wrapper transpose (just reshape+pad+cast)
    # and x ships through HBM at half the bytes.
    xcm = jnp.pad(x.astype(bf16).reshape(N, C, HW),
                  ((0, 0), (0, Cp - C), (0, 0)))

    def wtaps(w):   # (C, C, 3, 3) -> (9, Cp, Cp) bf16, [ky*3+kx, cout, cin]
        wp = jnp.pad(w.astype(f32), ((0, Cp - C), (0, Cp - C), (0, 0), (0, 0)))
        return jnp.transpose(wp, (2, 3, 0, 1)).reshape(K * K, Cp, Cp).astype(bf16)

    def cpad(v):
        return jnp.pad(v.astype(f32), (0, Cp - C))

    act_spec = pl.BlockSpec((1, Cp, HW), lambda n: (n, 0, 0))
    w_spec = pl.BlockSpec((K * K, Cp, Cp), lambda n: (0, 0, 0))
    ss_spec = pl.BlockSpec((Cp, 2), lambda n: (0, 0))
    stat_spec = pl.BlockSpec((1, Cp, 1), lambda n: (n, 0, 0))
    params = pltpu.CompilerParams(dimension_semantics=("parallel",))

    def conv_pass(src, w, ss):
        fuse = ss is not None
        kern = functools.partial(_conv_stats_kernel, height=H, width=W,
                                 lpad=lpad, fuse_affine_relu=fuse)
        in_specs = [act_spec, ss_spec, w_spec] if fuse else [act_spec, w_spec]
        args = (src, ss, w) if fuse else (src, w)
        return pl.pallas_call(
            kern,
            grid=(N,),
            in_specs=in_specs,
            out_specs=(act_spec, stat_spec, stat_spec),
            out_shape=(jax.ShapeDtypeStruct((N, Cp, HW), bf16),
                       jax.ShapeDtypeStruct((N, Cp, 1), f32),
                       jax.ShapeDtypeStruct((N, Cp, 1), f32)),
            scratch_shapes=[pltpu.VMEM((Cp, HW + 2 * lpad), bf16)],
            compiler_params=params,
        )(*args)

    def bn_scale_shift(psum, psq, gamma, beta):
        # Finalize batch stats (biased variance, PyTorch training-mode
        # normalization) from f32 per-image partials; fold gamma/beta so the
        # kernels only consume one (Cp, 2) scale/shift vector.
        mean = jnp.sum(psum[:, :, 0], axis=0) / count                 # (Cp,)
        var = jnp.maximum(jnp.sum(psq[:, :, 0], axis=0) / count - mean * mean,
                          0.0)
        scale = gamma * jax.lax.rsqrt(var + EPS)
        return jnp.stack([scale, beta - mean * scale], axis=1)        # (Cp, 2)

    # Pass 1: conv1 + BN1 partials.
    y1, s1, q1 = conv_pass(xcm, wtaps(w1), None)
    ss1 = bn_scale_shift(s1, q1, cpad(g1), cpad(be1))
    # Pass 2: bn1 + ReLU fused into conv2's input, + BN2 partials.
    y2, s2, q2 = conv_pass(y1, wtaps(w2), ss1)
    ss2 = bn_scale_shift(s2, q2, cpad(g2), cpad(be2))

    # Pass 3: bn2 + residual add (f32), no final ReLU.
    out = pl.pallas_call(
        _bn_residual_kernel,
        grid=(N,),
        in_specs=[act_spec, act_spec, ss_spec],
        out_specs=pl.BlockSpec((1, Cp, HW), lambda n: (n, 0, 0)),
        out_shape=jax.ShapeDtypeStruct((N, Cp, HW), f32),
        compiler_params=params,
    )(y2, xcm, ss2)

    return out[:, :C].reshape(N, C, H, W)


if __name__ == "__main__":
    N, C, H, W = 2, 4, 16, 16
    key = jax.random.PRNGKey(0)
    ks = jax.random.split(key, 9)
    scale = 1.0 / float(C * K * K) ** 0.5

    x = jax.random.normal(ks[0], (N, C, H, W), jnp.float32)
    w1 = scale * jax.random.normal(ks[1], (C, C, K, K), jnp.float32)
    b1 = scale * jax.random.normal(ks[2], (C,), jnp.float32)
    w2 = scale * jax.random.normal(ks[3], (C, C, K, K), jnp.float32)
    b2 = scale * jax.random.normal(ks[4], (C,), jnp.float32)
    g1 = 1.0 + 0.1 * jax.random.normal(ks[5], (C,), jnp.float32)
    be1 = 0.1 * jax.random.normal(ks[6], (C,), jnp.float32)
    g2 = 1.0 + 0.1 * jax.random.normal(ks[7], (C,), jnp.float32)
    be2 = 0.1 * jax.random.normal(ks[8], (C,), jnp.float32)

    out = no_relu_basic_resnet_unit(x, w1, b1, g1, be1, w2, b2, g2, be2)
    out = jax.block_until_ready(out)

    # Pure-JAX f32 reference (HIGHEST precision), bias included to demonstrate
    # that training-mode BN cancels it exactly.
    def ref_forward(x):
        hi = jax.lax.Precision.HIGHEST

        def conv(x, w, b):
            y = jax.lax.conv_general_dilated(
                x, w, window_strides=(1, 1), padding=((1, 1), (1, 1)),
                dimension_numbers=("NCHW", "OIHW", "NCHW"), precision=hi)
            return y + b[None, :, None, None]

        def bn(x, g, be):
            m = jnp.mean(x, axis=(0, 2, 3), keepdims=True)
            v = jnp.mean((x - m) ** 2, axis=(0, 2, 3), keepdims=True)
            return (x - m) * jax.lax.rsqrt(v + EPS) * g[None, :, None, None] \
                + be[None, :, None, None]

        h1 = jnp.maximum(bn(conv(x, w1, b1), g1, be1), 0.0)
        return bn(conv(h1, w2, b2), g2, be2) + x

    ref = ref_forward(x)
    # Tolerance covers bf16 MXU operands AND bf16 HBM storage of x / y1 / y2
    # (new vs the previous all-f32-I/O version); all accumulation / BN math is
    # f32 and the reference is full-f32 HIGHEST precision.
    err = float(jnp.max(jnp.abs(out - ref)))
    assert jnp.allclose(out, ref, atol=4e-2, rtol=4e-2), f"max abs err {err}"
    print("KERNEL_OK")
</pallas_src>

<mosaic_0001>
module attributes {stable_mosaic.version = 11 : i64} {
  func.func @_conv_stats_kernel(%arg0: i32, %arg1: memref<1x16x256xbf16, #tpu.memory_space<vmem>>, %arg2: memref<9x16x16xbf16, #tpu.memory_space<vmem>>, %arg3: memref<1x16x256xbf16, #tpu.memory_space<vmem>>, %arg4: memref<1x16x1xf32, #tpu.memory_space<vmem>>, %arg5: memref<1x16x1xf32, #tpu.memory_space<vmem>>, %arg6: memref<16x512xbf16, #tpu.memory_space<vmem>>) attributes {dimension_semantics = [#tpu.dimension_semantics<parallel>], iteration_bounds = array<i64: 2>, scalar_prefetch = 0 : i64, scratch_operands = 1 : i64, tpu.core_type = #tpu.core_type<tc>, window_params = [{transform_indices = @transform_0, window_bounds = array<i64: 1, 16, 256>}, {pipeline_mode = #tpu.pipeline_mode<synchronous>, transform_indices = @transform_1, window_bounds = array<i64: 9, 16, 16>}, {transform_indices = @transform_2, window_bounds = array<i64: 1, 16, 256>}, {transform_indices = @transform_3, window_bounds = array<i64: 1, 16, 1>}, {transform_indices = @transform_4, window_bounds = array<i64: 1, 16, 1>}]} {
    %c0 = arith.constant 0 : index
    %c0_0 = arith.constant 0 : index
    %c0_1 = arith.constant 0 : index
    %0 = vector.load %arg1[%c0, %c0_0, %c0_1] : memref<1x16x256xbf16, #tpu.memory_space<vmem>>, vector<1x16x256xbf16>
    %1 = vector.shape_cast %0 : vector<1x16x256xbf16> to vector<16x256xbf16>
    %cst = arith.constant 0.000000e+00 : bf16
    %2 = vector.broadcast %cst : bf16 to vector<16x128xbf16>
    %c0_2 = arith.constant 0 : index
    %c0_3 = arith.constant 0 : index
    %3 = vector.load %arg6[%c0_2, %c0_3] : memref<16x512xbf16, #tpu.memory_space<vmem>>, vector<16x128xbf16>
    tpu.vector_store %arg6[%c0_2, %c0_3], %2 {strides = array<i32>} : memref<16x512xbf16, #tpu.memory_space<vmem>>, vector<16x128xbf16>,
    %cst_4 = arith.constant 0.000000e+00 : bf16
    %4 = vector.broadcast %cst_4 : bf16 to vector<16x128xbf16>
    %c0_5 = arith.constant 0 : index
    %c384 = arith.constant 384 : index
    %5 = vector.load %arg6[%c0_5, %c384] : memref<16x512xbf16, #tpu.memory_space<vmem>>, vector<16x128xbf16>
    tpu.vector_store %arg6[%c0_5, %c384], %4 {strides = array<i32>} : memref<16x512xbf16, #tpu.memory_space<vmem>>, vector<16x128xbf16>,
    %c0_6 = arith.constant 0 : index
    %c128 = arith.constant 128 : index
    %6 = vector.load %arg6[%c0_6, %c128] : memref<16x512xbf16, #tpu.memory_space<vmem>>, vector<16x256xbf16>
    tpu.vector_store %arg6[%c0_6, %c128], %1 {strides = array<i32>} : memref<16x512xbf16, #tpu.memory_space<vmem>>, vector<16x256xbf16>,
    %7 = tpu.iota {dimensions = array<i32: 1>} : vector<1x256xi32>
    %c16_i32 = arith.constant 16 : i32
    %c0_i32 = arith.constant 0 : i32
    %8 = arith.cmpi eq, %c16_i32, %c0_i32 : i32
    %c1_i32 = arith.constant 1 : i32
    %9 = arith.select %8, %c1_i32, %c16_i32 : i32
    %10 = vector.broadcast %9 : i32 to vector<1x256xi32>
    %11 = arith.remsi %7, %10 : vector<1x256xi32>
    %c0_i32_7 = arith.constant 0 : i32
    %12 = vector.broadcast %c0_i32_7 : i32 to vector<1x256xi32>
    %13 = arith.cmpi ne, %11, %12 : vector<1x256xi32>
    %c0_i32_8 = arith.constant 0 : i32
    %14 = vector.broadcast %c0_i32_8 : i32 to vector<1x256xi32>
    %15 = arith.cmpi slt, %11, %14 : vector<1x256xi32>
    %c0_i32_9 = arith.constant 0 : i32
    %16 = arith.cmpi slt, %9, %c0_i32_9 : i32
    %17 = vector.broadcast %16 : i1 to vector<1x256xi1>
    %18 = vector.broadcast %17 : vector<1x256xi1> to vector<1x256xi1>
    %19 = arith.xori %15, %18 : vector<1x256xi1>
    %20 = arith.andi %19, %13 : vector<1x256xi1>
    %21 = vector.broadcast %9 : i32 to vector<1x256xi32>
    %22 = arith.addi %11, %21 : vector<1x256xi32>
    %23 = arith.select %20, %22, %11 : vector<1x256xi1>, vector<1x256xi32>
    %c1_i32_10 = arith.constant 1 : i32
    %24 = vector.broadcast %c1_i32_10 : i32 to vector<1x256xi32>
    %25 = arith.cmpi sge, %23, %24 : vector<1x256xi32>
    %c14_i32 = arith.constant 14 : i32
    %26 = vector.broadcast %c14_i32 : i32 to vector<1x256xi32>
    %27 = arith.cmpi sle, %23, %26 : vector<1x256xi32>
    %cst_11 = arith.constant 0.000000e+00 : f32
    %28 = vector.broadcast %cst_11 : f32 to vector<16x256xf32>
    %c0_12 = arith.constant 0 : index
    %c111 = arith.constant 111 : index
    %29 = vector.load %arg6[%c0_12, %c111] : memref<16x512xbf16, #tpu.memory_space<vmem>>, vector<16x256xbf16>
    %cst_13 = arith.constant 0.000000e+00 : bf16
    %30 = vector.broadcast %cst_13 : bf16 to vector<16x256xbf16>
    %31 = vector.shape_cast %25 : vector<1x256xi1> to vector<1x256xi1>
    %32 = vector.broadcast %31 : vector<1x256xi1> to vector<16x256xi1>
    %33 = arith.select %32, %29, %30 : vector<16x256xi1>, vector<16x256xbf16>
    %c0_14 = arith.constant 0 : index
    %c0_15 = arith.constant 0 : index
    %c0_16 = arith.constant 0 : index
    %34 = vector.load %arg2[%c0_14, %c0_15, %c0_16] : memref<9x16x16xbf16, #tpu.memory_space<vmem>>, vector<1x16x16xbf16>
    %35 = vector.shape_cast %34 : vector<1x16x16xbf16> to vector<16x16xbf16>
    %cst_17 = arith.constant dense<0.000000e+00> : vector<16x256xf32>
    %36 = tpu.matmul %35, %33, %cst_17 {dimension_numbers = #tpu.dot_dimension_numbers<[1], [0], [0], [1], [0, 0, 1, 1], [], []>} : vector<16x16xbf16>, vector<16x256xbf16>, vector<16x256xf32> -> vector<16x256xf32>
    %37 = arith.addf %28, %36 : vector<16x256xf32>
    %c0_18 = arith.constant 0 : index
    %c112 = arith.constant 112 : index
    %38 = vector.load %arg6[%c0_18, %c112] : memref<16x512xbf16, #tpu.memory_space<vmem>>, vector<16x256xbf16>
    %c1 = arith.constant 1 : index
    %c0_19 = arith.constant 0 : index
    %c0_20 = arith.constant 0 : index
    %39 = vector.load %arg2[%c1, %c0_19, %c0_20] : memref<9x16x16xbf16, #tpu.memory_space<vmem>>, vector<1x16x16xbf16>
    %40 = vector.shape_cast %39 : vector<1x16x16xbf16> to vector<16x16xbf16>
    %cst_21 = arith.constant dense<0.000000e+00> : vector<16x256xf32>
    %41 = tpu.matmul %40, %38, %cst_21 {dimension_numbers = #tpu.dot_dimension_numbers<[1], [0], [0], [1], [0, 0, 1, 1], [], []>} : vector<16x16xbf16>, vector<16x256xbf16>, vector<16x256xf32> -> vector<16x256xf32>
    %42 = arith.addf %37, %41 : vector<16x256xf32>
    %c0_22 = arith.constant 0 : index
    %c113 = arith.constant 113 : index
    %43 = vector.load %arg6[%c0_22, %c113] : memref<16x512xbf16, #tpu.memory_space<vmem>>, vector<16x256xbf16>
    %cst_23 = arith.constant 0.000000e+00 : bf16
    %44 = vector.broadcast %cst_23 : bf16 to vector<16x256xbf16>
    %45 = vector.shape_cast %27 : vector<1x256xi1> to vector<1x256xi1>
    %46 = vector.broadcast %45 : vector<1x256xi1> to vector<16x256xi1>
    %47 = arith.select %46, %43, %44 : vector<16x256xi1>, vector<16x256xbf16>
    %c2 = arith.constant 2 : index
    %c0_24 = arith.constant 0 : index
    %c0_25 = arith.constant 0 : index
    %48 = vector.load %arg2[%c2, %c0_24, %c0_25] : memref<9x16x16xbf16, #tpu.memory_space<vmem>>, vector<1x16x16xbf16>
    %49 = vector.shape_cast %48 : vector<1x16x16xbf16> to vector<16x16xbf16>
    %cst_26 = arith.constant dense<0.000000e+00> : vector<16x256xf32>
    %50 = tpu.matmul %49, %47, %cst_26 {dimension_numbers = #tpu.dot_dimension_numbers<[1], [0], [0], [1], [0, 0, 1, 1], [], []>} : vector<16x16xbf16>, vector<16x256xbf16>, vector<16x256xf32> -> vector<16x256xf32>
    %51 = arith.addf %42, %50 : vector<16x256xf32>
    %c0_27 = arith.constant 0 : index
    %c127 = arith.constant 127 : index
    %52 = vector.load %arg6[%c0_27, %c127] : memref<16x512xbf16, #tpu.memory_space<vmem>>, vector<16x256xbf16>
    %cst_28 = arith.constant 0.000000e+00 : bf16
    %53 = vector.broadcast %cst_28 : bf16 to vector<16x256xbf16>
    %54 = vector.shape_cast %25 : vector<1x256xi1> to vector<1x256xi1>
    %55 = vector.broadcast %54 : vector<1x256xi1> to vector<16x256xi1>
    %56 = arith.select %55, %52, %53 : vector<16x256xi1>, vector<16x256xbf16>
    %c3 = arith.constant 3 : index
    %c0_29 = arith.constant 0 : index
    %c0_30 = arith.constant 0 : index
    %57 = vector.load %arg2[%c3, %c0_29, %c0_30] : memref<9x16x16xbf16, #tpu.memory_space<vmem>>, vector<1x16x16xbf16>
    %58 = vector.shape_cast %57 : vector<1x16x16xbf16> to vector<16x16xbf16>
    %cst_31 = arith.constant dense<0.000000e+00> : vector<16x256xf32>
    %59 = tpu.matmul %58, %56, %cst_31 {dimension_numbers = #tpu.dot_dimension_numbers<[1], [0], [0], [1], [0, 0, 1, 1], [], []>} : vector<16x16xbf16>, vector<16x256xbf16>, vector<16x256xf32> -> vector<16x256xf32>
    %60 = arith.addf %51, %59 : vector<16x256xf32>
    %c0_32 = arith.constant 0 : index
    %c128_33 = arith.constant 128 : index
    %61 = vector.load %arg6[%c0_32, %c128_33] : memref<16x512xbf16, #tpu.memory_space<vmem>>, vector<16x256xbf16>
    %c4 = arith.constant 4 : index
    %c0_34 = arith.constant 0 : index
    %c0_35 = arith.constant 0 : index
    %62 = vector.load %arg2[%c4, %c0_34, %c0_35] : memref<9x16x16xbf16, #tpu.memory_space<vmem>>, vector<1x16x16xbf16>
    %63 = vector.shape_cast %62 : vector<1x16x16xbf16> to vector<16x16xbf16>
    %cst_36 = arith.constant dense<0.000000e+00> : vector<16x256xf32>
    %64 = tpu.matmul %63, %61, %cst_36 {dimension_numbers = #tpu.dot_dimension_numbers<[1], [0], [0], [1], [0, 0, 1, 1], [], []>} : vector<16x16xbf16>, vector<16x256xbf16>, vector<16x256xf32> -> vector<16x256xf32>
    %65 = arith.addf %60, %64 : vector<16x256xf32>
    %c0_37 = arith.constant 0 : index
    %c129 = arith.constant 129 : index
    %66 = vector.load %arg6[%c0_37, %c129] : memref<16x512xbf16, #tpu.memory_space<vmem>>, vector<16x256xbf16>
    %cst_38 = arith.constant 0.000000e+00 : bf16
    %67 = vector.broadcast %cst_38 : bf16 to vector<16x256xbf16>
    %68 = vector.shape_cast %27 : vector<1x256xi1> to vector<1x256xi1>
    %69 = vector.broadcast %68 : vector<1x256xi1> to vector<16x256xi1>
    %70 = arith.select %69, %66, %67 : vector<16x256xi1>, vector<16x256xbf16>
    %c5 = arith.constant 5 : index
    %c0_39 = arith.constant 0 : index
    %c0_40 = arith.constant 0 : index
    %71 = vector.load %arg2[%c5, %c0_39, %c0_40] : memref<9x16x16xbf16, #tpu.memory_space<vmem>>, vector<1x16x16xbf16>
    %72 = vector.shape_cast %71 : vector<1x16x16xbf16> to vector<16x16xbf16>
    %cst_41 = arith.constant dense<0.000000e+00> : vector<16x256xf32>
    %73 = tpu.matmul %72, %70, %cst_41 {dimension_numbers = #tpu.dot_dimension_numbers<[1], [0], [0], [1], [0, 0, 1, 1], [], []>} : vector<16x16xbf16>, vector<16x256xbf16>, vector<16x256xf32> -> vector<16x256xf32>
    %74 = arith.addf %65, %73 : vector<16x256xf32>
    %c0_42 = arith.constant 0 : index
    %c143 = arith.constant 143 : index
    %75 = vector.load %arg6[%c0_42, %c143] : memref<16x512xbf16, #tpu.memory_space<vmem>>, vector<16x256xbf16>
    %cst_43 = arith.constant 0.000000e+00 : bf16
    %76 = vector.broadcast %cst_43 : bf16 to vector<16x256xbf16>
    %77 = vector.shape_cast %25 : vector<1x256xi1> to vector<1x256xi1>
    %78 = vector.broadcast %77 : vector<1x256xi1> to vector<16x256xi1>
    %79 = arith.select %78, %75, %76 : vector<16x256xi1>, vector<16x256xbf16>
    %c6 = arith.constant 6 : index
    %c0_44 = arith.constant 0 : index
    %c0_45 = arith.constant 0 : index
    %80 = vector.load %arg2[%c6, %c0_44, %c0_45] : memref<9x16x16xbf16, #tpu.memory_space<vmem>>, vector<1x16x16xbf16>
    %81 = vector.shape_cast %80 : vector<1x16x16xbf16> to vector<16x16xbf16>
    %cst_46 = arith.constant dense<0.000000e+00> : vector<16x256xf32>
    %82 = tpu.matmul %81, %79, %cst_46 {dimension_numbers = #tpu.dot_dimension_numbers<[1], [0], [0], [1], [0, 0, 1, 1], [], []>} : vector<16x16xbf16>, vector<16x256xbf16>, vector<16x256xf32> -> vector<16x256xf32>
    %83 = arith.addf %74, %82 : vector<16x256xf32>
    %c0_47 = arith.constant 0 : index
    %c144 = arith.constant 144 : index
    %84 = vector.load %arg6[%c0_47, %c144] : memref<16x512xbf16, #tpu.memory_space<vmem>>, vector<16x256xbf16>
    %c7 = arith.constant 7 : index
    %c0_48 = arith.constant 0 : index
    %c0_49 = arith.constant 0 : index
    %85 = vector.load %arg2[%c7, %c0_48, %c0_49] : memref<9x16x16xbf16, #tpu.memory_space<vmem>>, vector<1x16x16xbf16>
    %86 = vector.shape_cast %85 : vector<1x16x16xbf16> to vector<16x16xbf16>
    %cst_50 = arith.constant dense<0.000000e+00> : vector<16x256xf32>
    %87 = tpu.matmul %86, %84, %cst_50 {dimension_numbers = #tpu.dot_dimension_numbers<[1], [0], [0], [1], [0, 0, 1, 1], [], []>} : vector<16x16xbf16>, vector<16x256xbf16>, vector<16x256xf32> -> vector<16x256xf32>
    %88 = arith.addf %83, %87 : vector<16x256xf32>
    %c0_51 = arith.constant 0 : index
    %c145 = arith.constant 145 : index
    %89 = vector.load %arg6[%c0_51, %c145] : memref<16x512xbf16, #tpu.memory_space<vmem>>, vector<16x256xbf16>
    %cst_52 = arith.constant 0.000000e+00 : bf16
    %90 = vector.broadcast %cst_52 : bf16 to vector<16x256xbf16>
    %91 = vector.shape_cast %27 : vector<1x256xi1> to vector<1x256xi1>
    %92 = vector.broadcast %91 : vector<1x256xi1> to vector<16x256xi1>
    %93 = arith.select %92, %89, %90 : vector<16x256xi1>, vector<16x256xbf16>
    %c8 = arith.constant 8 : index
    %c0_53 = arith.constant 0 : index
    %c0_54 = arith.constant 0 : index
    %94 = vector.load %arg2[%c8, %c0_53, %c0_54] : memref<9x16x16xbf16, #tpu.memory_space<vmem>>, vector<1x16x16xbf16>
    %95 = vector.shape_cast %94 : vector<1x16x16xbf16> to vector<16x16xbf16>
    %cst_55 = arith.constant dense<0.000000e+00> : vector<16x256xf32>
    %96 = tpu.matmul %95, %93, %cst_55 {dimension_numbers = #tpu.dot_dimension_numbers<[1], [0], [0], [1], [0, 0, 1, 1], [], []>} : vector<16x16xbf16>, vector<16x256xbf16>, vector<16x256xf32> -> vector<16x256xf32>
    %97 = arith.addf %88, %96 : vector<16x256xf32>
    %cst_56 = arith.constant dense<0.000000e+00> : vector<16xf32>
    %98 = vector.multi_reduction <add>, %97, %cst_56 [1] : vector<16x256xf32> to vector<16xf32>
    %99 = vector.shape_cast %98 : vector<16xf32> to vector<16x1xf32>
    %c0_57 = arith.constant 0 : index
    %c0_58 = arith.constant 0 : index
    %c0_59 = arith.constant 0 : index
    %100 = vector.load %arg4[%c0_57, %c0_58, %c0_59] : memref<1x16x1xf32, #tpu.memory_space<vmem>>, vector<1x16x1xf32>
    %101 = vector.shape_cast %100 : vector<1x16x1xf32> to vector<16x1xf32>
    %102 = vector.shape_cast %99 : vector<16x1xf32> to vector<1x16x1xf32>
    tpu.vector_store %arg4[%c0_57, %c0_58, %c0_59], %102 {strides = array<i32>} : memref<1x16x1xf32, #tpu.memory_space<vmem>>, vector<1x16x1xf32>,
    %103 = arith.mulf %97, %97 : vector<16x256xf32>
    %cst_60 = arith.constant dense<0.000000e+00> : vector<16xf32>
    %104 = vector.multi_reduction <add>, %103, %cst_60 [1] : vector<16x256xf32> to vector<16xf32>
    %105 = vector.shape_cast %104 : vector<16xf32> to vector<16x1xf32>
    %c0_61 = arith.constant 0 : index
    %c0_62 = arith.constant 0 : index
    %c0_63 = arith.constant 0 : index
    %106 = vector.load %arg5[%c0_61, %c0_62, %c0_63] : memref<1x16x1xf32, #tpu.memory_space<vmem>>, vector<1x16x1xf32>
    %107 = vector.shape_cast %106 : vector<1x16x1xf32> to vector<16x1xf32>
    %108 = vector.shape_cast %105 : vector<16x1xf32> to vector<1x16x1xf32>
    tpu.vector_store %arg5[%c0_61, %c0_62, %c0_63], %108 {strides = array<i32>} : memref<1x16x1xf32, #tpu.memory_space<vmem>>, vector<1x16x1xf32>,
    %109 = arith.truncf %97 : vector<16x256xf32> to vector<16x256xbf16>
    %c0_64 = arith.constant 0 : index
    %c0_65 = arith.constant 0 : index
    %c0_66 = arith.constant 0 : index
    %110 = vector.load %arg3[%c0_64, %c0_65, %c0_66] : memref<1x16x256xbf16, #tpu.memory_space<vmem>>, vector<1x16x256xbf16>
    %111 = vector.shape_cast %110 : vector<1x16x256xbf16> to vector<16x256xbf16>
    %112 = vector.shape_cast %109 : vector<16x256xbf16> to vector<1x16x256xbf16>
    tpu.vector_store %arg3[%c0_64, %c0_65, %c0_66], %112 {strides = array<i32>} : memref<1x16x256xbf16, #tpu.memory_space<vmem>>, vector<1x16x256xbf16>,
    return
  }
  func.func @transform_0(%arg0: i32) -> (i32, i32, i32) {
    %c0_i32 = arith.constant 0 : i32
    %c0_i32_0 = arith.constant 0 : i32
    %c0_i32_1 = arith.constant 0 : i32
    return %arg0, %c0_i32, %c0_i32_0 : i32, i32, i32
  }
  func.func @transform_1(%arg0: i32) -> (i32, i32, i32) {
    %c0_i32 = arith.constant 0 : i32
    %c0_i32_0 = arith.constant 0 : i32
    %c0_i32_1 = arith.constant 0 : i32
    %c0_i32_2 = arith.constant 0 : i32
    return %c0_i32, %c0_i32_0, %c0_i32_1 : i32, i32, i32
  }
  func.func @transform_2(%arg0: i32) -> (i32, i32, i32) {
    %c0_i32 = arith.constant 0 : i32
    %c0_i32_0 = arith.constant 0 : i32
    %c0_i32_1 = arith.constant 0 : i32
    return %arg0, %c0_i32, %c0_i32_0 : i32, i32, i32
  }
  func.func @transform_3(%arg0: i32) -> (i32, i32, i32) {
    %c0_i32 = arith.constant 0 : i32
    %c0_i32_0 = arith.constant 0 : i32
    %c0_i32_1 = arith.constant 0 : i32
    return %arg0, %c0_i32, %c0_i32_0 : i32, i32, i32
  }
  func.func @transform_4(%arg0: i32) -> (i32, i32, i32) {
    %c0_i32 = arith.constant 0 : i32
    %c0_i32_0 = arith.constant 0 : i32
    %c0_i32_1 = arith.constant 0 : i32
    return %arg0, %c0_i32, %c0_i32_0 : i32, i32, i32
  }
}

module attributes {stable_mosaic.version = 11 : i64} {
  func.func @_conv_stats_kernel(%arg0: i32, %arg1: memref<1x16x256xbf16, #tpu.memory_space<vmem>>, %arg2: memref<16x2xf32, #tpu.memory_space<vmem>>, %arg3: memref<9x16x16xbf16, #tpu.memory_space<vmem>>, %arg4: memref<1x16x256xbf16, #tpu.memory_space<vmem>>, %arg5: memref<1x16x1xf32, #tpu.memory_space<vmem>>, %arg6: memref<1x16x1xf32, #tpu.memory_space<vmem>>, %arg7: memref<16x512xbf16, #tpu.memory_space<vmem>>) attributes {dimension_semantics = [#tpu.dimension_semantics<parallel>], iteration_bounds = array<i64: 2>, scalar_prefetch = 0 : i64, scratch_operands = 1 : i64, tpu.core_type = #tpu.core_type<tc>, window_params = [{transform_indices = @transform_0, window_bounds = array<i64: 1, 16, 256>}, {pipeline_mode = #tpu.pipeline_mode<synchronous>, transform_indices = @transform_1, window_bounds = array<i64: 16, 2>}, {pipeline_mode = #tpu.pipeline_mode<synchronous>, transform_indices = @transform_2, window_bounds = array<i64: 9, 16, 16>}, {transform_indices = @transform_3, window_bounds = array<i64: 1, 16, 256>}, {transform_indices = @transform_4, window_bounds = array<i64: 1, 16, 1>}, {transform_indices = @transform_5, window_bounds = array<i64: 1, 16, 1>}]} {
    %c0 = arith.constant 0 : index
    %c0_0 = arith.constant 0 : index
    %c0_1 = arith.constant 0 : index
    %0 = vector.load %arg1[%c0, %c0_0, %c0_1] : memref<1x16x256xbf16, #tpu.memory_space<vmem>>, vector<1x16x256xbf16>
    %1 = vector.shape_cast %0 : vector<1x16x256xbf16> to vector<16x256xbf16>
    %c0_2 = arith.constant 0 : index
    %c0_3 = arith.constant 0 : index
    %2 = vector.load %arg2[%c0_2, %c0_3] : memref<16x2xf32, #tpu.memory_space<vmem>>, vector<16x1xf32>
    %c0_4 = arith.constant 0 : index
    %c1 = arith.constant 1 : index
    %3 = vector.load %arg2[%c0_4, %c1] : memref<16x2xf32, #tpu.memory_space<vmem>>, vector<16x1xf32>
    %4 = arith.extf %1 : vector<16x256xbf16> to vector<16x256xf32>
    %5 = vector.broadcast %2 : vector<16x1xf32> to vector<16x256xf32>
    %6 = arith.mulf %4, %5 : vector<16x256xf32>
    %7 = vector.broadcast %3 : vector<16x1xf32> to vector<16x256xf32>
    %8 = arith.addf %6, %7 : vector<16x256xf32>
    %cst = arith.constant 0.000000e+00 : f32
    %9 = vector.broadcast %cst : f32 to vector<16x256xf32>
    %10 = arith.maximumf %8, %9 : vector<16x256xf32>
    %11 = arith.truncf %10 : vector<16x256xf32> to vector<16x256xbf16>
    %cst_5 = arith.constant 0.000000e+00 : bf16
    %12 = vector.broadcast %cst_5 : bf16 to vector<16x128xbf16>
    %c0_6 = arith.constant 0 : index
    %c0_7 = arith.constant 0 : index
    %13 = vector.load %arg7[%c0_6, %c0_7] : memref<16x512xbf16, #tpu.memory_space<vmem>>, vector<16x128xbf16>
    tpu.vector_store %arg7[%c0_6, %c0_7], %12 {strides = array<i32>} : memref<16x512xbf16, #tpu.memory_space<vmem>>, vector<16x128xbf16>,
    %cst_8 = arith.constant 0.000000e+00 : bf16
    %14 = vector.broadcast %cst_8 : bf16 to vector<16x128xbf16>
    %c0_9 = arith.constant 0 : index
    %c384 = arith.constant 384 : index
    %15 = vector.load %arg7[%c0_9, %c384] : memref<16x512xbf16, #tpu.memory_space<vmem>>, vector<16x128xbf16>
    tpu.vector_store %arg7[%c0_9, %c384], %14 {strides = array<i32>} : memref<16x512xbf16, #tpu.memory_space<vmem>>, vector<16x128xbf16>,
    %c0_10 = arith.constant 0 : index
    %c128 = arith.constant 128 : index
    %16 = vector.load %arg7[%c0_10, %c128] : memref<16x512xbf16, #tpu.memory_space<vmem>>, vector<16x256xbf16>
    tpu.vector_store %arg7[%c0_10, %c128], %11 {strides = array<i32>} : memref<16x512xbf16, #tpu.memory_space<vmem>>, vector<16x256xbf16>,
    %17 = tpu.iota {dimensions = array<i32: 1>} : vector<1x256xi32>
    %c16_i32 = arith.constant 16 : i32
    %c0_i32 = arith.constant 0 : i32
    %18 = arith.cmpi eq, %c16_i32, %c0_i32 : i32
    %c1_i32 = arith.constant 1 : i32
    %19 = arith.select %18, %c1_i32, %c16_i32 : i32
    %20 = vector.broadcast %19 : i32 to vector<1x256xi32>
    %21 = arith.remsi %17, %20 : vector<1x256xi32>
    %c0_i32_11 = arith.constant 0 : i32
    %22 = vector.broadcast %c0_i32_11 : i32 to vector<1x256xi32>
    %23 = arith.cmpi ne, %21, %22 : vector<1x256xi32>
    %c0_i32_12 = arith.constant 0 : i32
    %24 = vector.broadcast %c0_i32_12 : i32 to vector<1x256xi32>
    %25 = arith.cmpi slt, %21, %24 : vector<1x256xi32>
    %c0_i32_13 = arith.constant 0 : i32
    %26 = arith.cmpi slt, %19, %c0_i32_13 : i32
    %27 = vector.broadcast %26 : i1 to vector<1x256xi1>
    %28 = vector.broadcast %27 : vector<1x256xi1> to vector<1x256xi1>
    %29 = arith.xori %25, %28 : vector<1x256xi1>
    %30 = arith.andi %29, %23 : vector<1x256xi1>
    %31 = vector.broadcast %19 : i32 to vector<1x256xi32>
    %32 = arith.addi %21, %31 : vector<1x256xi32>
    %33 = arith.select %30, %32, %21 : vector<1x256xi1>, vector<1x256xi32>
    %c1_i32_14 = arith.constant 1 : i32
    %34 = vector.broadcast %c1_i32_14 : i32 to vector<1x256xi32>
    %35 = arith.cmpi sge, %33, %34 : vector<1x256xi32>
    %c14_i32 = arith.constant 14 : i32
    %36 = vector.broadcast %c14_i32 : i32 to vector<1x256xi32>
    %37 = arith.cmpi sle, %33, %36 : vector<1x256xi32>
    %cst_15 = arith.constant 0.000000e+00 : f32
    %38 = vector.broadcast %cst_15 : f32 to vector<16x256xf32>
    %c0_16 = arith.constant 0 : index
    %c111 = arith.constant 111 : index
    %39 = vector.load %arg7[%c0_16, %c111] : memref<16x512xbf16, #tpu.memory_space<vmem>>, vector<16x256xbf16>
    %cst_17 = arith.constant 0.000000e+00 : bf16
    %40 = vector.broadcast %cst_17 : bf16 to vector<16x256xbf16>
    %41 = vector.shape_cast %35 : vector<1x256xi1> to vector<1x256xi1>
    %42 = vector.broadcast %41 : vector<1x256xi1> to vector<16x256xi1>
    %43 = arith.select %42, %39, %40 : vector<16x256xi1>, vector<16x256xbf16>
    %c0_18 = arith.constant 0 : index
    %c0_19 = arith.constant 0 : index
    %c0_20 = arith.constant 0 : index
    %44 = vector.load %arg3[%c0_18, %c0_19, %c0_20] : memref<9x16x16xbf16, #tpu.memory_space<vmem>>, vector<1x16x16xbf16>
    %45 = vector.shape_cast %44 : vector<1x16x16xbf16> to vector<16x16xbf16>
    %cst_21 = arith.constant dense<0.000000e+00> : vector<16x256xf32>
    %46 = tpu.matmul %45, %43, %cst_21 {dimension_numbers = #tpu.dot_dimension_numbers<[1], [0], [0], [1], [0, 0, 1, 1], [], []>} : vector<16x16xbf16>, vector<16x256xbf16>, vector<16x256xf32> -> vector<16x256xf32>
    %47 = arith.addf %38, %46 : vector<16x256xf32>
    %c0_22 = arith.constant 0 : index
    %c112 = arith.constant 112 : index
    %48 = vector.load %arg7[%c0_22, %c112] : memref<16x512xbf16, #tpu.memory_space<vmem>>, vector<16x256xbf16>
    %c1_23 = arith.constant 1 : index
    %c0_24 = arith.constant 0 : index
    %c0_25 = arith.constant 0 : index
    %49 = vector.load %arg3[%c1_23, %c0_24, %c0_25] : memref<9x16x16xbf16, #tpu.memory_space<vmem>>, vector<1x16x16xbf16>
    %50 = vector.shape_cast %49 : vector<1x16x16xbf16> to vector<16x16xbf16>
    %cst_26 = arith.constant dense<0.000000e+00> : vector<16x256xf32>
    %51 = tpu.matmul %50, %48, %cst_26 {dimension_numbers = #tpu.dot_dimension_numbers<[1], [0], [0], [1], [0, 0, 1, 1], [], []>} : vector<16x16xbf16>, vector<16x256xbf16>, vector<16x256xf32> -> vector<16x256xf32>
    %52 = arith.addf %47, %51 : vector<16x256xf32>
    %c0_27 = arith.constant 0 : index
    %c113 = arith.constant 113 : index
    %53 = vector.load %arg7[%c0_27, %c113] : memref<16x512xbf16, #tpu.memory_space<vmem>>, vector<16x256xbf16>
    %cst_28 = arith.constant 0.000000e+00 : bf16
    %54 = vector.broadcast %cst_28 : bf16 to vector<16x256xbf16>
    %55 = vector.shape_cast %37 : vector<1x256xi1> to vector<1x256xi1>
    %56 = vector.broadcast %55 : vector<1x256xi1> to vector<16x256xi1>
    %57 = arith.select %56, %53, %54 : vector<16x256xi1>, vector<16x256xbf16>
    %c2 = arith.constant 2 : index
    %c0_29 = arith.constant 0 : index
    %c0_30 = arith.constant 0 : index
    %58 = vector.load %arg3[%c2, %c0_29, %c0_30] : memref<9x16x16xbf16, #tpu.memory_space<vmem>>, vector<1x16x16xbf16>
    %59 = vector.shape_cast %58 : vector<1x16x16xbf16> to vector<16x16xbf16>
    %cst_31 = arith.constant dense<0.000000e+00> : vector<16x256xf32>
    %60 = tpu.matmul %59, %57, %cst_31 {dimension_numbers = #tpu.dot_dimension_numbers<[1], [0], [0], [1], [0, 0, 1, 1], [], []>} : vector<16x16xbf16>, vector<16x256xbf16>, vector<16x256xf32> -> vector<16x256xf32>
    %61 = arith.addf %52, %60 : vector<16x256xf32>
    %c0_32 = arith.constant 0 : index
    %c127 = arith.constant 127 : index
    %62 = vector.load %arg7[%c0_32, %c127] : memref<16x512xbf16, #tpu.memory_space<vmem>>, vector<16x256xbf16>
    %cst_33 = arith.constant 0.000000e+00 : bf16
    %63 = vector.broadcast %cst_33 : bf16 to vector<16x256xbf16>
    %64 = vector.shape_cast %35 : vector<1x256xi1> to vector<1x256xi1>
    %65 = vector.broadcast %64 : vector<1x256xi1> to vector<16x256xi1>
    %66 = arith.select %65, %62, %63 : vector<16x256xi1>, vector<16x256xbf16>
    %c3 = arith.constant 3 : index
    %c0_34 = arith.constant 0 : index
    %c0_35 = arith.constant 0 : index
    %67 = vector.load %arg3[%c3, %c0_34, %c0_35] : memref<9x16x16xbf16, #tpu.memory_space<vmem>>, vector<1x16x16xbf16>
    %68 = vector.shape_cast %67 : vector<1x16x16xbf16> to vector<16x16xbf16>
    %cst_36 = arith.constant dense<0.000000e+00> : vector<16x256xf32>
    %69 = tpu.matmul %68, %66, %cst_36 {dimension_numbers = #tpu.dot_dimension_numbers<[1], [0], [0], [1], [0, 0, 1, 1], [], []>} : vector<16x16xbf16>, vector<16x256xbf16>, vector<16x256xf32> -> vector<16x256xf32>
    %70 = arith.addf %61, %69 : vector<16x256xf32>
    %c0_37 = arith.constant 0 : index
    %c128_38 = arith.constant 128 : index
    %71 = vector.load %arg7[%c0_37, %c128_38] : memref<16x512xbf16, #tpu.memory_space<vmem>>, vector<16x256xbf16>
    %c4 = arith.constant 4 : index
    %c0_39 = arith.constant 0 : index
    %c0_40 = arith.constant 0 : index
    %72 = vector.load %arg3[%c4, %c0_39, %c0_40] : memref<9x16x16xbf16, #tpu.memory_space<vmem>>, vector<1x16x16xbf16>
    %73 = vector.shape_cast %72 : vector<1x16x16xbf16> to vector<16x16xbf16>
    %cst_41 = arith.constant dense<0.000000e+00> : vector<16x256xf32>
    %74 = tpu.matmul %73, %71, %cst_41 {dimension_numbers = #tpu.dot_dimension_numbers<[1], [0], [0], [1], [0, 0, 1, 1], [], []>} : vector<16x16xbf16>, vector<16x256xbf16>, vector<16x256xf32> -> vector<16x256xf32>
    %75 = arith.addf %70, %74 : vector<16x256xf32>
    %c0_42 = arith.constant 0 : index
    %c129 = arith.constant 129 : index
    %76 = vector.load %arg7[%c0_42, %c129] : memref<16x512xbf16, #tpu.memory_space<vmem>>, vector<16x256xbf16>
    %cst_43 = arith.constant 0.000000e+00 : bf16
    %77 = vector.broadcast %cst_43 : bf16 to vector<16x256xbf16>
    %78 = vector.shape_cast %37 : vector<1x256xi1> to vector<1x256xi1>
    %79 = vector.broadcast %78 : vector<1x256xi1> to vector<16x256xi1>
    %80 = arith.select %79, %76, %77 : vector<16x256xi1>, vector<16x256xbf16>
    %c5 = arith.constant 5 : index
    %c0_44 = arith.constant 0 : index
    %c0_45 = arith.constant 0 : index
    %81 = vector.load %arg3[%c5, %c0_44, %c0_45] : memref<9x16x16xbf16, #tpu.memory_space<vmem>>, vector<1x16x16xbf16>
    %82 = vector.shape_cast %81 : vector<1x16x16xbf16> to vector<16x16xbf16>
    %cst_46 = arith.constant dense<0.000000e+00> : vector<16x256xf32>
    %83 = tpu.matmul %82, %80, %cst_46 {dimension_numbers = #tpu.dot_dimension_numbers<[1], [0], [0], [1], [0, 0, 1, 1], [], []>} : vector<16x16xbf16>, vector<16x256xbf16>, vector<16x256xf32> -> vector<16x256xf32>
    %84 = arith.addf %75, %83 : vector<16x256xf32>
    %c0_47 = arith.constant 0 : index
    %c143 = arith.constant 143 : index
    %85 = vector.load %arg7[%c0_47, %c143] : memref<16x512xbf16, #tpu.memory_space<vmem>>, vector<16x256xbf16>
    %cst_48 = arith.constant 0.000000e+00 : bf16
    %86 = vector.broadcast %cst_48 : bf16 to vector<16x256xbf16>
    %87 = vector.shape_cast %35 : vector<1x256xi1> to vector<1x256xi1>
    %88 = vector.broadcast %87 : vector<1x256xi1> to vector<16x256xi1>
    %89 = arith.select %88, %85, %86 : vector<16x256xi1>, vector<16x256xbf16>
    %c6 = arith.constant 6 : index
    %c0_49 = arith.constant 0 : index
    %c0_50 = arith.constant 0 : index
    %90 = vector.load %arg3[%c6, %c0_49, %c0_50] : memref<9x16x16xbf16, #tpu.memory_space<vmem>>, vector<1x16x16xbf16>
    %91 = vector.shape_cast %90 : vector<1x16x16xbf16> to vector<16x16xbf16>
    %cst_51 = arith.constant dense<0.000000e+00> : vector<16x256xf32>
    %92 = tpu.matmul %91, %89, %cst_51 {dimension_numbers = #tpu.dot_dimension_numbers<[1], [0], [0], [1], [0, 0, 1, 1], [], []>} : vector<16x16xbf16>, vector<16x256xbf16>, vector<16x256xf32> -> vector<16x256xf32>
    %93 = arith.addf %84, %92 : vector<16x256xf32>
    %c0_52 = arith.constant 0 : index
    %c144 = arith.constant 144 : index
    %94 = vector.load %arg7[%c0_52, %c144] : memref<16x512xbf16, #tpu.memory_space<vmem>>, vector<16x256xbf16>
    %c7 = arith.constant 7 : index
    %c0_53 = arith.constant 0 : index
    %c0_54 = arith.constant 0 : index
    %95 = vector.load %arg3[%c7, %c0_53, %c0_54] : memref<9x16x16xbf16, #tpu.memory_space<vmem>>, vector<1x16x16xbf16>
    %96 = vector.shape_cast %95 : vector<1x16x16xbf16> to vector<16x16xbf16>
    %cst_55 = arith.constant dense<0.000000e+00> : vector<16x256xf32>
    %97 = tpu.matmul %96, %94, %cst_55 {dimension_numbers = #tpu.dot_dimension_numbers<[1], [0], [0], [1], [0, 0, 1, 1], [], []>} : vector<16x16xbf16>, vector<16x256xbf16>, vector<16x256xf32> -> vector<16x256xf32>
    %98 = arith.addf %93, %97 : vector<16x256xf32>
    %c0_56 = arith.constant 0 : index
    %c145 = arith.constant 145 : index
    %99 = vector.load %arg7[%c0_56, %c145] : memref<16x512xbf16, #tpu.memory_space<vmem>>, vector<16x256xbf16>
    %cst_57 = arith.constant 0.000000e+00 : bf16
    %100 = vector.broadcast %cst_57 : bf16 to vector<16x256xbf16>
    %101 = vector.shape_cast %37 : vector<1x256xi1> to vector<1x256xi1>
    %102 = vector.broadcast %101 : vector<1x256xi1> to vector<16x256xi1>
    %103 = arith.select %102, %99, %100 : vector<16x256xi1>, vector<16x256xbf16>
    %c8 = arith.constant 8 : index
    %c0_58 = arith.constant 0 : index
    %c0_59 = arith.constant 0 : index
    %104 = vector.load %arg3[%c8, %c0_58, %c0_59] : memref<9x16x16xbf16, #tpu.memory_space<vmem>>, vector<1x16x16xbf16>
    %105 = vector.shape_cast %104 : vector<1x16x16xbf16> to vector<16x16xbf16>
    %cst_60 = arith.constant dense<0.000000e+00> : vector<16x256xf32>
    %106 = tpu.matmul %105, %103, %cst_60 {dimension_numbers = #tpu.dot_dimension_numbers<[1], [0], [0], [1], [0, 0, 1, 1], [], []>} : vector<16x16xbf16>, vector<16x256xbf16>, vector<16x256xf32> -> vector<16x256xf32>
    %107 = arith.addf %98, %106 : vector<16x256xf32>
    %cst_61 = arith.constant dense<0.000000e+00> : vector<16xf32>
    %108 = vector.multi_reduction <add>, %107, %cst_61 [1] : vector<16x256xf32> to vector<16xf32>
    %109 = vector.shape_cast %108 : vector<16xf32> to vector<16x1xf32>
    %c0_62 = arith.constant 0 : index
    %c0_63 = arith.constant 0 : index
    %c0_64 = arith.constant 0 : index
    %110 = vector.load %arg5[%c0_62, %c0_63, %c0_64] : memref<1x16x1xf32, #tpu.memory_space<vmem>>, vector<1x16x1xf32>
    %111 = vector.shape_cast %110 : vector<1x16x1xf32> to vector<16x1xf32>
    %112 = vector.shape_cast %109 : vector<16x1xf32> to vector<1x16x1xf32>
    tpu.vector_store %arg5[%c0_62, %c0_63, %c0_64], %112 {strides = array<i32>} : memref<1x16x1xf32, #tpu.memory_space<vmem>>, vector<1x16x1xf32>,
    %113 = arith.mulf %107, %107 : vector<16x256xf32>
    %cst_65 = arith.constant dense<0.000000e+00> : vector<16xf32>
    %114 = vector.multi_reduction <add>, %113, %cst_65 [1] : vector<16x256xf32> to vector<16xf32>
    %115 = vector.shape_cast %114 : vector<16xf32> to vector<16x1xf32>
    %c0_66 = arith.constant 0 : index
    %c0_67 = arith.constant 0 : index
    %c0_68 = arith.constant 0 : index
    %116 = vector.load %arg6[%c0_66, %c0_67, %c0_68] : memref<1x16x1xf32, #tpu.memory_space<vmem>>, vector<1x16x1xf32>
    %117 = vector.shape_cast %116 : vector<1x16x1xf32> to vector<16x1xf32>
    %118 = vector.shape_cast %115 : vector<16x1xf32> to vector<1x16x1xf32>
    tpu.vector_store %arg6[%c0_66, %c0_67, %c0_68], %118 {strides = array<i32>} : memref<1x16x1xf32, #tpu.memory_space<vmem>>, vector<1x16x1xf32>,
    %119 = arith.truncf %107 : vector<16x256xf32> to vector<16x256xbf16>
    %c0_69 = arith.constant 0 : index
    %c0_70 = arith.constant 0 : index
    %c0_71 = arith.constant 0 : index
    %120 = vector.load %arg4[%c0_69, %c0_70, %c0_71] : memref<1x16x256xbf16, #tpu.memory_space<vmem>>, vector<1x16x256xbf16>
    %121 = vector.shape_cast %120 : vector<1x16x256xbf16> to vector<16x256xbf16>
    %122 = vector.shape_cast %119 : vector<16x256xbf16> to vector<1x16x256xbf16>
    tpu.vector_store %arg4[%c0_69, %c0_70, %c0_71], %122 {strides = array<i32>} : memref<1x16x256xbf16, #tpu.memory_space<vmem>>, vector<1x16x256xbf16>,
    return
  }
  func.func @transform_0(%arg0: i32) -> (i32, i32, i32) {
    %c0_i32 = arith.constant 0 : i32
    %c0_i32_0 = arith.constant 0 : i32
    %c0_i32_1 = arith.constant 0 : i32
    return %arg0, %c0_i32, %c0_i32_0 : i32, i32, i32
  }
  func.func @transform_1(%arg0: i32) -> (i32, i32) {
    %c0_i32 = arith.constant 0 : i32
    %c0_i32_0 = arith.constant 0 : i32
    %c0_i32_1 = arith.constant 0 : i32
    return %c0_i32, %c0_i32_0 : i32, i32
  }
  func.func @transform_2(%arg0: i32) -> (i32, i32, i32) {
    %c0_i32 = arith.constant 0 : i32
    %c0_i32_0 = arith.constant 0 : i32
    %c0_i32_1 = arith.constant 0 : i32
    %c0_i32_2 = arith.constant 0 : i32
    return %c0_i32, %c0_i32_0, %c0_i32_1 : i32, i32, i32
  }
  func.func @transform_3(%arg0: i32) -> (i32, i32, i32) {
    %c0_i32 = arith.constant 0 : i32
    %c0_i32_0 = arith.constant 0 : i32
    %c0_i32_1 = arith.constant 0 : i32
    return %arg0, %c0_i32, %c0_i32_0 : i32, i32, i32
  }
  func.func @transform_4(%arg0: i32) -> (i32, i32, i32) {
    %c0_i32 = arith.constant 0 : i32
    %c0_i32_0 = arith.constant 0 : i32
    %c0_i32_1 = arith.constant 0 : i32
    return %arg0, %c0_i32, %c0_i32_0 : i32, i32, i32
  }
  func.func @transform_5(%arg0: i32) -> (i32, i32, i32) {
    %c0_i32 = arith.constant 0 : i32
    %c0_i32_0 = arith.constant 0 : i32
    %c0_i32_1 = arith.constant 0 : i32
    return %arg0, %c0_i32, %c0_i32_0 : i32, i32, i32
  }
}

module attributes {stable_mosaic.version = 11 : i64} {
  func.func @_bn_residual_kernel(%arg0: i32, %arg1: memref<1x16x256xbf16, #tpu.memory_space<vmem>>, %arg2: memref<1x16x256xbf16, #tpu.memory_space<vmem>>, %arg3: memref<16x2xf32, #tpu.memory_space<vmem>>, %arg4: memref<1x16x256xf32, #tpu.memory_space<vmem>>) attributes {dimension_semantics = [#tpu.dimension_semantics<parallel>], iteration_bounds = array<i64: 2>, scalar_prefetch = 0 : i64, scratch_operands = 0 : i64, tpu.core_type = #tpu.core_type<tc>, window_params = [{transform_indices = @transform_0, window_bounds = array<i64: 1, 16, 256>}, {transform_indices = @transform_1, window_bounds = array<i64: 1, 16, 256>}, {pipeline_mode = #tpu.pipeline_mode<synchronous>, transform_indices = @transform_2, window_bounds = array<i64: 16, 2>}, {transform_indices = @transform_3, window_bounds = array<i64: 1, 16, 256>}]} {
    %c0 = arith.constant 0 : index
    %c0_0 = arith.constant 0 : index
    %0 = vector.load %arg3[%c0, %c0_0] : memref<16x2xf32, #tpu.memory_space<vmem>>, vector<16x1xf32>
    %c0_1 = arith.constant 0 : index
    %c1 = arith.constant 1 : index
    %1 = vector.load %arg3[%c0_1, %c1] : memref<16x2xf32, #tpu.memory_space<vmem>>, vector<16x1xf32>
    %c0_2 = arith.constant 0 : index
    %c0_3 = arith.constant 0 : index
    %c0_4 = arith.constant 0 : index
    %2 = vector.load %arg1[%c0_2, %c0_3, %c0_4] : memref<1x16x256xbf16, #tpu.memory_space<vmem>>, vector<1x16x256xbf16>
    %3 = vector.shape_cast %2 : vector<1x16x256xbf16> to vector<16x256xbf16>
    %4 = arith.extf %3 : vector<16x256xbf16> to vector<16x256xf32>
    %5 = vector.broadcast %0 : vector<16x1xf32> to vector<16x256xf32>
    %6 = arith.mulf %4, %5 : vector<16x256xf32>
    %7 = vector.broadcast %1 : vector<16x1xf32> to vector<16x256xf32>
    %8 = arith.addf %6, %7 : vector<16x256xf32>
    %c0_5 = arith.constant 0 : index
    %c0_6 = arith.constant 0 : index
    %c0_7 = arith.constant 0 : index
    %9 = vector.load %arg2[%c0_5, %c0_6, %c0_7] : memref<1x16x256xbf16, #tpu.memory_space<vmem>>, vector<1x16x256xbf16>
    %10 = vector.shape_cast %9 : vector<1x16x256xbf16> to vector<16x256xbf16>
    %11 = arith.extf %10 : vector<16x256xbf16> to vector<16x256xf32>
    %12 = arith.addf %8, %11 : vector<16x256xf32>
    %c0_8 = arith.constant 0 : index
    %c0_9 = arith.constant 0 : index
    %c0_10 = arith.constant 0 : index
    %13 = vector.load %arg4[%c0_8, %c0_9, %c0_10] : memref<1x16x256xf32, #tpu.memory_space<vmem>>, vector<1x16x256xf32>
    %14 = vector.shape_cast %13 : vector<1x16x256xf32> to vector<16x256xf32>
    %15 = vector.shape_cast %12 : vector<16x256xf32> to vector<1x16x256xf32>
    tpu.vector_store %arg4[%c0_8, %c0_9, %c0_10], %15 {strides = array<i32>} : memref<1x16x256xf32, #tpu.memory_space<vmem>>, vector<1x16x256xf32>,
    return
  }
  func.func @transform_0(%arg0: i32) -> (i32, i32, i32) {
    %c0_i32 = arith.constant 0 : i32
    %c0_i32_0 = arith.constant 0 : i32
    %c0_i32_1 = arith.constant 0 : i32
    return %arg0, %c0_i32, %c0_i32_0 : i32, i32, i32
  }
  func.func @transform_1(%arg0: i32) -> (i32, i32, i32) {
    %c0_i32 = arith.constant 0 : i32
    %c0_i32_0 = arith.constant 0 : i32
    %c0_i32_1 = arith.constant 0 : i32
    return %arg0, %c0_i32, %c0_i32_0 : i32, i32, i32
  }
  func.func @transform_2(%arg0: i32) -> (i32, i32) {
    %c0_i32 = arith.constant 0 : i32
    %c0_i32_0 = arith.constant 0 : i32
    %c0_i32_1 = arith.constant 0 : i32
    return %c0_i32, %c0_i32_0 : i32, i32
  }
  func.func @transform_3(%arg0: i32) -> (i32, i32, i32) {
    %c0_i32 = arith.constant 0 : i32
    %c0_i32_0 = arith.constant 0 : i32
    %c0_i32_1 = arith.constant 0 : i32
    return %arg0, %c0_i32, %c0_i32_0 : i32, i32, i32
  }
}

</mosaic_0001>

<llo_original>
// kernel: no_relu_basic_resnet_unit.5
$region0: #{no_relu_basic_resnet_unit.5}
  #allocation0 [shape = 'u32[]', space=smem, size = 0x4, offset = 0x4, fixed_abs, tag = 'smem constant byte address 0x4 - core index']
  #allocation1 [shape = 'u32[144,128]{1,0:T(1,128)}', space=vmem, size = 0x12000, scoped, tag = 'internal scratch']
  %s0 = inlined_call_operand.vmem [shape: bf16[2,16,256], index: 0, kind: input, shape index: {}]
  %s1 = inlined_call_operand.vmem [shape: bf16[2,16,256], index: 1, kind: input, shape index: {}]
  %s2 = inlined_call_operand.vmem [shape: f32[16,2], index: 2, kind: input, shape index: {}]
  %s3 = inlined_call_operand.vmem [shape: f32[2,16,256], index: 3, kind: output, shape index: {}]
  %s4 = sld [smem:[#allocation0]]
  $region45: #{no_relu_basic_resnet_unit.5} parent=0
    _
  %s6 = ssub.s32 1, %s4
  %s7 = scalar_select 0, %s6, %s4
  loop: start=0, step=1, limit=4
  $region2: #{no_relu_basic_resnet_unit.5} parent=0 // loop_pre_header
    _
  $region3: #{no_relu_basic_resnet_unit.5} parent=0 // loop_header
    %s9 = sphi 0, %s13
    %p10 = scmp.ge.s32.totalorder %s9, 4
    %s19 = sphi 0, %s21
    %s22 = sphi 0, %s19
    %s23 = sphi 0, %s22
    %s39 = sphi 0, %s23
    %s45 = sphi 0, %s47
    %s48 = sphi 0, %s45
    %s49 = sphi 0, %s48
    %s65 = sphi 0, %s49
    %s69 = sphi 0, %s69
    %s71 = sphi 0, %s69
    %s72 = sphi 0, %s71
    %s86 = sphi 0, %s72
    %s92 = sphi 0, %s94
    %s95 = sphi 0, %s92
    %s96 = sphi 0, %s95
    %s112 = sphi 0, %s96
  $region4: #{no_relu_basic_resnet_unit.5} parent=0 // loop_header_branch
    %12 = sbr.rel (%p10) target = $region8
  $region5: #{no_relu_basic_resnet_unit.5} parent=0 // loop_body
    %s14 = ssub.s32 %s9, 1
    %s15 = ssub.s32 %s9, 2
    %s16 = sadd.s32 %s9, 1
    %s17 = ssub.s32 %s9, %s16
    %p18 = scmp.eq.s32.totalorder %s17, 0
    %s20 = sadd.s32 %s19, 1
    %s21 = scalar_select %p18, %s19, %s20
    %p24 = pneg %p18
    %p25 = scmp.eq.s32.totalorder %s9, 1
    %p26 = por %p24, %p25
    %p27 = scmp.ne.s32.totalorder %s19, %s22
    %p28 = scmp.eq.s32.totalorder %s9, 0
    %p29 = por %p27, %p28
    %p30 = scmp.ne.s32.totalorder %s19, %s22
    %p31 = scmp.eq.s32.totalorder %s14, 1
    %p32 = por %p30, %p31
    %p33 = scmp.ne.s32.totalorder %s22, %s23
    %p34 = scmp.eq.s32.totalorder %s14, 0
    %p35 = por %p33, %p34
    %p36 = scmp.ne.s32.totalorder %s22, %s23
    %p37 = scmp.eq.s32.totalorder %s15, 1
    %p38 = por %p36, %p37
    %p40 = scmp.ne.s32.totalorder %s23, %s39
    %p41 = scmp.eq.s32.totalorder %s15, 0
    %p42 = por %p40, %p41
    %s43 = ssub.s32 %s9, %s16
    %p44 = scmp.eq.s32.totalorder %s43, 0
    %s46 = sadd.s32 %s45, 1
    %s47 = scalar_select %p44, %s45, %s46
    %p50 = pneg %p44
    %p51 = scmp.eq.s32.totalorder %s9, 1
    %p52 = por %p50, %p51
    %p53 = scmp.ne.s32.totalorder %s45, %s48
    %p54 = scmp.eq.s32.totalorder %s9, 0
    %p55 = por %p53, %p54
    %p56 = scmp.ne.s32.totalorder %s45, %s48
    %p57 = scmp.eq.s32.totalorder %s14, 1
    %p58 = por %p56, %p57
    %p59 = scmp.ne.s32.totalorder %s48, %s49
    %p60 = scmp.eq.s32.totalorder %s14, 0
    %p61 = por %p59, %p60
    %p62 = scmp.ne.s32.totalorder %s48, %s49
    %p63 = scmp.eq.s32.totalorder %s15, 1
    %p64 = por %p62, %p63
    %p66 = scmp.ne.s32.totalorder %s49, %s65
    %p67 = scmp.eq.s32.totalorder %s15, 0
    %p68 = por %p66, %p67
    %s70 = sadd.s32 %s69, 1
    %p73 = scmp.eq.s32.totalorder %s9, 1
    %p74 = scmp.ne.s32.totalorder %s69, %s71
    %p75 = scmp.eq.s32.totalorder %s9, 0
    %p76 = por %p74, %p75
    %p77 = scmp.ne.s32.totalorder %s69, %s71
    %p78 = scmp.eq.s32.totalorder %s14, 1
    %p79 = por %p77, %p78
    %p80 = scmp.ne.s32.totalorder %s71, %s72
    %p81 = scmp.eq.s32.totalorder %s14, 0
    %p82 = por %p80, %p81
    %p83 = scmp.ne.s32.totalorder %s71, %s72
    %p84 = scmp.eq.s32.totalorder %s15, 1
    %p85 = por %p83, %p84
    %p87 = scmp.ne.s32.totalorder %s72, %s86
    %p88 = scmp.eq.s32.totalorder %s15, 0
    %p89 = por %p87, %p88
    %s90 = ssub.s32 %s9, %s16
    %p91 = scmp.eq.s32.totalorder %s90, 0
    %s93 = sadd.s32 %s92, 1
    %s94 = scalar_select %p91, %s92, %s93
    %p97 = pneg %p91
    %p98 = scmp.eq.s32.totalorder %s9, 1
    %p99 = por %p97, %p98
    %p100 = scmp.ne.s32.totalorder %s92, %s95
    %p101 = scmp.eq.s32.totalorder %s9, 0
    %p102 = por %p100, %p101
    %p103 = scmp.ne.s32.totalorder %s92, %s95
    %p104 = scmp.eq.s32.totalorder %s14, 1
    %p105 = por %p103, %p104
    %p106 = scmp.ne.s32.totalorder %s95, %s96
    %p107 = scmp.eq.s32.totalorder %s14, 0
    %p108 = por %p106, %p107
    %p109 = scmp.ne.s32.totalorder %s95, %s96
    %p110 = scmp.eq.s32.totalorder %s15, 1
    %p111 = por %p109, %p110
    %p113 = scmp.ne.s32.totalorder %s96, %s112
    %p114 = scmp.eq.s32.totalorder %s15, 0
    %p115 = por %p113, %p114
    %p116 = scmp.le.s32.totalorder 1, %s9
    %p117 = scmp.lt.s32.totalorder %s9, 3
    %p118 = pnand %p116, %p117
    %p119 = pneg %p118
    // Predicated region
    $region9: #{no_relu_basic_resnet_unit.5} parent=5 // pred_check
      _
    $region10: #{no_relu_basic_resnet_unit.5} parent=5 // pred_check_branch
      %121 = sbr.rel (%p118) target = $region12
    $region11: #{no_relu_basic_resnet_unit.5} parent=5 // pred_region
      %s122 = ssub.s32 %s9, 1
      // Predicated region
      $region13: #{no_relu_basic_resnet_unit.5} parent=11 // pred_check
        %p123 = pneg %p82
      $region14: #{no_relu_basic_resnet_unit.5} parent=11 // pred_check_branch
        %125 = sbr.rel (%p123) target = $region16
      $region15: #{no_relu_basic_resnet_unit.5} parent=11 // pred_region
        _
      $region16: #{no_relu_basic_resnet_unit.5} parent=11 // pred_fallthru
        _
    $region12: #{no_relu_basic_resnet_unit.5} parent=5 // pred_fallthru
      _
    %p126 = scmp.lt.s32.totalorder %s9, 2
    // Predicated region
    $region17: #{no_relu_basic_resnet_unit.5} parent=5 // pred_check
      %p127 = pneg %p126
    $region18: #{no_relu_basic_resnet_unit.5} parent=5 // pred_check_branch
      %129 = sbr.rel (%p127) target = $region20
    $region19: #{no_relu_basic_resnet_unit.5} parent=5 // pred_region
      // Predicated region
      $region21: #{no_relu_basic_resnet_unit.5} parent=19 // pred_check
        %p130 = pneg %p29
      $region22: #{no_relu_basic_resnet_unit.5} parent=19 // pred_check_branch
        %132 = sbr.rel (%p130) target = $region24
      $region23: #{no_relu_basic_resnet_unit.5} parent=19 // pred_region
        %p133 = scmp.lt.s32.totalorder %s9, 1
        %s134 = scalar_select %p133, %s9, 1
        %s135 = smul.addr %s134, 4
        %s136 = smul.addr %s135, 4
        %s137 = scalar_lea.vmem %s0, %s136
      $region24: #{no_relu_basic_resnet_unit.5} parent=19 // pred_fallthru
        _
      // Predicated region
      $region25: #{no_relu_basic_resnet_unit.5} parent=19 // pred_check
        %p138 = pneg %p55
      $region26: #{no_relu_basic_resnet_unit.5} parent=19 // pred_check_branch
        %140 = sbr.rel (%p138) target = $region28
      $region27: #{no_relu_basic_resnet_unit.5} parent=19 // pred_region
        %p141 = scmp.lt.s32.totalorder %s9, 1
        %s142 = scalar_select %p141, %s9, 1
        %s143 = smul.addr %s142, 4
        %s144 = smul.addr %s143, 4
        %s145 = scalar_lea.vmem %s1, %s144
      $region28: #{no_relu_basic_resnet_unit.5} parent=19 // pred_fallthru
        _
    $region20: #{no_relu_basic_resnet_unit.5} parent=5 // pred_fallthru
      _
    %p146 = scmp.le.s32.totalorder 1, %s9
    %p147 = scmp.lt.s32.totalorder %s9, 3
    %p148 = pnand %p146, %p147
    %p149 = pneg %p148
    // Predicated region
    $region29: #{no_relu_basic_resnet_unit.5} parent=5 // pred_check
      _
    $region30: #{no_relu_basic_resnet_unit.5} parent=5 // pred_check_branch
      %151 = sbr.rel (%p148) target = $region32
    $region31: #{no_relu_basic_resnet_unit.5} parent=5 // pred_region
      %s152 = ssub.s32 %s9, 1
      %p153 = scmp.lt.s32.totalorder %s14, 1
      %s154 = scalar_select %p153, %s14, 1
      %s155 = smul.addr %s154, 4
      %s156 = smul.addr %s155, 4
      %s157 = scalar_lea.vmem %s0, %s156
      %p158 = pneg %p35
      %p159 = pneg %p32
      %p160 = scmp.lt.s32.totalorder %s14, 1
      %s161 = scalar_select %p160, %s14, 1
      %s162 = smul.addr %s161, 4
      %s163 = smul.addr %s162, 4
      %s164 = scalar_lea.vmem %s1, %s163
      %p165 = pneg %p61
      %p166 = pneg %p58
      %p167 = pneg %p82
      %p168 = pneg %p79
      %p169 = pneg %p108
      %p170 = pneg %p105
      %p171 = scmp.lt.s32.totalorder %s14, 1
      %s172 = scalar_select %p171, %s14, 1
      %s173 = smul.addr %s172, 4
      %s174 = smul.addr %s173, 8
      %s175 = scalar_lea.vmem %s3, %s174
      %p176 = scmp.lt.s32.totalorder %s14, 1
      %s177 = scalar_select %p176, %s14, 1
      %s178 = smul.addr %s177, 4
      %s179 = smul.addr %s178, 4
      %s180 = scalar_lea.vmem %s0, %s179
      %p181 = scmp.lt.s32.totalorder %s14, 1
      %s182 = scalar_select %p181, %s14, 1
      %s183 = smul.addr %s182, 4
      %s184 = smul.addr %s183, 4
      %s185 = scalar_lea.vmem %s1, %s184
      %p186 = scmp.lt.s32.totalorder %s14, 1
      %s187 = scalar_select %p186, %s14, 1
      %s188 = smul.addr %s187, 4
      %s189 = smul.addr %s188, 8
      %s190 = scalar_lea.vmem %s3, %s189
      %v191 = vld [vmem:[%s2] sm:$0xff]
      %v192 = vld [vmem:[%s2 + $0x8] sm:$0xff]
      %v193 = vld [vmem:[%s180] sm:$0xff]
      %v194 = vld [vmem:[%s180 + $0x8] sm:$0xff]
      %v195 = vunpack.c.l.bf16 %v193
      %v196 = vunpack.c.h.bf16 %v193
      %v197 = vunpack.c.l.bf16 %v194
      %v198 = vunpack.c.h.bf16 %v194
      %200 = vset.pattern.permute.xlu0 0
      %201 = vperm.xlu0 %200, %v191
      %v202 = vpop.permute.xlu0 %201
      %205 = vset.pattern.permute.xlu0 0
      %206 = vperm.xlu0 %205, %v192
      %v207 = vpop.permute.xlu0 %206
      %v209 = vmul.f32 %v195, %v202
      %v210 = vmul.f32 %v196, %v202
      %v211 = vmul.f32 %v197, %v207
      %v212 = vmul.f32 %v198, %v207
      %213 = vset.pattern.permute.xlu0 1
      %214 = vperm.xlu0 %213, %v191
      %v215 = vpop.permute.xlu0 %214
      %217 = vset.pattern.permute.xlu0 1
      %218 = vperm.xlu0 %217, %v192
      %v219 = vpop.permute.xlu0 %218
      %v221 = vadd.f32 %v209, %v215
      %v222 = vadd.f32 %v210, %v215
      %v223 = vadd.f32 %v211, %v219
      %v224 = vadd.f32 %v212, %v219
      %v225 = vld [vmem:[%s185] sm:$0xff]
      %v226 = vld [vmem:[%s185 + $0x8] sm:$0xff]
      %v227 = vunpack.c.l.bf16 %v225
      %v228 = vunpack.c.h.bf16 %v225
      %v229 = vunpack.c.l.bf16 %v226
      %v230 = vunpack.c.h.bf16 %v226
      %v231 = vadd.f32 %v221, %v227
      %v232 = vadd.f32 %v222, %v228
      %v233 = vadd.f32 %v223, %v229
      %v234 = vadd.f32 %v224, %v230
      %235 = vst [vmem:[%s190] sm:$0xff] %v231
      %236 = vst [vmem:[%s190 + $0x8] sm:$0xff] %v232
      %237 = vst [vmem:[%s190 + $0x10] sm:$0xff] %v233
      %238 = vst [vmem:[%s190 + $0x18] sm:$0xff] %v234
      %p239 = scmp.lt.s32.totalorder %s14, 1
      %s240 = scalar_select %p239, %s14, 1
      %s241 = smul.addr %s240, 4
      %s242 = smul.addr %s241, 8
      %s243 = scalar_lea.vmem %s3, %s242
      // Predicated region
      $region33: #{no_relu_basic_resnet_unit.5} parent=31 // pred_check
        %p244 = pneg %p105
      $region34: #{no_relu_basic_resnet_unit.5} parent=31 // pred_check_branch
        %246 = sbr.rel (%p244) target = $region36
      $region35: #{no_relu_basic_resnet_unit.5} parent=31 // pred_region
        _
      $region36: #{no_relu_basic_resnet_unit.5} parent=31 // pred_fallthru
        _
    $region32: #{no_relu_basic_resnet_unit.5} parent=5 // pred_fallthru
      _
    %p247 = scmp.le.s32.totalorder 2, %s9
    // Predicated region
    $region37: #{no_relu_basic_resnet_unit.5} parent=5 // pred_check
      %p248 = pneg %p247
    $region38: #{no_relu_basic_resnet_unit.5} parent=5 // pred_check_branch
      %250 = sbr.rel (%p248) target = $region40
    $region39: #{no_relu_basic_resnet_unit.5} parent=5 // pred_region
      %s251 = ssub.s32 %s9, 2
      // Predicated region
      $region41: #{no_relu_basic_resnet_unit.5} parent=39 // pred_check
        %p252 = pneg %p111
      $region42: #{no_relu_basic_resnet_unit.5} parent=39 // pred_check_branch
        %254 = sbr.rel (%p252) target = $region44
      $region43: #{no_relu_basic_resnet_unit.5} parent=39 // pred_region
        %p255 = scmp.lt.s32.totalorder %s15, 1
        %s256 = scalar_select %p255, %s15, 1
        %s257 = smul.addr %s256, 4
        %s258 = smul.addr %s257, 8
        %s259 = scalar_lea.vmem %s3, %s258
      $region44: #{no_relu_basic_resnet_unit.5} parent=39 // pred_fallthru
        _
    $region40: #{no_relu_basic_resnet_unit.5} parent=5 // pred_fallthru
      _
  $region6: #{no_relu_basic_resnet_unit.5} parent=0 // loop_footer
    %s13 = sadd.s32 1, %s9
  $region7: #{no_relu_basic_resnet_unit.5} parent=0 // loop_footer_branch
    %8 = sbr.rel target = $region3
  $region8: #{no_relu_basic_resnet_unit.5} parent=0 // loop_exit
    _

// kernel: no_relu_basic_resnet_unit.4
$region0: #{no_relu_basic_resnet_unit.4}
  #allocation0 [shape = 'u32[]', space=smem, size = 0x4, offset = 0x4, fixed_abs, tag = 'smem constant byte address 0x4 - core index']
  #allocation1 [shape = 'u32[144,128]{1,0:T(1,128)}', space=vmem, size = 0x12000, scoped, tag = 'internal scratch']
  #allocation2 [shape = 'bf16[16,512]{1,0:T(16,128)(2,1)}', space=vmem, size = 0x4000, scoped, tag = 'scratch operand']
  %s0 = inlined_call_operand.vmem [shape: bf16[2,16,256], index: 0, kind: input, shape index: {}]
  %s1 = inlined_call_operand.vmem [shape: f32[16,2], index: 1, kind: input, shape index: {}]
  %s2 = inlined_call_operand.vmem [shape: bf16[9,16,16], index: 2, kind: input, shape index: {}]
  %s3 = inlined_call_operand.vmem [shape: bf16[2,16,256], index: 3, kind: output, shape index: {0}]
  %s4 = inlined_call_operand.vmem [shape: f32[2,16,1], index: 4, kind: output, shape index: {1}]
  %s5 = inlined_call_operand.vmem [shape: f32[2,16,1], index: 5, kind: output, shape index: {2}]
  %6 = xla_tuple %s3, %s4, %s5
  %s7 = sld [smem:[#allocation0]]
  $region61: #{no_relu_basic_resnet_unit.4} parent=0
    _
  %s9 = ssub.s32 1, %s7
  %s10 = scalar_select 0, %s9, %s7
  loop: start=0, step=1, limit=4
  $region2: #{no_relu_basic_resnet_unit.4} parent=0 // loop_pre_header
    _
  $region3: #{no_relu_basic_resnet_unit.4} parent=0 // loop_header
    %s12 = sphi 0, %s16
    %p13 = scmp.ge.s32.totalorder %s12, 4
    %s22 = sphi 0, %s24
    %s25 = sphi 0, %s22
    %s26 = sphi 0, %s25
    %s42 = sphi 0, %s26
    %s46 = sphi 0, %s46
    %s48 = sphi 0, %s46
    %s49 = sphi 0, %s48
    %s63 = sphi 0, %s49
    %s67 = sphi 0, %s67
    %s69 = sphi 0, %s67
    %s70 = sphi 0, %s69
    %s84 = sphi 0, %s70
    %s90 = sphi 0, %s92
    %s93 = sphi 0, %s90
    %s94 = sphi 0, %s93
    %s110 = sphi 0, %s94
    %s116 = sphi 0, %s118
    %s119 = sphi 0, %s116
    %s120 = sphi 0, %s119
    %s136 = sphi 0, %s120
    %s142 = sphi 0, %s144
    %s145 = sphi 0, %s142
    %s146 = sphi 0, %s145
    %s162 = sphi 0, %s146
  $region4: #{no_relu_basic_resnet_unit.4} parent=0 // loop_header_branch
    %15 = sbr.rel (%p13) target = $region8
  $region5: #{no_relu_basic_resnet_unit.4} parent=0 // loop_body
    %s17 = ssub.s32 %s12, 1
    %s18 = ssub.s32 %s12, 2
    %s19 = sadd.s32 %s12, 1
    %s20 = ssub.s32 %s12, %s19
    %p21 = scmp.eq.s32.totalorder %s20, 0
    %s23 = sadd.s32 %s22, 1
    %s24 = scalar_select %p21, %s22, %s23
    %p27 = pneg %p21
    %p28 = scmp.eq.s32.totalorder %s12, 1
    %p29 = por %p27, %p28
    %p30 = scmp.ne.s32.totalorder %s22, %s25
    %p31 = scmp.eq.s32.totalorder %s12, 0
    %p32 = por %p30, %p31
    %p33 = scmp.ne.s32.totalorder %s22, %s25
    %p34 = scmp.eq.s32.totalorder %s17, 1
    %p35 = por %p33, %p34
    %p36 = scmp.ne.s32.totalorder %s25, %s26
    %p37 = scmp.eq.s32.totalorder %s17, 0
    %p38 = por %p36, %p37
    %p39 = scmp.ne.s32.totalorder %s25, %s26
    %p40 = scmp.eq.s32.totalorder %s18, 1
    %p41 = por %p39, %p40
    %p43 = scmp.ne.s32.totalorder %s26, %s42
    %p44 = scmp.eq.s32.totalorder %s18, 0
    %p45 = por %p43, %p44
    %s47 = sadd.s32 %s46, 1
    %p50 = scmp.eq.s32.totalorder %s12, 1
    %p51 = scmp.ne.s32.totalorder %s46, %s48
    %p52 = scmp.eq.s32.totalorder %s12, 0
    %p53 = por %p51, %p52
    %p54 = scmp.ne.s32.totalorder %s46, %s48
    %p55 = scmp.eq.s32.totalorder %s17, 1
    %p56 = por %p54, %p55
    %p57 = scmp.ne.s32.totalorder %s48, %s49
    %p58 = scmp.eq.s32.totalorder %s17, 0
    %p59 = por %p57, %p58
    %p60 = scmp.ne.s32.totalorder %s48, %s49
    %p61 = scmp.eq.s32.totalorder %s18, 1
    %p62 = por %p60, %p61
    %p64 = scmp.ne.s32.totalorder %s49, %s63
    %p65 = scmp.eq.s32.totalorder %s18, 0
    %p66 = por %p64, %p65
    %s68 = sadd.s32 %s67, 1
    %p71 = scmp.eq.s32.totalorder %s12, 1
    %p72 = scmp.ne.s32.totalorder %s67, %s69
    %p73 = scmp.eq.s32.totalorder %s12, 0
    %p74 = por %p72, %p73
    %p75 = scmp.ne.s32.totalorder %s67, %s69
    %p76 = scmp.eq.s32.totalorder %s17, 1
    %p77 = por %p75, %p76
    %p78 = scmp.ne.s32.totalorder %s69, %s70
    %p79 = scmp.eq.s32.totalorder %s17, 0
    %p80 = por %p78, %p79
    %p81 = scmp.ne.s32.totalorder %s69, %s70
    %p82 = scmp.eq.s32.totalorder %s18, 1
    %p83 = por %p81, %p82
    %p85 = scmp.ne.s32.totalorder %s70, %s84
    %p86 = scmp.eq.s32.totalorder %s18, 0
    %p87 = por %p85, %p86
    %s88 = ssub.s32 %s12, %s19
    %p89 = scmp.eq.s32.totalorder %s88, 0
    %s91 = sadd.s32 %s90, 1
    %s92 = scalar_select %p89, %s90, %s91
    %p95 = pneg %p89
    %p96 = scmp.eq.s32.totalorder %s12, 1
    %p97 = por %p95, %p96
    %p98 = scmp.ne.s32.totalorder %s90, %s93
    %p99 = scmp.eq.s32.totalorder %s12, 0
    %p100 = por %p98, %p99
    %p101 = scmp.ne.s32.totalorder %s90, %s93
    %p102 = scmp.eq.s32.totalorder %s17, 1
    %p103 = por %p101, %p102
    %p104 = scmp.ne.s32.totalorder %s93, %s94
    %p105 = scmp.eq.s32.totalorder %s17, 0
    %p106 = por %p104, %p105
    %p107 = scmp.ne.s32.totalorder %s93, %s94
    %p108 = scmp.eq.s32.totalorder %s18, 1
    %p109 = por %p107, %p108
    %p111 = scmp.ne.s32.totalorder %s94, %s110
    %p112 = scmp.eq.s32.totalorder %s18, 0
    %p113 = por %p111, %p112
    %s114 = ssub.s32 %s12, %s19
    %p115 = scmp.eq.s32.totalorder %s114, 0
    %s117 = sadd.s32 %s116, 1
    %s118 = scalar_select %p115, %s116, %s117
    %p121 = pneg %p115
    %p122 = scmp.eq.s32.totalorder %s12, 1
    %p123 = por %p121, %p122
    %p124 = scmp.ne.s32.totalorder %s116, %s119
    %p125 = scmp.eq.s32.totalorder %s12, 0
    %p126 = por %p124, %p125
    %p127 = scmp.ne.s32.totalorder %s116, %s119
    %p128 = scmp.eq.s32.totalorder %s17, 1
    %p129 = por %p127, %p128
    %p130 = scmp.ne.s32.totalorder %s119, %s120
    %p131 = scmp.eq.s32.totalorder %s17, 0
    %p132 = por %p130, %p131
    %p133 = scmp.ne.s32.totalorder %s119, %s120
    %p134 = scmp.eq.s32.totalorder %s18, 1
    %p135 = por %p133, %p134
    %p137 = scmp.ne.s32.totalorder %s120, %s136
    %p138 = scmp.eq.s32.totalorder %s18, 0
    %p139 = por %p137, %p138
    %s140 = ssub.s32 %s12, %s19
    %p141 = scmp.eq.s32.totalorder %s140, 0
    %s143 = sadd.s32 %s142, 1
    %s144 = scalar_select %p141, %s142, %s143
    %p147 = pneg %p141
    %p148 = scmp.eq.s32.totalorder %s12, 1
    %p149 = por %p147, %p148
    %p150 = scmp.ne.s32.totalorder %s142, %s145
    %p151 = scmp.eq.s32.totalorder %s12, 0
    %p152 = por %p150, %p151
    %p153 = scmp.ne.s32.totalorder %s142, %s145
    %p154 = scmp.eq.s32.totalorder %s17, 1
    %p155 = por %p153, %p154
    %p156 = scmp.ne.s32.totalorder %s145, %s146
    %p157 = scmp.eq.s32.totalorder %s17, 0
    %p158 = por %p156, %p157
    %p159 = scmp.ne.s32.totalorder %s145, %s146
    %p160 = scmp.eq.s32.totalorder %s18, 1
    %p161 = por %p159, %p160
    %p163 = scmp.ne.s32.totalorder %s146, %s162
    %p164 = scmp.eq.s32.totalorder %s18, 0
    %p165 = por %p163, %p164
    %p166 = scmp.le.s32.totalorder 1, %s12
    %p167 = scmp.lt.s32.totalorder %s12, 3
    %p168 = pnand %p166, %p167
    %p169 = pneg %p168
    // Predicated region
    $region9: #{no_relu_basic_resnet_unit.4} parent=5 // pred_check
      _
    $region10: #{no_relu_basic_resnet_unit.4} parent=5 // pred_check_branch
      %171 = sbr.rel (%p168) target = $region12
    $region11: #{no_relu_basic_resnet_unit.4} parent=5 // pred_region
      %s172 = ssub.s32 %s12, 1
      // Predicated region
      $region13: #{no_relu_basic_resnet_unit.4} parent=11 // pred_check
        %p173 = pneg %p59
      $region14: #{no_relu_basic_resnet_unit.4} parent=11 // pred_check_branch
        %175 = sbr.rel (%p173) target = $region16
      $region15: #{no_relu_basic_resnet_unit.4} parent=11 // pred_region
        _
      $region16: #{no_relu_basic_resnet_unit.4} parent=11 // pred_fallthru
        _
      // Predicated region
      $region17: #{no_relu_basic_resnet_unit.4} parent=11 // pred_check
        %p176 = pneg %p80
      $region18: #{no_relu_basic_resnet_unit.4} parent=11 // pred_check_branch
        %178 = sbr.rel (%p176) target = $region20
      $region19: #{no_relu_basic_resnet_unit.4} parent=11 // pred_region
        _
      $region20: #{no_relu_basic_resnet_unit.4} parent=11 // pred_fallthru
        _
    $region12: #{no_relu_basic_resnet_unit.4} parent=5 // pred_fallthru
      _
    %p179 = scmp.lt.s32.totalorder %s12, 2
    // Predicated region
    $region21: #{no_relu_basic_resnet_unit.4} parent=5 // pred_check
      %p180 = pneg %p179
    $region22: #{no_relu_basic_resnet_unit.4} parent=5 // pred_check_branch
      %182 = sbr.rel (%p180) target = $region24
    $region23: #{no_relu_basic_resnet_unit.4} parent=5 // pred_region
      // Predicated region
      $region25: #{no_relu_basic_resnet_unit.4} parent=23 // pred_check
        %p183 = pneg %p32
      $region26: #{no_relu_basic_resnet_unit.4} parent=23 // pred_check_branch
        %185 = sbr.rel (%p183) target = $region28
      $region27: #{no_relu_basic_resnet_unit.4} parent=23 // pred_region
        %p186 = scmp.lt.s32.totalorder %s12, 1
        %s187 = scalar_select %p186, %s12, 1
        %s188 = smul.addr %s187, 4
        %s189 = smul.addr %s188, 4
        %s190 = scalar_lea.vmem %s0, %s189
      $region28: #{no_relu_basic_resnet_unit.4} parent=23 // pred_fallthru
        _
    $region24: #{no_relu_basic_resnet_unit.4} parent=5 // pred_fallthru
      _
    %p191 = scmp.le.s32.totalorder 1, %s12
    %p192 = scmp.lt.s32.totalorder %s12, 3
    %p193 = pnand %p191, %p192
    %p194 = pneg %p193
    // Predicated region
    $region29: #{no_relu_basic_resnet_unit.4} parent=5 // pred_check
      _
    $region30: #{no_relu_basic_resnet_unit.4} parent=5 // pred_check_branch
      %196 = sbr.rel (%p193) target = $region32
    $region31: #{no_relu_basic_resnet_unit.4} parent=5 // pred_region
      %s197 = ssub.s32 %s12, 1
      %p198 = scmp.lt.s32.totalorder %s17, 1
      %s199 = scalar_select %p198, %s17, 1
      %s200 = smul.addr %s199, 4
      %s201 = smul.addr %s200, 4
      %s202 = scalar_lea.vmem %s0, %s201
      %p203 = pneg %p38
      %p204 = pneg %p35
      %p205 = pneg %p59
      %p206 = pneg %p56
      %p207 = pneg %p80
      %p208 = pneg %p77
      %p209 = pneg %p106
      %p210 = pneg %p103
      %p211 = scmp.lt.s32.totalorder %s17, 1
      %s212 = scalar_select %p211, %s17, 1
      %s213 = smul.addr %s212, 4
      %s214 = smul.addr %s213, 4
      %s215 = scalar_lea.vmem %s3, %s214
      %p216 = pneg %p132
      %p217 = pneg %p129
      %p218 = scmp.lt.s32.totalorder %s17, 1
      %s219 = scalar_select %p218, %s17, 1
      %s220 = smul.addr %s219, 2
      %s221 = smul.addr %s220, 8
      %s222 = scalar_lea.vmem %s4, %s221
      %p223 = pneg %p158
      %p224 = pneg %p155
      %p225 = scmp.lt.s32.totalorder %s17, 1
      %s226 = scalar_select %p225, %s17, 1
      %s227 = smul.addr %s226, 2
      %s228 = smul.addr %s227, 8
      %s229 = scalar_lea.vmem %s5, %s228
      %p230 = scmp.lt.s32.totalorder %s17, 1
      %s231 = scalar_select %p230, %s17, 1
      %s232 = smul.addr %s231, 4
      %s233 = smul.addr %s232, 4
      %s234 = scalar_lea.vmem %s0, %s233
      %p235 = scmp.lt.s32.totalorder %s17, 1
      %s236 = scalar_select %p235, %s17, 1
      %s237 = smul.addr %s236, 4
      %s238 = smul.addr %s237, 4
      %s239 = scalar_lea.vmem %s3, %s238
      %p240 = scmp.lt.s32.totalorder %s17, 1
      %s241 = scalar_select %p240, %s17, 1
      %s242 = smul.addr %s241, 2
      %s243 = smul.addr %s242, 8
      %s244 = scalar_lea.vmem %s4, %s243
      %p245 = scmp.lt.s32.totalorder %s17, 1
      %s246 = scalar_select %p245, %s17, 1
      %s247 = smul.addr %s246, 2
      %s248 = smul.addr %s247, 8
      %s249 = scalar_lea.vmem %s5, %s248
      %v253 = vld [vmem:[%s234] sm:$0xff]
      %v254 = vld [vmem:[%s234 + $0x8] sm:$0xff]
      %v255 = vld [vmem:[%s1] sm:$0xff]
      %v256 = vld [vmem:[%s1 + $0x8] sm:$0xff]
      %v257 = vunpack.c.l.bf16 %v253
      %v258 = vunpack.c.h.bf16 %v253
      %v259 = vunpack.c.l.bf16 %v254
      %v260 = vunpack.c.h.bf16 %v254
      %262 = vset.pattern.permute.xlu0 0
      %263 = vperm.xlu0 %262, %v255
      %v264 = vpop.permute.xlu0 %263
      %267 = vset.pattern.permute.xlu0 0
      %268 = vperm.xlu0 %267, %v256
      %v269 = vpop.permute.xlu0 %268
      %v271 = vmul.f32 %v257, %v264
      %v272 = vmul.f32 %v258, %v264
      %v273 = vmul.f32 %v259, %v269
      %v274 = vmul.f32 %v260, %v269
      %275 = vset.pattern.permute.xlu0 1
      %276 = vperm.xlu0 %275, %v255
      %v277 = vpop.permute.xlu0 %276
      %279 = vset.pattern.permute.xlu0 1
      %280 = vperm.xlu0 %279, %v256
      %v281 = vpop.permute.xlu0 %280
      %v283 = vadd.f32 %v271, %v277
      %v284 = vadd.f32 %v272, %v277
      %v285 = vadd.f32 %v273, %v281
      %v286 = vadd.f32 %v274, %v281
      %v287 = vmax.f32 %v283, 0.0
      %v288 = vmax.f32 %v284, 0.0
      %v289 = vmax.f32 %v285, 0.0
      %v290 = vmax.f32 %v286, 0.0
      %v291 = vpack.c.bf16 %v289, %v287
      %v292 = vpack.c.bf16 %v290, %v288
      %293 = vst [vmem:[#allocation2] sm:$0xff] 0
      %294 = vst [vmem:[#allocation2 + $0x18] sm:$0xff] 0
      %295 = vst [vmem:[#allocation2 + $0x8] sm:$0xff] %v291
      %296 = vst [vmem:[#allocation2 + $0x10] sm:$0xff] %v292
      %v297 = vlaneseq
      %v298 = vand.u32 %v297, 127
      %v299 = vadd.s32 %v298, 128
      %vm300 = vcmp.lt.s32.totalorder %v298, 0
      %v301 = vsub.s32 0, %v298
      %v302 = vsel %vm300, %v301, %v298
      %v303 = vshrl.u32 %v302, 4
      %v304 = vand.u32 %v302, 15
      %v305 = vsub.s32 0, %v304
      %v306 = vsel %vm300, %v305, %v304
      %vm307 = vcmp.lt.s32.totalorder %v299, 0
      %v308 = vsub.s32 0, %v299
      %v309 = vsel %vm307, %v308, %v299
      %v310 = vshrl.u32 %v309, 4
      %v311 = vand.u32 %v309, 15
      %v312 = vsub.s32 0, %v311
      %v313 = vsel %vm307, %v312, %v311
      %vm314 = vcmp.ne.s32.totalorder %v306, 0
      %vm315 = vcmp.ne.s32.totalorder %v313, 0
      %vm316 = vcmp.lt.s32.totalorder %v306, 0
      %vm317 = vcmp.lt.s32.totalorder %v313, 0
      %vm318 = vmand %vm316, %vm314
      %vm319 = vmand %vm317, %vm315
      %v320 = vadd.s32 %v306, 16
      %v321 = vadd.s32 %v313, 16
      %v322 = vsel %vm318, %v320, %v306
      %v323 = vsel %vm319, %v321, %v313
      %vm324 = vcmp.ge.s32.totalorder %v322, 1
      %vm325 = vcmp.ge.s32.totalorder %v323, 1
      %vm326 = vcmp.le.s32.totalorder %v322, 14
      %vm327 = vcmp.le.s32.totalorder %v323, 14
      %v328 = vld [vmem:[#allocation2] sm:$0xff]
      %v329 = vld [vmem:[#allocation2 + $0x8] sm:$0xff]
      %v330 = vld [vmem:[#allocation2 + $0x10] sm:$0xff]
      %v331 = vsel %vm324, 1, 0
      %v332 = vsel %vm325, 1, 0
      %vm333 = vcmp.eq.s32.totalorder %v331, 1
      %vm334 = vcmp.eq.s32.totalorder %v332, 1
      %vm335 = vmpackc.low %vm334, %vm333
      %v336 = vsel %vm335, 65537, 0
      %v337 = vlaneseq
      %v338 = vshrl.u32 %v337, 7
      %v339 = vsub.s32 0, %v338
      %v340 = vrot.slane %v336, %v339
      %v341 = vlaneseq
      %v342 = vshrl.u32 %v341, 7
      %v343 = vsub.s32 4, %v342
      %v344 = vrot.slane %v336, %v343
      %345 = vrot.lane.b32.xlu0 %v340, 111
      %v346 = vpop.permute.xlu0 %345
      %347 = vrot.lane.b32.xlu0 %v344, 111
      %v348 = vpop.permute.xlu0 %347
      %vm349 = vcmask 908288
      %v350 = vsel %vm349, %v346, %v348
      %vm351 = vcmp.ne.s16.totalorder %v346, 0
      %vm352 = vcmp.ne.s16.totalorder %v350, 0
      %vm353 = vcmp.ne.s16.totalorder %v348, 0
      %v354 = vsel %vm351, %v328, 0
      %v355 = vsel %vm352, %v329, 0
      %v356 = vsel %vm353, %v330, 0
      %v357 = vld [vmem:[%s2] sm:$0xf]
      %v358 = vld [vmem:[%s2 + $0x4] sm:$0xf]
      %s359 = scalar_lea.vmem %s2, 8
      %v360 = vld [vmem:[%s359] sm:$0xf]
      %v361 = vld [vmem:[%s359 + $0x4] sm:$0xf]
      %v364 = vunpack.c.l.b16 %v360
      %v365 = vunpack.c.l.b16 %v361
      %v366 = vpack.c.b16 %v365, %v364
      %370 = vrot.lane.b32.xlu0 %v328, 16
      %v371 = vpop.permute.xlu0 %370
      %372 = vrot.lane.b32.xlu0 %v329, 16
      %v373 = vpop.permute.xlu0 %372
      %374 = vrot.lane.b32.xlu0 %v330, 16
      %v375 = vpop.permute.xlu0 %374
      %vm376 = vcmask 130048
      %v377 = vsel %vm376, %v371, %v373
      %v378 = vsel %vm376, %v373, %v375
      %vm381 = vcmask 130048
      %v383 = vsel %vm381, %v366, 0
      %385 = vmatprep.subr.bf16.mxu0 %v378
      %386 = vmatpush1.bf16.msra.mxu0 %v377
      %387 = vmatprep.subr.bf16.mxu0 0
      %388 = vmatpush1.bf16.msra.mxu0 0
      %389 = vmatprep.subr.bf16.mxu0 0
      %390 = vmatpush1.bf16.msra.mxu0 0
      %391 = vmatprep.subr.bf16.mxu0 0
      %392 = vmatpush1.bf16.msra.mxu0 0
      %393 = vmatprep.subr.bf16.mxu0 0
      %394 = vmatpush1.bf16.msra.mxu0 0
      %395 = vmatprep.subr.bf16.mxu0 0
      %396 = vmatpush1.bf16.msra.mxu0 0
      %397 = vmatprep.subr.bf16.mxu0 0
      %398 = vmatpush1.bf16.msra.mxu0 0
      %399 = vmatprep.subr.bf16.mxu0 0
      %400 = vmatpush1.bf16.msra.mxu0 0
      %401 = vmatprep.subr.bf16.mxu0 0
      %402 = vmatpush1.bf16.msra.mxu0 0
      %403 = vmatprep.subr.bf16.mxu0 0
      %404 = vmatpush1.bf16.msra.mxu0 0
      %405 = vmatprep.subr.bf16.mxu0 0
      %406 = vmatpush1.bf16.msra.mxu0 0
      %407 = vmatprep.subr.bf16.mxu0 0
      %408 = vmatpush1.bf16.msra.mxu0 0
      %409 = vmatprep.subr.bf16.mxu0 0
      %410 = vmatpush1.bf16.msra.mxu0 0
      %411 = vmatprep.subr.bf16.mxu0 0
      %412 = vmatpush1.bf16.msra.mxu0 0
      %413 = vmatprep.subr.bf16.mxu0 0
      %414 = vmatpush1.bf16.msra.mxu0 0
      %415 = vmatprep.subr.bf16.mxu0 0
      %416 = vmatpush1.bf16.msra.mxu0 0
      %417 = vmatprep.mubr.bf16.mxu0 0
      %418 = vmatmul.mubr.bf16.gmra.mrb[0].mxu0 %v383
      %v419 = vpop.f32.mrb[0].mxu0
      %v420 = vadd.f32 0.0, %v419
      %v421 = vpop.f32.mrb[0].mxu0
      %v422 = vadd.f32 0.0, %v421
      %v423 = vpop.f32.mrb[0].mxu0
      %v424 = vadd.f32 0.0, %v423
      %v425 = vpop.f32.mrb[0].mxu0
      %v426 = vadd.f32 0.0, %v425
      %427 = vdwg.mxu0
      %v430 = vunpack.c.l.b16 %v357
      %v431 = vunpack.c.l.b16 %v358
      %v432 = vpack.c.b16 %v431, %v430
      %436 = vrot.lane.b32.xlu0 %v354, 17
      %v437 = vpop.permute.xlu0 %436
      %438 = vrot.lane.b32.xlu0 %v355, 17
      %v439 = vpop.permute.xlu0 %438
      %440 = vrot.lane.b32.xlu0 %v356, 17
      %v441 = vpop.permute.xlu0 %440
      %vm442 = vcmask 138240
      %v443 = vsel %vm442, %v437, %v439
      %v444 = vsel %vm442, %v439, %v441
      %v448 = vsel %vm381, %v432, 0
      %450 = vmatprep.subr.bf16.mxu0 %v444
      %451 = vmatpush1.bf16.msra.mxu0 %v443
      %452 = vmatprep.subr.bf16.mxu0 0
      %453 = vmatpush1.bf16.msra.mxu0 0
      %454 = vmatprep.subr.bf16.mxu0 0
      %455 = vmatpush1.bf16.msra.mxu0 0
      %456 = vmatprep.subr.bf16.mxu0 0
      %457 = vmatpush1.bf16.msra.mxu0 0
      %458 = vmatprep.subr.bf16.mxu0 0
      %459 = vmatpush1.bf16.msra.mxu0 0
      %460 = vmatprep.subr.bf16.mxu0 0
      %461 = vmatpush1.bf16.msra.mxu0 0
      %462 = vmatprep.subr.bf16.mxu0 0
      %463 = vmatpush1.bf16.msra.mxu0 0
      %464 = vmatprep.subr.bf16.mxu0 0
      %465 = vmatpush1.bf16.msra.mxu0 0
      %466 = vmatprep.subr.bf16.mxu0 0
      %467 = vmatpush1.bf16.msra.mxu0 0
      %468 = vmatprep.subr.bf16.mxu0 0
      %469 = vmatpush1.bf16.msra.mxu0 0
      %470 = vmatprep.subr.bf16.mxu0 0
      %471 = vmatpush1.bf16.msra.mxu0 0
      %472 = vmatprep.subr.bf16.mxu0 0
      %473 = vmatpush1.bf16.msra.mxu0 0
      %474 = vmatprep.subr.bf16.mxu0 0
      %475 = vmatpush1.bf16.msra.mxu0 0
      %476 = vmatprep.subr.bf16.mxu0 0
      %477 = vmatpush1.bf16.msra.mxu0 0
      %478 = vmatprep.subr.bf16.mxu0 0
      %479 = vmatpush1.bf16.msra.mxu0 0
      %480 = vmatprep.subr.bf16.mxu0 0
      %481 = vmatpush1.bf16.msra.mxu0 0
      %482 = vmatprep.mubr.bf16.mxu0 0
      %483 = vmatmul.mubr.bf16.gmra.mrb[0].mxu0 %v448
      %v484 = vpop.f32.mrb[0].mxu0
      %v485 = vadd.f32 %v420, %v484
      %v486 = vpop.f32.mrb[0].mxu0
      %v487 = vadd.f32 %v422, %v486
      %v488 = vpop.f32.mrb[0].mxu0
      %v489 = vadd.f32 %v424, %v488
      %v490 = vpop.f32.mrb[0].mxu0
      %v491 = vadd.f32 %v426, %v490
      %492 = vdwg.mxu0
      %v493 = vsel %vm326, 1, 0
      %v494 = vsel %vm327, 1, 0
      %vm495 = vcmp.eq.s32.totalorder %v493, 1
      %vm496 = vcmp.eq.s32.totalorder %v494, 1
      %vm497 = vmpackc.low %vm496, %vm495
      %v498 = vsel %vm497, 65537, 0
      %v499 = vlaneseq
      %v500 = vshrl.u32 %v499, 7
      %v501 = vsub.s32 0, %v500
      %v502 = vrot.slane %v498, %v501
      %v503 = vlaneseq
      %v504 = vshrl.u32 %v503, 7
      %v505 = vsub.s32 4, %v504
      %v506 = vrot.slane %v498, %v505
      %507 = vrot.lane.b32.xlu0 %v502, 113
      %v508 = vpop.permute.xlu0 %507
      %509 = vrot.lane.b32.xlu0 %v506, 113
      %v510 = vpop.permute.xlu0 %509
      %vm511 = vcmask 924672
      %v512 = vsel %vm511, %v508, %v510
      %vm513 = vcmp.ne.s16.totalorder %v508, 0
      %vm514 = vcmp.ne.s16.totalorder %v512, 0
      %vm515 = vcmp.ne.s16.totalorder %v510, 0
      %v516 = vsel %vm513, %v328, 0
      %v517 = vsel %vm514, %v329, 0
      %v518 = vsel %vm515, %v330, 0
      %s519 = scalar_lea.vmem %s2, 16
      %v520 = vld [vmem:[%s519] sm:$0xf]
      %v521 = vld [vmem:[%s519 + $0x4] sm:$0xf]
      %v524 = vunpack.c.l.b16 %v520
      %v525 = vunpack.c.l.b16 %v521
      %v526 = vpack.c.b16 %v525, %v524
      %530 = vrot.lane.b32.xlu0 %v516, 15
      %v531 = vpop.permute.xlu0 %530
      %532 = vrot.lane.b32.xlu0 %v517, 15
      %v533 = vpop.permute.xlu0 %532
      %534 = vrot.lane.b32.xlu0 %v518, 15
      %v535 = vpop.permute.xlu0 %534
      %vm536 = vcmask 121856
      %v537 = vsel %vm536, %v531, %v533
      %v538 = vsel %vm536, %v533, %v535
      %v542 = vsel %vm381, %v526, 0
      %544 = vmatprep.subr.bf16.mxu0 %v538
      %545 = vmatpush1.bf16.msra.mxu0 %v537
      %546 = vmatprep.subr.bf16.mxu0 0
      %547 = vmatpush1.bf16.msra.mxu0 0
      %548 = vmatprep.subr.bf16.mxu0 0
      %549 = vmatpush1.bf16.msra.mxu0 0
      %550 = vmatprep.subr.bf16.mxu0 0
      %551 = vmatpush1.bf16.msra.mxu0 0
      %552 = vmatprep.subr.bf16.mxu0 0
      %553 = vmatpush1.bf16.msra.mxu0 0
      %554 = vmatprep.subr.bf16.mxu0 0
      %555 = vmatpush1.bf16.msra.mxu0 0
      %556 = vmatprep.subr.bf16.mxu0 0
      %557 = vmatpush1.bf16.msra.mxu0 0
      %558 = vmatprep.subr.bf16.mxu0 0
      %559 = vmatpush1.bf16.msra.mxu0 0
      %560 = vmatprep.subr.bf16.mxu0 0
      %561 = vmatpush1.bf16.msra.mxu0 0
      %562 = vmatprep.subr.bf16.mxu0 0
      %563 = vmatpush1.bf16.msra.mxu0 0
      %564 = vmatprep.subr.bf16.mxu0 0
      %565 = vmatpush1.bf16.msra.mxu0 0
      %566 = vmatprep.subr.bf16.mxu0 0
      %567 = vmatpush1.bf16.msra.mxu0 0
      %568 = vmatprep.subr.bf16.mxu0 0
      %569 = vmatpush1.bf16.msra.mxu0 0
      %570 = vmatprep.subr.bf16.mxu0 0
      %571 = vmatpush1.bf16.msra.mxu0 0
      %572 = vmatprep.subr.bf16.mxu0 0
      %573 = vmatpush1.bf16.msra.mxu0 0
      %574 = vmatprep.subr.bf16.mxu0 0
      %575 = vmatpush1.bf16.msra.mxu0 0
      %576 = vmatprep.mubr.bf16.mxu0 0
      %577 = vmatmul.mubr.bf16.gmra.mrb[0].mxu0 %v542
      %v578 = vpop.f32.mrb[0].mxu0
      %v579 = vadd.f32 0.0, %v578
      %v580 = vpop.f32.mrb[0].mxu0
      %v581 = vadd.f32 0.0, %v580
      %v582 = vpop.f32.mrb[0].mxu0
      %v583 = vadd.f32 0.0, %v582
      %v584 = vpop.f32.mrb[0].mxu0
      %v585 = vadd.f32 0.0, %v584
      %586 = vdwg.mxu0
      %v587 = vadd.f32 %v485, %v579
      %v588 = vadd.f32 %v487, %v581
      %v589 = vadd.f32 %v489, %v583
      %v590 = vadd.f32 %v491, %v585
      %591 = vrot.lane.b32.xlu0 %v340, 127
      %v592 = vpop.permute.xlu0 %591
      %593 = vrot.lane.b32.xlu0 %v344, 127
      %v594 = vpop.permute.xlu0 %593
      %vm595 = vcmask 1039360
      %v596 = vsel %vm595, %v592, %v594
      %vm597 = vcmp.ne.s16.totalorder %v592, 0
      %vm598 = vcmp.ne.s16.totalorder %v596, 0
      %vm599 = vcmp.ne.s16.totalorder %v594, 0
      %v600 = vsel %vm597, %v328, 0
      %v601 = vsel %vm598, %v329, 0
      %v602 = vsel %vm599, %v330, 0
      %s603 = scalar_lea.vmem %s2, 24
      %v604 = vld [vmem:[%s603] sm:$0xf]
      %v605 = vld [vmem:[%s603 + $0x4] sm:$0xf]
      %v608 = vunpack.c.l.b16 %v604
      %v609 = vunpack.c.l.b16 %v605
      %v610 = vpack.c.b16 %v609, %v608
      %614 = vrot.lane.b32.xlu0 %v600, 1
      %v615 = vpop.permute.xlu0 %614
      %616 = vrot.lane.b32.xlu0 %v601, 1
      %v617 = vpop.permute.xlu0 %616
      %618 = vrot.lane.b32.xlu0 %v602, 1
      %v619 = vpop.permute.xlu0 %618
      %vm620 = vcmask 7168
      %v621 = vsel %vm620, %v615, %v617
      %v622 = vsel %vm620, %v617, %v619
      %v626 = vsel %vm381, %v610, 0
      %628 = vmatprep.subr.bf16.mxu0 %v622
      %629 = vmatpush1.bf16.msra.mxu0 %v621
      %630 = vmatprep.subr.bf16.mxu0 0
      %631 = vmatpush1.bf16.msra.mxu0 0
      %632 = vmatprep.subr.bf16.mxu0 0
      %633 = vmatpush1.bf16.msra.mxu0 0
      %634 = vmatprep.subr.bf16.mxu0 0
      %635 = vmatpush1.bf16.msra.mxu0 0
      %636 = vmatprep.subr.bf16.mxu0 0
      %637 = vmatpush1.bf16.msra.mxu0 0
      %638 = vmatprep.subr.bf16.mxu0 0
      %639 = vmatpush1.bf16.msra.mxu0 0
      %640 = vmatprep.subr.bf16.mxu0 0
      %641 = vmatpush1.bf16.msra.mxu0 0
      %642 = vmatprep.subr.bf16.mxu0 0
      %643 = vmatpush1.bf16.msra.mxu0 0
      %644 = vmatprep.subr.bf16.mxu0 0
      %645 = vmatpush1.bf16.msra.mxu0 0
      %646 = vmatprep.subr.bf16.mxu0 0
      %647 = vmatpush1.bf16.msra.mxu0 0
      %648 = vmatprep.subr.bf16.mxu0 0
      %649 = vmatpush1.bf16.msra.mxu0 0
      %650 = vmatprep.subr.bf16.mxu0 0
      %651 = vmatpush1.bf16.msra.mxu0 0
      %652 = vmatprep.subr.bf16.mxu0 0
      %653 = vmatpush1.bf16.msra.mxu0 0
      %654 = vmatprep.subr.bf16.mxu0 0
      %655 = vmatpush1.bf16.msra.mxu0 0
      %656 = vmatprep.subr.bf16.mxu0 0
      %657 = vmatpush1.bf16.msra.mxu0 0
      %658 = vmatprep.subr.bf16.mxu0 0
      %659 = vmatpush1.bf16.msra.mxu0 0
      %660 = vmatprep.mubr.bf16.mxu0 0
      %661 = vmatmul.mubr.bf16.gmra.mrb[0].mxu0 %v626
      %v662 = vpop.f32.mrb[0].mxu0
      %v663 = vadd.f32 0.0, %v662
      %v664 = vpop.f32.mrb[0].mxu0
      %v665 = vadd.f32 0.0, %v664
      %v666 = vpop.f32.mrb[0].mxu0
      %v667 = vadd.f32 0.0, %v666
      %v668 = vpop.f32.mrb[0].mxu0
      %v669 = vadd.f32 0.0, %v668
      %670 = vdwg.mxu0
      %v671 = vadd.f32 %v587, %v663
      %v672 = vadd.f32 %v588, %v665
      %v673 = vadd.f32 %v589, %v667
      %v674 = vadd.f32 %v590, %v669
      %s675 = scalar_lea.vmem %s2, 32
      %v676 = vld [vmem:[%s675] sm:$0xf]
      %v677 = vld [vmem:[%s675 + $0x4] sm:$0xf]
      %v680 = vunpack.c.l.b16 %v676
      %v681 = vunpack.c.l.b16 %v677
      %v682 = vpack.c.b16 %v681, %v680
      %v684 = vsel %vm381, %v682, 0
      %686 = vmatprep.subr.bf16.mxu0 %v330
      %687 = vmatpush1.bf16.msra.mxu0 %v329
      %688 = vmatprep.subr.bf16.mxu0 0
      %689 = vmatpush1.bf16.msra.mxu0 0
      %690 = vmatprep.subr.bf16.mxu0 0
      %691 = vmatpush1.bf16.msra.mxu0 0
      %692 = vmatprep.subr.bf16.mxu0 0
      %693 = vmatpush1.bf16.msra.mxu0 0
      %694 = vmatprep.subr.bf16.mxu0 0
      %695 = vmatpush1.bf16.msra.mxu0 0
      %696 = vmatprep.subr.bf16.mxu0 0
      %697 = vmatpush1.bf16.msra.mxu0 0
      %698 = vmatprep.subr.bf16.mxu0 0
      %699 = vmatpush1.bf16.msra.mxu0 0
      %700 = vmatprep.subr.bf16.mxu0 0
      %701 = vmatpush1.bf16.msra.mxu0 0
      %702 = vmatprep.subr.bf16.mxu0 0
      %703 = vmatpush1.bf16.msra.mxu0 0
      %704 = vmatprep.subr.bf16.mxu0 0
      %705 = vmatpush1.bf16.msra.mxu0 0
      %706 = vmatprep.subr.bf16.mxu0 0
      %707 = vmatpush1.bf16.msra.mxu0 0
      %708 = vmatprep.subr.bf16.mxu0 0
      %709 = vmatpush1.bf16.msra.mxu0 0
      %710 = vmatprep.subr.bf16.mxu0 0
      %711 = vmatpush1.bf16.msra.mxu0 0
      %712 = vmatprep.subr.bf16.mxu0 0
      %713 = vmatpush1.bf16.msra.mxu0 0
      %714 = vmatprep.subr.bf16.mxu0 0
      %715 = vmatpush1.bf16.msra.mxu0 0
      %716 = vmatprep.subr.bf16.mxu0 0
      %717 = vmatpush1.bf16.msra.mxu0 0
      %718 = vmatprep.mubr.bf16.mxu0 0
      %719 = vmatmul.mubr.bf16.gmra.mrb[0].mxu0 %v684
      %v720 = vpop.f32.mrb[0].mxu0
      %v721 = vadd.f32 0.0, %v720
      %v722 = vpop.f32.mrb[0].mxu0
      %v723 = vadd.f32 0.0, %v722
      %v724 = vpop.f32.mrb[0].mxu0
      %v725 = vadd.f32 0.0, %v724
      %v726 = vpop.f32.mrb[0].mxu0
      %v727 = vadd.f32 0.0, %v726
      %728 = vdwg.mxu0
      %v729 = vadd.f32 %v671, %v721
      %v730 = vadd.f32 %v672, %v723
      %v731 = vadd.f32 %v673, %v725
      %v732 = vadd.f32 %v674, %v727
      %v733 = vld [vmem:[#allocation2 + $0x8] sm:$0xff]
      %v734 = vld [vmem:[#allocation2 + $0x10] sm:$0xff]
      %v735 = vld [vmem:[#allocation2 + $0x18] sm:$0xff]
      %736 = vrot.lane.b32.xlu0 %v502, 1
      %v737 = vpop.permute.xlu0 %736
      %738 = vrot.lane.b32.xlu0 %v506, 1
      %v739 = vpop.permute.xlu0 %738
      %v740 = vsel %vm620, %v737, %v739
      %vm741 = vcmp.ne.s16.totalorder %v737, 0
      %vm742 = vcmp.ne.s16.totalorder %v740, 0
      %vm743 = vcmp.ne.s16.totalorder %v739, 0
      %v744 = vsel %vm741, %v733, 0
      %v745 = vsel %vm742, %v734, 0
      %v746 = vsel %vm743, %v735, 0
      %s747 = scalar_lea.vmem %s2, 40
      %v748 = vld [vmem:[%s747] sm:$0xf]
      %v749 = vld [vmem:[%s747 + $0x4] sm:$0xf]
      %v752 = vunpack.c.l.b16 %v748
      %v753 = vunpack.c.l.b16 %v749
      %v754 = vpack.c.b16 %v753, %v752
      %758 = vrot.lane.b32.xlu0 %v744, 127
      %v759 = vpop.permute.xlu0 %758
      %760 = vrot.lane.b32.xlu0 %v745, 127
      %v761 = vpop.permute.xlu0 %760
      %762 = vrot.lane.b32.xlu0 %v746, 127
      %v763 = vpop.permute.xlu0 %762
      %v764 = vsel %vm595, %v759, %v761
      %v765 = vsel %vm595, %v761, %v763
      %v769 = vsel %vm381, %v754, 0
      %771 = vmatprep.subr.bf16.mxu0 %v765
      %772 = vmatpush1.bf16.msra.mxu0 %v764
      %773 = vmatprep.subr.bf16.mxu0 0
      %774 = vmatpush1.bf16.msra.mxu0 0
      %775 = vmatprep.subr.bf16.mxu0 0
      %776 = vmatpush1.bf16.msra.mxu0 0
      %777 = vmatprep.subr.bf16.mxu0 0
      %778 = vmatpush1.bf16.msra.mxu0 0
      %779 = vmatprep.subr.bf16.mxu0 0
      %780 = vmatpush1.bf16.msra.mxu0 0
      %781 = vmatprep.subr.bf16.mxu0 0
      %782 = vmatpush1.bf16.msra.mxu0 0
      %783 = vmatprep.subr.bf16.mxu0 0
      %784 = vmatpush1.bf16.msra.mxu0 0
      %785 = vmatprep.subr.bf16.mxu0 0
      %786 = vmatpush1.bf16.msra.mxu0 0
      %787 = vmatprep.subr.bf16.mxu0 0
      %788 = vmatpush1.bf16.msra.mxu0 0
      %789 = vmatprep.subr.bf16.mxu0 0
      %790 = vmatpush1.bf16.msra.mxu0 0
      %791 = vmatprep.subr.bf16.mxu0 0
      %792 = vmatpush1.bf16.msra.mxu0 0
      %793 = vmatprep.subr.bf16.mxu0 0
      %794 = vmatpush1.bf16.msra.mxu0 0
      %795 = vmatprep.subr.bf16.mxu0 0
      %796 = vmatpush1.bf16.msra.mxu0 0
      %797 = vmatprep.subr.bf16.mxu0 0
      %798 = vmatpush1.bf16.msra.mxu0 0
      %799 = vmatprep.subr.bf16.mxu0 0
      %800 = vmatpush1.bf16.msra.mxu0 0
      %801 = vmatprep.subr.bf16.mxu0 0
      %802 = vmatpush1.bf16.msra.mxu0 0
      %803 = vmatprep.mubr.bf16.mxu0 0
      %804 = vmatmul.mubr.bf16.gmra.mrb[0].mxu0 %v769
      %v805 = vpop.f32.mrb[0].mxu0
      %v806 = vadd.f32 0.0, %v805
      %v807 = vpop.f32.mrb[0].mxu0
      %v808 = vadd.f32 0.0, %v807
      %v809 = vpop.f32.mrb[0].mxu0
      %v810 = vadd.f32 0.0, %v809
      %v811 = vpop.f32.mrb[0].mxu0
      %v812 = vadd.f32 0.0, %v811
      %813 = vdwg.mxu0
      %v814 = vadd.f32 %v729, %v806
      %v815 = vadd.f32 %v730, %v808
      %v816 = vadd.f32 %v731, %v810
      %v817 = vadd.f32 %v732, %v812
      %818 = vrot.lane.b32.xlu0 %v340, 15
      %v819 = vpop.permute.xlu0 %818
      %820 = vrot.lane.b32.xlu0 %v344, 15
      %v821 = vpop.permute.xlu0 %820
      %v822 = vsel %vm536, %v819, %v821
      %vm823 = vcmp.ne.s16.totalorder %v819, 0
      %vm824 = vcmp.ne.s16.totalorder %v822, 0
      %vm825 = vcmp.ne.s16.totalorder %v821, 0
      %v826 = vsel %vm823, %v733, 0
      %v827 = vsel %vm824, %v734, 0
      %v828 = vsel %vm825, %v735, 0
      %s829 = scalar_lea.vmem %s2, 48
      %v830 = vld [vmem:[%s829] sm:$0xf]
      %v831 = vld [vmem:[%s829 + $0x4] sm:$0xf]
      %v834 = vunpack.c.l.b16 %v830
      %v835 = vunpack.c.l.b16 %v831
      %v836 = vpack.c.b16 %v835, %v834
      %840 = vrot.lane.b32.xlu0 %v826, 113
      %v841 = vpop.permute.xlu0 %840
      %842 = vrot.lane.b32.xlu0 %v827, 113
      %v843 = vpop.permute.xlu0 %842
      %844 = vrot.lane.b32.xlu0 %v828, 113
      %v845 = vpop.permute.xlu0 %844
      %v846 = vsel %vm511, %v841, %v843
      %v847 = vsel %vm511, %v843, %v845
      %v851 = vsel %vm381, %v836, 0
      %853 = vmatprep.subr.bf16.mxu0 %v847
      %854 = vmatpush1.bf16.msra.mxu0 %v846
      %855 = vmatprep.subr.bf16.mxu0 0
      %856 = vmatpush1.bf16.msra.mxu0 0
      %857 = vmatprep.subr.bf16.mxu0 0
      %858 = vmatpush1.bf16.msra.mxu0 0
      %859 = vmatprep.subr.bf16.mxu0 0
      %860 = vmatpush1.bf16.msra.mxu0 0
      %861 = vmatprep.subr.bf16.mxu0 0
      %862 = vmatpush1.bf16.msra.mxu0 0
      %863 = vmatprep.subr.bf16.mxu0 0
      %864 = vmatpush1.bf16.msra.mxu0 0
      %865 = vmatprep.subr.bf16.mxu0 0
      %866 = vmatpush1.bf16.msra.mxu0 0
      %867 = vmatprep.subr.bf16.mxu0 0
      %868 = vmatpush1.bf16.msra.mxu0 0
      %869 = vmatprep.subr.bf16.mxu0 0
      %870 = vmatpush1.bf16.msra.mxu0 0
      %871 = vmatprep.subr.bf16.mxu0 0
      %872 = vmatpush1.bf16.msra.mxu0 0
      %873 = vmatprep.subr.bf16.mxu0 0
      %874 = vmatpush1.bf16.msra.mxu0 0
      %875 = vmatprep.subr.bf16.mxu0 0
      %876 = vmatpush1.bf16.msra.mxu0 0
      %877 = vmatprep.subr.bf16.mxu0 0
      %878 = vmatpush1.bf16.msra.mxu0 0
      %879 = vmatprep.subr.bf16.mxu0 0
      %880 = vmatpush1.bf16.msra.mxu0 0
      %881 = vmatprep.subr.bf16.mxu0 0
      %882 = vmatpush1.bf16.msra.mxu0 0
      %883 = vmatprep.subr.bf16.mxu0 0
      %884 = vmatpush1.bf16.msra.mxu0 0
      %885 = vmatprep.mubr.bf16.mxu0 0
      %886 = vmatmul.mubr.bf16.gmra.mrb[0].mxu0 %v851
      %v887 = vpop.f32.mrb[0].mxu0
      %v888 = vadd.f32 0.0, %v887
      %v889 = vpop.f32.mrb[0].mxu0
      %v890 = vadd.f32 0.0, %v889
      %v891 = vpop.f32.mrb[0].mxu0
      %v892 = vadd.f32 0.0, %v891
      %v893 = vpop.f32.mrb[0].mxu0
      %v894 = vadd.f32 0.0, %v893
      %895 = vdwg.mxu0
      %v896 = vadd.f32 %v814, %v888
      %v897 = vadd.f32 %v815, %v890
      %v898 = vadd.f32 %v816, %v892
      %v899 = vadd.f32 %v817, %v894
      %s900 = scalar_lea.vmem %s2, 56
      %v901 = vld [vmem:[%s900] sm:$0xf]
      %v902 = vld [vmem:[%s900 + $0x4] sm:$0xf]
      %v905 = vunpack.c.l.b16 %v901
      %v906 = vunpack.c.l.b16 %v902
      %v907 = vpack.c.b16 %v906, %v905
      %911 = vrot.lane.b32.xlu0 %v733, 112
      %v912 = vpop.permute.xlu0 %911
      %913 = vrot.lane.b32.xlu0 %v734, 112
      %v914 = vpop.permute.xlu0 %913
      %915 = vrot.lane.b32.xlu0 %v735, 112
      %v916 = vpop.permute.xlu0 %915
      %vm917 = vcmask 916480
      %v918 = vsel %vm917, %v912, %v914
      %v919 = vsel %vm917, %v914, %v916
      %v923 = vsel %vm381, %v907, 0
      %925 = vmatprep.subr.bf16.mxu0 %v919
      %926 = vmatpush1.bf16.msra.mxu0 %v918
      %927 = vmatprep.subr.bf16.mxu0 0
      %928 = vmatpush1.bf16.msra.mxu0 0
      %929 = vmatprep.subr.bf16.mxu0 0
      %930 = vmatpush1.bf16.msra.mxu0 0
      %931 = vmatprep.subr.bf16.mxu0 0
      %932 = vmatpush1.bf16.msra.mxu0 0
      %933 = vmatprep.subr.bf16.mxu0 0
      %934 = vmatpush1.bf16.msra.mxu0 0
      %935 = vmatprep.subr.bf16.mxu0 0
      %936 = vmatpush1.bf16.msra.mxu0 0
      %937 = vmatprep.subr.bf16.mxu0 0
      %938 = vmatpush1.bf16.msra.mxu0 0
      %939 = vmatprep.subr.bf16.mxu0 0
      %940 = vmatpush1.bf16.msra.mxu0 0
      %941 = vmatprep.subr.bf16.mxu0 0
      %942 = vmatpush1.bf16.msra.mxu0 0
      %943 = vmatprep.subr.bf16.mxu0 0
      %944 = vmatpush1.bf16.msra.mxu0 0
      %945 = vmatprep.subr.bf16.mxu0 0
      %946 = vmatpush1.bf16.msra.mxu0 0
      %947 = vmatprep.subr.bf16.mxu0 0
      %948 = vmatpush1.bf16.msra.mxu0 0
      %949 = vmatprep.subr.bf16.mxu0 0
      %950 = vmatpush1.bf16.msra.mxu0 0
      %951 = vmatprep.subr.bf16.mxu0 0
      %952 = vmatpush1.bf16.msra.mxu0 0
      %953 = vmatprep.subr.bf16.mxu0 0
      %954 = vmatpush1.bf16.msra.mxu0 0
      %955 = vmatprep.subr.bf16.mxu0 0
      %956 = vmatpush1.bf16.msra.mxu0 0
      %957 = vmatprep.mubr.bf16.mxu0 0
      %958 = vmatmul.mubr.bf16.gmra.mrb[0].mxu0 %v923
      %v959 = vpop.f32.mrb[0].mxu0
      %v960 = vadd.f32 0.0, %v959
      %v961 = vpop.f32.mrb[0].mxu0
      %v962 = vadd.f32 0.0, %v961
      %v963 = vpop.f32.mrb[0].mxu0
      %v964 = vadd.f32 0.0, %v963
      %v965 = vpop.f32.mrb[0].mxu0
      %v966 = vadd.f32 0.0, %v965
      %967 = vdwg.mxu0
      %v968 = vadd.f32 %v896, %v960
      %v969 = vadd.f32 %v897, %v962
      %v970 = vadd.f32 %v898, %v964
      %v971 = vadd.f32 %v899, %v966
      %972 = vrot.lane.b32.xlu0 %v502, 17
      %v973 = vpop.permute.xlu0 %972
      %974 = vrot.lane.b32.xlu0 %v506, 17
      %v975 = vpop.permute.xlu0 %974
      %v976 = vsel %vm442, %v973, %v975
      %vm977 = vcmp.ne.s16.totalorder %v973, 0
      %vm978 = vcmp.ne.s16.totalorder %v976, 0
      %vm979 = vcmp.ne.s16.totalorder %v975, 0
      %v980 = vsel %vm977, %v733, 0
      %v981 = vsel %vm978, %v734, 0
      %v982 = vsel %vm979, %v735, 0
      %s983 = scalar_lea.vmem %s2, 64
      %v984 = vld [vmem:[%s983] sm:$0xf]
      %v985 = vld [vmem:[%s983 + $0x4] sm:$0xf]
      %v988 = vunpack.c.l.b16 %v984
      %v989 = vunpack.c.l.b16 %v985
      %v990 = vpack.c.b16 %v989, %v988
      %994 = vrot.lane.b32.xlu0 %v980, 111
      %v995 = vpop.permute.xlu0 %994
      %996 = vrot.lane.b32.xlu0 %v981, 111
      %v997 = vpop.permute.xlu0 %996
      %998 = vrot.lane.b32.xlu0 %v982, 111
      %v999 = vpop.permute.xlu0 %998
      %v1000 = vsel %vm349, %v995, %v997
      %v1001 = vsel %vm349, %v997, %v999
      %v1005 = vsel %vm381, %v990, 0
      %1007 = vmatprep.subr.bf16.mxu0 %v1001
      %1008 = vmatpush1.bf16.msra.mxu0 %v1000
      %1009 = vmatprep.subr.bf16.mxu0 0
      %1010 = vmatpush1.bf16.msra.mxu0 0
      %1011 = vmatprep.subr.bf16.mxu0 0
      %1012 = vmatpush1.bf16.msra.mxu0 0
      %1013 = vmatprep.subr.bf16.mxu0 0
      %1014 = vmatpush1.bf16.msra.mxu0 0
      %1015 = vmatprep.subr.bf16.mxu0 0
      %1016 = vmatpush1.bf16.msra.mxu0 0
      %1017 = vmatprep.subr.bf16.mxu0 0
      %1018 = vmatpush1.bf16.msra.mxu0 0
      %1019 = vmatprep.subr.bf16.mxu0 0
      %1020 = vmatpush1.bf16.msra.mxu0 0
      %1021 = vmatprep.subr.bf16.mxu0 0
      %1022 = vmatpush1.bf16.msra.mxu0 0
      %1023 = vmatprep.subr.bf16.mxu0 0
      %1024 = vmatpush1.bf16.msra.mxu0 0
      %1025 = vmatprep.subr.bf16.mxu0 0
      %1026 = vmatpush1.bf16.msra.mxu0 0
      %1027 = vmatprep.subr.bf16.mxu0 0
      %1028 = vmatpush1.bf16.msra.mxu0 0
      %1029 = vmatprep.subr.bf16.mxu0 0
      %1030 = vmatpush1.bf16.msra.mxu0 0
      %1031 = vmatprep.subr.bf16.mxu0 0
      %1032 = vmatpush1.bf16.msra.mxu0 0
      %1033 = vmatprep.subr.bf16.mxu0 0
      %1034 = vmatpush1.bf16.msra.mxu0 0
      %1035 = vmatprep.subr.bf16.mxu0 0
      %1036 = vmatpush1.bf16.msra.mxu0 0
      %1037 = vmatprep.subr.bf16.mxu0 0
      %1038 = vmatpush1.bf16.msra.mxu0 0
      %1039 = vmatprep.mubr.bf16.mxu0 0
      %1040 = vmatmul.mubr.bf16.gmra.mrb[0].mxu0 %v1005
      %v1041 = vpop.f32.mrb[0].mxu0
      %v1042 = vadd.f32 0.0, %v1041
      %v1043 = vpop.f32.mrb[0].mxu0
      %v1044 = vadd.f32 0.0, %v1043
      %v1045 = vpop.f32.mrb[0].mxu0
      %v1046 = vadd.f32 0.0, %v1045
      %v1047 = vpop.f32.mrb[0].mxu0
      %v1048 = vadd.f32 0.0, %v1047
      %1049 = vdwg.mxu0
      %v1050 = vadd.f32 %v968, %v1042
      %v1051 = vadd.f32 %v969, %v1044
      %v1052 = vadd.f32 %v970, %v1046
      %v1053 = vadd.f32 %v971, %v1048
      %v1054 = vadd.f32 %v1050, %v1051
      %1055 = vadd.xlane.f32.xlu0 %v1054
      %v1056 = vpop.xlane.xlu0 %1055
      %v1057 = vadd.f32 %v1052, %v1053
      %1058 = vadd.xlane.f32.xlu0 %v1057
      %v1059 = vpop.xlane.xlu0 %1058
      %vm1060 = vcmask 7168
      %1061 = vst.msk [vmem:[%s244] sm:$0xff] %vm1060, %v1056
      %1062 = vst.msk [vmem:[%s244 + $0x8] sm:$0xff] %vm1060, %v1059
      %v1063 = vmul.f32 %v1050, %v1050
      %v1064 = vmul.f32 %v1051, %v1051
      %v1065 = vmul.f32 %v1052, %v1052
      %v1066 = vmul.f32 %v1053, %v1053
      %v1067 = vadd.f32 %v1063, %v1064
      %1068 = vadd.xlane.f32.xlu0 %v1067
      %v1069 = vpop.xlane.xlu0 %1068
      %v1070 = vadd.f32 %v1065, %v1066
      %1071 = vadd.xlane.f32.xlu0 %v1070
      %v1072 = vpop.xlane.xlu0 %1071
      %1073 = vst.msk [vmem:[%s249] sm:$0xff] %vm1060, %v1069
      %1074 = vst.msk [vmem:[%s249 + $0x8] sm:$0xff] %vm1060, %v1072
      %v1075 = vpack.c.bf16 %v1052, %v1050
      %v1076 = vpack.c.bf16 %v1053, %v1051
      %v1079 = vunpack.c.l.b16 %v1075
      %v1080 = vunpack.c.l.b16 %v1076
      %v1081 = vunpack.c.h.b16 %v1075
      %v1082 = vunpack.c.h.b16 %v1076
      %v1083 = vpack.c.b16 %v1080, %v1079
      %v1084 = vpack.c.b16 %v1082, %v1081
      %1087 = vst [vmem:[%s239] sm:$0xff] %v1083
      %1088 = vst [vmem:[%s239 + $0x8] sm:$0xff] %v1084
      %p1089 = scmp.lt.s32.totalorder %s17, 1
      %s1090 = scalar_select %p1089, %s17, 1
      %s1091 = smul.addr %s1090, 4
      %s1092 = smul.addr %s1091, 4
      %s1093 = scalar_lea.vmem %s3, %s1092
      %p1094 = scmp.lt.s32.totalorder %s17, 1
      %s1095 = scalar_select %p1094, %s17, 1
      %s1096 = smul.addr %s1095, 2
      %s1097 = smul.addr %s1096, 8
      %s1098 = scalar_lea.vmem %s4, %s1097
      %p1099 = scmp.lt.s32.totalorder %s17, 1
      %s1100 = scalar_select %p1099, %s17, 1
      %s1101 = smul.addr %s1100, 2
      %s1102 = smul.addr %s1101, 8
      %s1103 = scalar_lea.vmem %s5, %s1102
      // Predicated region
      $region33: #{no_relu_basic_resnet_unit.4} parent=31 // pred_check
        %p1104 = pneg %p103
      $region34: #{no_relu_basic_resnet_unit.4} parent=31 // pred_check_branch
        %1106 = sbr.rel (%p1104) target = $region36
      $region35: #{no_relu_basic_resnet_unit.4} parent=31 // pred_region
        _
      $region36: #{no_relu_basic_resnet_unit.4} parent=31 // pred_fallthru
        _
      // Predicated region
      $region37: #{no_relu_basic_resnet_unit.4} parent=31 // pred_check
        %p1107 = pneg %p129
      $region38: #{no_relu_basic_resnet_unit.4} parent=31 // pred_check_branch
        %1109 = sbr.rel (%p1107) target = $region40
      $region39: #{no_relu_basic_resnet_unit.4} parent=31 // pred_region
        _
      $region40: #{no_relu_basic_resnet_unit.4} parent=31 // pred_fallthru
        _
      // Predicated region
      $region41: #{no_relu_basic_resnet_unit.4} parent=31 // pred_check
        %p1110 = pneg %p155
      $region42: #{no_relu_basic_resnet_unit.4} parent=31 // pred_check_branch
        %1112 = sbr.rel (%p1110) target = $region44
      $region43: #{no_relu_basic_resnet_unit.4} parent=31 // pred_region
        _
      $region44: #{no_relu_basic_resnet_unit.4} parent=31 // pred_fallthru
        _
    $region32: #{no_relu_basic_resnet_unit.4} parent=5 // pred_fallthru
      _
    %p1113 = scmp.le.s32.totalorder 2, %s12
    // Predicated region
    $region45: #{no_relu_basic_resnet_unit.4} parent=5 // pred_check
      %p1114 = pneg %p1113
    $region46: #{no_relu_basic_resnet_unit.4} parent=5 // pred_check_branch
      %1116 = sbr.rel (%p1114) target = $region48
    $region47: #{no_relu_basic_resnet_unit.4} parent=5 // pred_region
      %s1117 = ssub.s32 %s12, 2
      // Predicated region
      $region49: #{no_relu_basic_resnet_unit.4} parent=47 // pred_check
        %p1118 = pneg %p109
      $region50: #{no_relu_basic_resnet_unit.4} parent=47 // pred_check_branch
        %1120 = sbr.rel (%p1118) target = $region52
      $region51: #{no_relu_basic_resnet_unit.4} parent=47 // pred_region
        %p1121 = scmp.lt.s32.totalorder %s18, 1
        %s1122 = scalar_select %p1121, %s18, 1
        %s1123 = smul.addr %s1122, 4
        %s1124 = smul.addr %s1123, 4
        %s1125 = scalar_lea.vmem %s3, %s1124
      $region52: #{no_relu_basic_resnet_unit.4} parent=47 // pred_fallthru
        _
      // Predicated region
      $region53: #{no_relu_basic_resnet_unit.4} parent=47 // pred_check
        %p1126 = pneg %p135
      $region54: #{no_relu_basic_resnet_unit.4} parent=47 // pred_check_branch
        %1128 = sbr.rel (%p1126) target = $region56
      $region55: #{no_relu_basic_resnet_unit.4} parent=47 // pred_region
        %p1129 = scmp.lt.s32.totalorder %s18, 1
        %s1130 = scalar_select %p1129, %s18, 1
        %s1131 = smul.addr %s1130, 2
        %s1132 = smul.addr %s1131, 8
        %s1133 = scalar_lea.vmem %s4, %s1132
      $region56: #{no_relu_basic_resnet_unit.4} parent=47 // pred_fallthru
        _
      // Predicated region
      $region57: #{no_relu_basic_resnet_unit.4} parent=47 // pred_check
        %p1134 = pneg %p161
      $region58: #{no_relu_basic_resnet_unit.4} parent=47 // pred_check_branch
        %1136 = sbr.rel (%p1134) target = $region60
      $region59: #{no_relu_basic_resnet_unit.4} parent=47 // pred_region
        %p1137 = scmp.lt.s32.totalorder %s18, 1
        %s1138 = scalar_select %p1137, %s18, 1
        %s1139 = smul.addr %s1138, 2
        %s1140 = smul.addr %s1139, 8
        %s1141 = scalar_lea.vmem %s5, %s1140
      $region60: #{no_relu_basic_resnet_unit.4} parent=47 // pred_fallthru
        _
    $region48: #{no_relu_basic_resnet_unit.4} parent=5 // pred_fallthru
      _
  $region6: #{no_relu_basic_resnet_unit.4} parent=0 // loop_footer
    %s16 = sadd.s32 1, %s12
  $region7: #{no_relu_basic_resnet_unit.4} parent=0 // loop_footer_branch
    %11 = sbr.rel target = $region3
  $region8: #{no_relu_basic_resnet_unit.4} parent=0 // loop_exit
    _

// kernel: no_relu_basic_resnet_unit.3
$region0: #{no_relu_basic_resnet_unit.3}
  #allocation0 [shape = 'u32[]', space=smem, size = 0x4, offset = 0x4, fixed_abs, tag = 'smem constant byte address 0x4 - core index']
  #allocation1 [shape = 'u32[144,128]{1,0:T(1,128)}', space=vmem, size = 0x12000, scoped, tag = 'internal scratch']
  #allocation2 [shape = 'bf16[16,512]{1,0:T(16,128)(2,1)}', space=vmem, size = 0x4000, scoped, tag = 'scratch operand']
  %s0 = inlined_call_operand.vmem [shape: bf16[2,16,256], index: 0, kind: input, shape index: {}]
  %s1 = inlined_call_operand.vmem [shape: bf16[9,16,16], index: 1, kind: input, shape index: {}]
  %s2 = inlined_call_operand.vmem [shape: bf16[2,16,256], index: 2, kind: output, shape index: {0}]
  %s3 = inlined_call_operand.vmem [shape: f32[2,16,1], index: 3, kind: output, shape index: {1}]
  %s4 = inlined_call_operand.vmem [shape: f32[2,16,1], index: 4, kind: output, shape index: {2}]
  %5 = xla_tuple %s2, %s3, %s4
  %s6 = sld [smem:[#allocation0]]
  $region57: #{no_relu_basic_resnet_unit.3} parent=0
    _
  %s8 = ssub.s32 1, %s6
  %s9 = scalar_select 0, %s8, %s6
  loop: start=0, step=1, limit=4
  $region2: #{no_relu_basic_resnet_unit.3} parent=0 // loop_pre_header
    _
  $region3: #{no_relu_basic_resnet_unit.3} parent=0 // loop_header
    %s11 = sphi 0, %s15
    %p12 = scmp.ge.s32.totalorder %s11, 4
    %s21 = sphi 0, %s23
    %s24 = sphi 0, %s21
    %s25 = sphi 0, %s24
    %s41 = sphi 0, %s25
    %s45 = sphi 0, %s45
    %s47 = sphi 0, %s45
    %s48 = sphi 0, %s47
    %s62 = sphi 0, %s48
    %s68 = sphi 0, %s70
    %s71 = sphi 0, %s68
    %s72 = sphi 0, %s71
    %s88 = sphi 0, %s72
    %s94 = sphi 0, %s96
    %s97 = sphi 0, %s94
    %s98 = sphi 0, %s97
    %s114 = sphi 0, %s98
    %s120 = sphi 0, %s122
    %s123 = sphi 0, %s120
    %s124 = sphi 0, %s123
    %s140 = sphi 0, %s124
  $region4: #{no_relu_basic_resnet_unit.3} parent=0 // loop_header_branch
    %14 = sbr.rel (%p12) target = $region8
  $region5: #{no_relu_basic_resnet_unit.3} parent=0 // loop_body
    %s16 = ssub.s32 %s11, 1
    %s17 = ssub.s32 %s11, 2
    %s18 = sadd.s32 %s11, 1
    %s19 = ssub.s32 %s11, %s18
    %p20 = scmp.eq.s32.totalorder %s19, 0
    %s22 = sadd.s32 %s21, 1
    %s23 = scalar_select %p20, %s21, %s22
    %p26 = pneg %p20
    %p27 = scmp.eq.s32.totalorder %s11, 1
    %p28 = por %p26, %p27
    %p29 = scmp.ne.s32.totalorder %s21, %s24
    %p30 = scmp.eq.s32.totalorder %s11, 0
    %p31 = por %p29, %p30
    %p32 = scmp.ne.s32.totalorder %s21, %s24
    %p33 = scmp.eq.s32.totalorder %s16, 1
    %p34 = por %p32, %p33
    %p35 = scmp.ne.s32.totalorder %s24, %s25
    %p36 = scmp.eq.s32.totalorder %s16, 0
    %p37 = por %p35, %p36
    %p38 = scmp.ne.s32.totalorder %s24, %s25
    %p39 = scmp.eq.s32.totalorder %s17, 1
    %p40 = por %p38, %p39
    %p42 = scmp.ne.s32.totalorder %s25, %s41
    %p43 = scmp.eq.s32.totalorder %s17, 0
    %p44 = por %p42, %p43
    %s46 = sadd.s32 %s45, 1
    %p49 = scmp.eq.s32.totalorder %s11, 1
    %p50 = scmp.ne.s32.totalorder %s45, %s47
    %p51 = scmp.eq.s32.totalorder %s11, 0
    %p52 = por %p50, %p51
    %p53 = scmp.ne.s32.totalorder %s45, %s47
    %p54 = scmp.eq.s32.totalorder %s16, 1
    %p55 = por %p53, %p54
    %p56 = scmp.ne.s32.totalorder %s47, %s48
    %p57 = scmp.eq.s32.totalorder %s16, 0
    %p58 = por %p56, %p57
    %p59 = scmp.ne.s32.totalorder %s47, %s48
    %p60 = scmp.eq.s32.totalorder %s17, 1
    %p61 = por %p59, %p60
    %p63 = scmp.ne.s32.totalorder %s48, %s62
    %p64 = scmp.eq.s32.totalorder %s17, 0
    %p65 = por %p63, %p64
    %s66 = ssub.s32 %s11, %s18
    %p67 = scmp.eq.s32.totalorder %s66, 0
    %s69 = sadd.s32 %s68, 1
    %s70 = scalar_select %p67, %s68, %s69
    %p73 = pneg %p67
    %p74 = scmp.eq.s32.totalorder %s11, 1
    %p75 = por %p73, %p74
    %p76 = scmp.ne.s32.totalorder %s68, %s71
    %p77 = scmp.eq.s32.totalorder %s11, 0
    %p78 = por %p76, %p77
    %p79 = scmp.ne.s32.totalorder %s68, %s71
    %p80 = scmp.eq.s32.totalorder %s16, 1
    %p81 = por %p79, %p80
    %p82 = scmp.ne.s32.totalorder %s71, %s72
    %p83 = scmp.eq.s32.totalorder %s16, 0
    %p84 = por %p82, %p83
    %p85 = scmp.ne.s32.totalorder %s71, %s72
    %p86 = scmp.eq.s32.totalorder %s17, 1
    %p87 = por %p85, %p86
    %p89 = scmp.ne.s32.totalorder %s72, %s88
    %p90 = scmp.eq.s32.totalorder %s17, 0
    %p91 = por %p89, %p90
    %s92 = ssub.s32 %s11, %s18
    %p93 = scmp.eq.s32.totalorder %s92, 0
    %s95 = sadd.s32 %s94, 1
    %s96 = scalar_select %p93, %s94, %s95
    %p99 = pneg %p93
    %p100 = scmp.eq.s32.totalorder %s11, 1
    %p101 = por %p99, %p100
    %p102 = scmp.ne.s32.totalorder %s94, %s97
    %p103 = scmp.eq.s32.totalorder %s11, 0
    %p104 = por %p102, %p103
    %p105 = scmp.ne.s32.totalorder %s94, %s97
    %p106 = scmp.eq.s32.totalorder %s16, 1
    %p107 = por %p105, %p106
    %p108 = scmp.ne.s32.totalorder %s97, %s98
    %p109 = scmp.eq.s32.totalorder %s16, 0
    %p110 = por %p108, %p109
    %p111 = scmp.ne.s32.totalorder %s97, %s98
    %p112 = scmp.eq.s32.totalorder %s17, 1
    %p113 = por %p111, %p112
    %p115 = scmp.ne.s32.totalorder %s98, %s114
    %p116 = scmp.eq.s32.totalorder %s17, 0
    %p117 = por %p115, %p116
    %s118 = ssub.s32 %s11, %s18
    %p119 = scmp.eq.s32.totalorder %s118, 0
    %s121 = sadd.s32 %s120, 1
    %s122 = scalar_select %p119, %s120, %s121
    %p125 = pneg %p119
    %p126 = scmp.eq.s32.totalorder %s11, 1
    %p127 = por %p125, %p126
    %p128 = scmp.ne.s32.totalorder %s120, %s123
    %p129 = scmp.eq.s32.totalorder %s11, 0
    %p130 = por %p128, %p129
    %p131 = scmp.ne.s32.totalorder %s120, %s123
    %p132 = scmp.eq.s32.totalorder %s16, 1
    %p133 = por %p131, %p132
    %p134 = scmp.ne.s32.totalorder %s123, %s124
    %p135 = scmp.eq.s32.totalorder %s16, 0
    %p136 = por %p134, %p135
    %p137 = scmp.ne.s32.totalorder %s123, %s124
    %p138 = scmp.eq.s32.totalorder %s17, 1
    %p139 = por %p137, %p138
    %p141 = scmp.ne.s32.totalorder %s124, %s140
    %p142 = scmp.eq.s32.totalorder %s17, 0
    %p143 = por %p141, %p142
    %p144 = scmp.le.s32.totalorder 1, %s11
    %p145 = scmp.lt.s32.totalorder %s11, 3
    %p146 = pnand %p144, %p145
    %p147 = pneg %p146
    // Predicated region
    $region9: #{no_relu_basic_resnet_unit.3} parent=5 // pred_check
      _
    $region10: #{no_relu_basic_resnet_unit.3} parent=5 // pred_check_branch
      %149 = sbr.rel (%p146) target = $region12
    $region11: #{no_relu_basic_resnet_unit.3} parent=5 // pred_region
      %s150 = ssub.s32 %s11, 1
      // Predicated region
      $region13: #{no_relu_basic_resnet_unit.3} parent=11 // pred_check
        %p151 = pneg %p58
      $region14: #{no_relu_basic_resnet_unit.3} parent=11 // pred_check_branch
        %153 = sbr.rel (%p151) target = $region16
      $region15: #{no_relu_basic_resnet_unit.3} parent=11 // pred_region
        _
      $region16: #{no_relu_basic_resnet_unit.3} parent=11 // pred_fallthru
        _
    $region12: #{no_relu_basic_resnet_unit.3} parent=5 // pred_fallthru
      _
    %p154 = scmp.lt.s32.totalorder %s11, 2
    // Predicated region
    $region17: #{no_relu_basic_resnet_unit.3} parent=5 // pred_check
      %p155 = pneg %p154
    $region18: #{no_relu_basic_resnet_unit.3} parent=5 // pred_check_branch
      %157 = sbr.rel (%p155) target = $region20
    $region19: #{no_relu_basic_resnet_unit.3} parent=5 // pred_region
      // Predicated region
      $region21: #{no_relu_basic_resnet_unit.3} parent=19 // pred_check
        %p158 = pneg %p31
      $region22: #{no_relu_basic_resnet_unit.3} parent=19 // pred_check_branch
        %160 = sbr.rel (%p158) target = $region24
      $region23: #{no_relu_basic_resnet_unit.3} parent=19 // pred_region
        %p161 = scmp.lt.s32.totalorder %s11, 1
        %s162 = scalar_select %p161, %s11, 1
        %s163 = smul.addr %s162, 4
        %s164 = smul.addr %s163, 4
        %s165 = scalar_lea.vmem %s0, %s164
      $region24: #{no_relu_basic_resnet_unit.3} parent=19 // pred_fallthru
        _
    $region20: #{no_relu_basic_resnet_unit.3} parent=5 // pred_fallthru
      _
    %p166 = scmp.le.s32.totalorder 1, %s11
    %p167 = scmp.lt.s32.totalorder %s11, 3
    %p168 = pnand %p166, %p167
    %p169 = pneg %p168
    // Predicated region
    $region25: #{no_relu_basic_resnet_unit.3} parent=5 // pred_check
      _
    $region26: #{no_relu_basic_resnet_unit.3} parent=5 // pred_check_branch
      %171 = sbr.rel (%p168) target = $region28
    $region27: #{no_relu_basic_resnet_unit.3} parent=5 // pred_region
      %s172 = ssub.s32 %s11, 1
      %p173 = scmp.lt.s32.totalorder %s16, 1
      %s174 = scalar_select %p173, %s16, 1
      %s175 = smul.addr %s174, 4
      %s176 = smul.addr %s175, 4
      %s177 = scalar_lea.vmem %s0, %s176
      %p178 = pneg %p37
      %p179 = pneg %p34
      %p180 = pneg %p58
      %p181 = pneg %p55
      %p182 = pneg %p84
      %p183 = pneg %p81
      %p184 = scmp.lt.s32.totalorder %s16, 1
      %s185 = scalar_select %p184, %s16, 1
      %s186 = smul.addr %s185, 4
      %s187 = smul.addr %s186, 4
      %s188 = scalar_lea.vmem %s2, %s187
      %p189 = pneg %p110
      %p190 = pneg %p107
      %p191 = scmp.lt.s32.totalorder %s16, 1
      %s192 = scalar_select %p191, %s16, 1
      %s193 = smul.addr %s192, 2
      %s194 = smul.addr %s193, 8
      %s195 = scalar_lea.vmem %s3, %s194
      %p196 = pneg %p136
      %p197 = pneg %p133
      %p198 = scmp.lt.s32.totalorder %s16, 1
      %s199 = scalar_select %p198, %s16, 1
      %s200 = smul.addr %s199, 2
      %s201 = smul.addr %s200, 8
      %s202 = scalar_lea.vmem %s4, %s201
      %p203 = scmp.lt.s32.totalorder %s16, 1
      %s204 = scalar_select %p203, %s16, 1
      %s205 = smul.addr %s204, 4
      %s206 = smul.addr %s205, 4
      %s207 = scalar_lea.vmem %s0, %s206
      %p208 = scmp.lt.s32.totalorder %s16, 1
      %s209 = scalar_select %p208, %s16, 1
      %s210 = smul.addr %s209, 4
      %s211 = smul.addr %s210, 4
      %s212 = scalar_lea.vmem %s2, %s211
      %p213 = scmp.lt.s32.totalorder %s16, 1
      %s214 = scalar_select %p213, %s16, 1
      %s215 = smul.addr %s214, 2
      %s216 = smul.addr %s215, 8
      %s217 = scalar_lea.vmem %s3, %s216
      %p218 = scmp.lt.s32.totalorder %s16, 1
      %s219 = scalar_select %p218, %s16, 1
      %s220 = smul.addr %s219, 2
      %s221 = smul.addr %s220, 8
      %s222 = scalar_lea.vmem %s4, %s221
      %v226 = vld [vmem:[%s207] sm:$0xff]
      %v227 = vld [vmem:[%s207 + $0x8] sm:$0xff]
      %228 = vst [vmem:[#allocation2] sm:$0xff] 0
      %229 = vst [vmem:[#allocation2 + $0x18] sm:$0xff] 0
      %v232 = vunpack.c.l.b16 %v226
      %v233 = vunpack.c.h.b16 %v226
      %v234 = vunpack.c.l.b16 %v227
      %v235 = vunpack.c.h.b16 %v227
      %v236 = vpack.c.b16 %v234, %v232
      %v237 = vpack.c.b16 %v235, %v233
      %240 = vst [vmem:[#allocation2 + $0x8] sm:$0xff] %v236
      %241 = vst [vmem:[#allocation2 + $0x10] sm:$0xff] %v237
      %v242 = vlaneseq
      %v243 = vand.u32 %v242, 127
      %v244 = vadd.s32 %v243, 128
      %vm245 = vcmp.lt.s32.totalorder %v243, 0
      %v246 = vsub.s32 0, %v243
      %v247 = vsel %vm245, %v246, %v243
      %v248 = vshrl.u32 %v247, 4
      %v249 = vand.u32 %v247, 15
      %v250 = vsub.s32 0, %v249
      %v251 = vsel %vm245, %v250, %v249
      %vm252 = vcmp.lt.s32.totalorder %v244, 0
      %v253 = vsub.s32 0, %v244
      %v254 = vsel %vm252, %v253, %v244
      %v255 = vshrl.u32 %v254, 4
      %v256 = vand.u32 %v254, 15
      %v257 = vsub.s32 0, %v256
      %v258 = vsel %vm252, %v257, %v256
      %vm259 = vcmp.ne.s32.totalorder %v251, 0
      %vm260 = vcmp.ne.s32.totalorder %v258, 0
      %vm261 = vcmp.lt.s32.totalorder %v251, 0
      %vm262 = vcmp.lt.s32.totalorder %v258, 0
      %vm263 = vmand %vm261, %vm259
      %vm264 = vmand %vm262, %vm260
      %v265 = vadd.s32 %v251, 16
      %v266 = vadd.s32 %v258, 16
      %v267 = vsel %vm263, %v265, %v251
      %v268 = vsel %vm264, %v266, %v258
      %vm269 = vcmp.ge.s32.totalorder %v267, 1
      %vm270 = vcmp.ge.s32.totalorder %v268, 1
      %vm271 = vcmp.le.s32.totalorder %v267, 14
      %vm272 = vcmp.le.s32.totalorder %v268, 14
      %v273 = vld [vmem:[#allocation2] sm:$0xff]
      %v274 = vld [vmem:[#allocation2 + $0x8] sm:$0xff]
      %v275 = vld [vmem:[#allocation2 + $0x10] sm:$0xff]
      %v276 = vsel %vm269, 1, 0
      %v277 = vsel %vm270, 1, 0
      %vm278 = vcmp.eq.s32.totalorder %v276, 1
      %vm279 = vcmp.eq.s32.totalorder %v277, 1
      %vm280 = vmpackc.low %vm279, %vm278
      %v281 = vsel %vm280, 65537, 0
      %v282 = vlaneseq
      %v283 = vshrl.u32 %v282, 7
      %v284 = vsub.s32 0, %v283
      %v285 = vrot.slane %v281, %v284
      %v286 = vlaneseq
      %v287 = vshrl.u32 %v286, 7
      %v288 = vsub.s32 4, %v287
      %v289 = vrot.slane %v281, %v288
      %290 = vrot.lane.b32.xlu0 %v285, 111
      %v291 = vpop.permute.xlu0 %290
      %292 = vrot.lane.b32.xlu0 %v289, 111
      %v293 = vpop.permute.xlu0 %292
      %vm294 = vcmask 908288
      %v295 = vsel %vm294, %v291, %v293
      %vm296 = vcmp.ne.s16.totalorder %v291, 0
      %vm297 = vcmp.ne.s16.totalorder %v295, 0
      %vm298 = vcmp.ne.s16.totalorder %v293, 0
      %v299 = vsel %vm296, %v273, 0
      %v300 = vsel %vm297, %v274, 0
      %v301 = vsel %vm298, %v275, 0
      %v302 = vld [vmem:[%s1] sm:$0xf]
      %v303 = vld [vmem:[%s1 + $0x4] sm:$0xf]
      %s304 = scalar_lea.vmem %s1, 8
      %v305 = vld [vmem:[%s304] sm:$0xf]
      %v306 = vld [vmem:[%s304 + $0x4] sm:$0xf]
      %v309 = vunpack.c.l.b16 %v305
      %v310 = vunpack.c.l.b16 %v306
      %v311 = vpack.c.b16 %v310, %v309
      %315 = vrot.lane.b32.xlu0 %v273, 16
      %v316 = vpop.permute.xlu0 %315
      %317 = vrot.lane.b32.xlu0 %v274, 16
      %v318 = vpop.permute.xlu0 %317
      %319 = vrot.lane.b32.xlu0 %v275, 16
      %v320 = vpop.permute.xlu0 %319
      %vm321 = vcmask 130048
      %v322 = vsel %vm321, %v316, %v318
      %v323 = vsel %vm321, %v318, %v320
      %vm326 = vcmask 130048
      %v328 = vsel %vm326, %v311, 0
      %330 = vmatprep.subr.bf16.mxu0 %v323
      %331 = vmatpush1.bf16.msra.mxu0 %v322
      %332 = vmatprep.subr.bf16.mxu0 0
      %333 = vmatpush1.bf16.msra.mxu0 0
      %334 = vmatprep.subr.bf16.mxu0 0
      %335 = vmatpush1.bf16.msra.mxu0 0
      %336 = vmatprep.subr.bf16.mxu0 0
      %337 = vmatpush1.bf16.msra.mxu0 0
      %338 = vmatprep.subr.bf16.mxu0 0
      %339 = vmatpush1.bf16.msra.mxu0 0
      %340 = vmatprep.subr.bf16.mxu0 0
      %341 = vmatpush1.bf16.msra.mxu0 0
      %342 = vmatprep.subr.bf16.mxu0 0
      %343 = vmatpush1.bf16.msra.mxu0 0
      %344 = vmatprep.subr.bf16.mxu0 0
      %345 = vmatpush1.bf16.msra.mxu0 0
      %346 = vmatprep.subr.bf16.mxu0 0
      %347 = vmatpush1.bf16.msra.mxu0 0
      %348 = vmatprep.subr.bf16.mxu0 0
      %349 = vmatpush1.bf16.msra.mxu0 0
      %350 = vmatprep.subr.bf16.mxu0 0
      %351 = vmatpush1.bf16.msra.mxu0 0
      %352 = vmatprep.subr.bf16.mxu0 0
      %353 = vmatpush1.bf16.msra.mxu0 0
      %354 = vmatprep.subr.bf16.mxu0 0
      %355 = vmatpush1.bf16.msra.mxu0 0
      %356 = vmatprep.subr.bf16.mxu0 0
      %357 = vmatpush1.bf16.msra.mxu0 0
      %358 = vmatprep.subr.bf16.mxu0 0
      %359 = vmatpush1.bf16.msra.mxu0 0
      %360 = vmatprep.subr.bf16.mxu0 0
      %361 = vmatpush1.bf16.msra.mxu0 0
      %362 = vmatprep.mubr.bf16.mxu0 0
      %363 = vmatmul.mubr.bf16.gmra.mrb[0].mxu0 %v328
      %v364 = vpop.f32.mrb[0].mxu0
      %v365 = vadd.f32 0.0, %v364
      %v366 = vpop.f32.mrb[0].mxu0
      %v367 = vadd.f32 0.0, %v366
      %v368 = vpop.f32.mrb[0].mxu0
      %v369 = vadd.f32 0.0, %v368
      %v370 = vpop.f32.mrb[0].mxu0
      %v371 = vadd.f32 0.0, %v370
      %372 = vdwg.mxu0
      %v375 = vunpack.c.l.b16 %v302
      %v376 = vunpack.c.l.b16 %v303
      %v377 = vpack.c.b16 %v376, %v375
      %381 = vrot.lane.b32.xlu0 %v299, 17
      %v382 = vpop.permute.xlu0 %381
      %383 = vrot.lane.b32.xlu0 %v300, 17
      %v384 = vpop.permute.xlu0 %383
      %385 = vrot.lane.b32.xlu0 %v301, 17
      %v386 = vpop.permute.xlu0 %385
      %vm387 = vcmask 138240
      %v388 = vsel %vm387, %v382, %v384
      %v389 = vsel %vm387, %v384, %v386
      %v393 = vsel %vm326, %v377, 0
      %395 = vmatprep.subr.bf16.mxu0 %v389
      %396 = vmatpush1.bf16.msra.mxu0 %v388
      %397 = vmatprep.subr.bf16.mxu0 0
      %398 = vmatpush1.bf16.msra.mxu0 0
      %399 = vmatprep.subr.bf16.mxu0 0
      %400 = vmatpush1.bf16.msra.mxu0 0
      %401 = vmatprep.subr.bf16.mxu0 0
      %402 = vmatpush1.bf16.msra.mxu0 0
      %403 = vmatprep.subr.bf16.mxu0 0
      %404 = vmatpush1.bf16.msra.mxu0 0
      %405 = vmatprep.subr.bf16.mxu0 0
      %406 = vmatpush1.bf16.msra.mxu0 0
      %407 = vmatprep.subr.bf16.mxu0 0
      %408 = vmatpush1.bf16.msra.mxu0 0
      %409 = vmatprep.subr.bf16.mxu0 0
      %410 = vmatpush1.bf16.msra.mxu0 0
      %411 = vmatprep.subr.bf16.mxu0 0
      %412 = vmatpush1.bf16.msra.mxu0 0
      %413 = vmatprep.subr.bf16.mxu0 0
      %414 = vmatpush1.bf16.msra.mxu0 0
      %415 = vmatprep.subr.bf16.mxu0 0
      %416 = vmatpush1.bf16.msra.mxu0 0
      %417 = vmatprep.subr.bf16.mxu0 0
      %418 = vmatpush1.bf16.msra.mxu0 0
      %419 = vmatprep.subr.bf16.mxu0 0
      %420 = vmatpush1.bf16.msra.mxu0 0
      %421 = vmatprep.subr.bf16.mxu0 0
      %422 = vmatpush1.bf16.msra.mxu0 0
      %423 = vmatprep.subr.bf16.mxu0 0
      %424 = vmatpush1.bf16.msra.mxu0 0
      %425 = vmatprep.subr.bf16.mxu0 0
      %426 = vmatpush1.bf16.msra.mxu0 0
      %427 = vmatprep.mubr.bf16.mxu0 0
      %428 = vmatmul.mubr.bf16.gmra.mrb[0].mxu0 %v393
      %v429 = vpop.f32.mrb[0].mxu0
      %v430 = vadd.f32 %v365, %v429
      %v431 = vpop.f32.mrb[0].mxu0
      %v432 = vadd.f32 %v367, %v431
      %v433 = vpop.f32.mrb[0].mxu0
      %v434 = vadd.f32 %v369, %v433
      %v435 = vpop.f32.mrb[0].mxu0
      %v436 = vadd.f32 %v371, %v435
      %437 = vdwg.mxu0
      %v438 = vsel %vm271, 1, 0
      %v439 = vsel %vm272, 1, 0
      %vm440 = vcmp.eq.s32.totalorder %v438, 1
      %vm441 = vcmp.eq.s32.totalorder %v439, 1
      %vm442 = vmpackc.low %vm441, %vm440
      %v443 = vsel %vm442, 65537, 0
      %v444 = vlaneseq
      %v445 = vshrl.u32 %v444, 7
      %v446 = vsub.s32 0, %v445
      %v447 = vrot.slane %v443, %v446
      %v448 = vlaneseq
      %v449 = vshrl.u32 %v448, 7
      %v450 = vsub.s32 4, %v449
      %v451 = vrot.slane %v443, %v450
      %452 = vrot.lane.b32.xlu0 %v447, 113
      %v453 = vpop.permute.xlu0 %452
      %454 = vrot.lane.b32.xlu0 %v451, 113
      %v455 = vpop.permute.xlu0 %454
      %vm456 = vcmask 924672
      %v457 = vsel %vm456, %v453, %v455
      %vm458 = vcmp.ne.s16.totalorder %v453, 0
      %vm459 = vcmp.ne.s16.totalorder %v457, 0
      %vm460 = vcmp.ne.s16.totalorder %v455, 0
      %v461 = vsel %vm458, %v273, 0
      %v462 = vsel %vm459, %v274, 0
      %v463 = vsel %vm460, %v275, 0
      %s464 = scalar_lea.vmem %s1, 16
      %v465 = vld [vmem:[%s464] sm:$0xf]
      %v466 = vld [vmem:[%s464 + $0x4] sm:$0xf]
      %v469 = vunpack.c.l.b16 %v465
      %v470 = vunpack.c.l.b16 %v466
      %v471 = vpack.c.b16 %v470, %v469
      %475 = vrot.lane.b32.xlu0 %v461, 15
      %v476 = vpop.permute.xlu0 %475
      %477 = vrot.lane.b32.xlu0 %v462, 15
      %v478 = vpop.permute.xlu0 %477
      %479 = vrot.lane.b32.xlu0 %v463, 15
      %v480 = vpop.permute.xlu0 %479
      %vm481 = vcmask 121856
      %v482 = vsel %vm481, %v476, %v478
      %v483 = vsel %vm481, %v478, %v480
      %v487 = vsel %vm326, %v471, 0
      %489 = vmatprep.subr.bf16.mxu0 %v483
      %490 = vmatpush1.bf16.msra.mxu0 %v482
      %491 = vmatprep.subr.bf16.mxu0 0
      %492 = vmatpush1.bf16.msra.mxu0 0
      %493 = vmatprep.subr.bf16.mxu0 0
      %494 = vmatpush1.bf16.msra.mxu0 0
      %495 = vmatprep.subr.bf16.mxu0 0
      %496 = vmatpush1.bf16.msra.mxu0 0
      %497 = vmatprep.subr.bf16.mxu0 0
      %498 = vmatpush1.bf16.msra.mxu0 0
      %499 = vmatprep.subr.bf16.mxu0 0
      %500 = vmatpush1.bf16.msra.mxu0 0
      %501 = vmatprep.subr.bf16.mxu0 0
      %502 = vmatpush1.bf16.msra.mxu0 0
      %503 = vmatprep.subr.bf16.mxu0 0
      %504 = vmatpush1.bf16.msra.mxu0 0
      %505 = vmatprep.subr.bf16.mxu0 0
      %506 = vmatpush1.bf16.msra.mxu0 0
      %507 = vmatprep.subr.bf16.mxu0 0
      %508 = vmatpush1.bf16.msra.mxu0 0
      %509 = vmatprep.subr.bf16.mxu0 0
      %510 = vmatpush1.bf16.msra.mxu0 0
      %511 = vmatprep.subr.bf16.mxu0 0
      %512 = vmatpush1.bf16.msra.mxu0 0
      %513 = vmatprep.subr.bf16.mxu0 0
      %514 = vmatpush1.bf16.msra.mxu0 0
      %515 = vmatprep.subr.bf16.mxu0 0
      %516 = vmatpush1.bf16.msra.mxu0 0
      %517 = vmatprep.subr.bf16.mxu0 0
      %518 = vmatpush1.bf16.msra.mxu0 0
      %519 = vmatprep.subr.bf16.mxu0 0
      %520 = vmatpush1.bf16.msra.mxu0 0
      %521 = vmatprep.mubr.bf16.mxu0 0
      %522 = vmatmul.mubr.bf16.gmra.mrb[0].mxu0 %v487
      %v523 = vpop.f32.mrb[0].mxu0
      %v524 = vadd.f32 0.0, %v523
      %v525 = vpop.f32.mrb[0].mxu0
      %v526 = vadd.f32 0.0, %v525
      %v527 = vpop.f32.mrb[0].mxu0
      %v528 = vadd.f32 0.0, %v527
      %v529 = vpop.f32.mrb[0].mxu0
      %v530 = vadd.f32 0.0, %v529
      %531 = vdwg.mxu0
      %v532 = vadd.f32 %v430, %v524
      %v533 = vadd.f32 %v432, %v526
      %v534 = vadd.f32 %v434, %v528
      %v535 = vadd.f32 %v436, %v530
      %536 = vrot.lane.b32.xlu0 %v285, 127
      %v537 = vpop.permute.xlu0 %536
      %538 = vrot.lane.b32.xlu0 %v289, 127
      %v539 = vpop.permute.xlu0 %538
      %vm540 = vcmask 1039360
      %v541 = vsel %vm540, %v537, %v539
      %vm542 = vcmp.ne.s16.totalorder %v537, 0
      %vm543 = vcmp.ne.s16.totalorder %v541, 0
      %vm544 = vcmp.ne.s16.totalorder %v539, 0
      %v545 = vsel %vm542, %v273, 0
      %v546 = vsel %vm543, %v274, 0
      %v547 = vsel %vm544, %v275, 0
      %s548 = scalar_lea.vmem %s1, 24
      %v549 = vld [vmem:[%s548] sm:$0xf]
      %v550 = vld [vmem:[%s548 + $0x4] sm:$0xf]
      %v553 = vunpack.c.l.b16 %v549
      %v554 = vunpack.c.l.b16 %v550
      %v555 = vpack.c.b16 %v554, %v553
      %559 = vrot.lane.b32.xlu0 %v545, 1
      %v560 = vpop.permute.xlu0 %559
      %561 = vrot.lane.b32.xlu0 %v546, 1
      %v562 = vpop.permute.xlu0 %561
      %563 = vrot.lane.b32.xlu0 %v547, 1
      %v564 = vpop.permute.xlu0 %563
      %vm565 = vcmask 7168
      %v566 = vsel %vm565, %v560, %v562
      %v567 = vsel %vm565, %v562, %v564
      %v571 = vsel %vm326, %v555, 0
      %573 = vmatprep.subr.bf16.mxu0 %v567
      %574 = vmatpush1.bf16.msra.mxu0 %v566
      %575 = vmatprep.subr.bf16.mxu0 0
      %576 = vmatpush1.bf16.msra.mxu0 0
      %577 = vmatprep.subr.bf16.mxu0 0
      %578 = vmatpush1.bf16.msra.mxu0 0
      %579 = vmatprep.subr.bf16.mxu0 0
      %580 = vmatpush1.bf16.msra.mxu0 0
      %581 = vmatprep.subr.bf16.mxu0 0
      %582 = vmatpush1.bf16.msra.mxu0 0
      %583 = vmatprep.subr.bf16.mxu0 0
      %584 = vmatpush1.bf16.msra.mxu0 0
      %585 = vmatprep.subr.bf16.mxu0 0
      %586 = vmatpush1.bf16.msra.mxu0 0
      %587 = vmatprep.subr.bf16.mxu0 0
      %588 = vmatpush1.bf16.msra.mxu0 0
      %589 = vmatprep.subr.bf16.mxu0 0
      %590 = vmatpush1.bf16.msra.mxu0 0
      %591 = vmatprep.subr.bf16.mxu0 0
      %592 = vmatpush1.bf16.msra.mxu0 0
      %593 = vmatprep.subr.bf16.mxu0 0
      %594 = vmatpush1.bf16.msra.mxu0 0
      %595 = vmatprep.subr.bf16.mxu0 0
      %596 = vmatpush1.bf16.msra.mxu0 0
      %597 = vmatprep.subr.bf16.mxu0 0
      %598 = vmatpush1.bf16.msra.mxu0 0
      %599 = vmatprep.subr.bf16.mxu0 0
      %600 = vmatpush1.bf16.msra.mxu0 0
      %601 = vmatprep.subr.bf16.mxu0 0
      %602 = vmatpush1.bf16.msra.mxu0 0
      %603 = vmatprep.subr.bf16.mxu0 0
      %604 = vmatpush1.bf16.msra.mxu0 0
      %605 = vmatprep.mubr.bf16.mxu0 0
      %606 = vmatmul.mubr.bf16.gmra.mrb[0].mxu0 %v571
      %v607 = vpop.f32.mrb[0].mxu0
      %v608 = vadd.f32 0.0, %v607
      %v609 = vpop.f32.mrb[0].mxu0
      %v610 = vadd.f32 0.0, %v609
      %v611 = vpop.f32.mrb[0].mxu0
      %v612 = vadd.f32 0.0, %v611
      %v613 = vpop.f32.mrb[0].mxu0
      %v614 = vadd.f32 0.0, %v613
      %615 = vdwg.mxu0
      %v616 = vadd.f32 %v532, %v608
      %v617 = vadd.f32 %v533, %v610
      %v618 = vadd.f32 %v534, %v612
      %v619 = vadd.f32 %v535, %v614
      %s620 = scalar_lea.vmem %s1, 32
      %v621 = vld [vmem:[%s620] sm:$0xf]
      %v622 = vld [vmem:[%s620 + $0x4] sm:$0xf]
      %v625 = vunpack.c.l.b16 %v621
      %v626 = vunpack.c.l.b16 %v622
      %v627 = vpack.c.b16 %v626, %v625
      %v629 = vsel %vm326, %v627, 0
      %631 = vmatprep.subr.bf16.mxu0 %v275
      %632 = vmatpush1.bf16.msra.mxu0 %v274
      %633 = vmatprep.subr.bf16.mxu0 0
      %634 = vmatpush1.bf16.msra.mxu0 0
      %635 = vmatprep.subr.bf16.mxu0 0
      %636 = vmatpush1.bf16.msra.mxu0 0
      %637 = vmatprep.subr.bf16.mxu0 0
      %638 = vmatpush1.bf16.msra.mxu0 0
      %639 = vmatprep.subr.bf16.mxu0 0
      %640 = vmatpush1.bf16.msra.mxu0 0
      %641 = vmatprep.subr.bf16.mxu0 0
      %642 = vmatpush1.bf16.msra.mxu0 0
      %643 = vmatprep.subr.bf16.mxu0 0
      %644 = vmatpush1.bf16.msra.mxu0 0
      %645 = vmatprep.subr.bf16.mxu0 0
      %646 = vmatpush1.bf16.msra.mxu0 0
      %647 = vmatprep.subr.bf16.mxu0 0
      %648 = vmatpush1.bf16.msra.mxu0 0
      %649 = vmatprep.subr.bf16.mxu0 0
      %650 = vmatpush1.bf16.msra.mxu0 0
      %651 = vmatprep.subr.bf16.mxu0 0
      %652 = vmatpush1.bf16.msra.mxu0 0
      %653 = vmatprep.subr.bf16.mxu0 0
      %654 = vmatpush1.bf16.msra.mxu0 0
      %655 = vmatprep.subr.bf16.mxu0 0
      %656 = vmatpush1.bf16.msra.mxu0 0
      %657 = vmatprep.subr.bf16.mxu0 0
      %658 = vmatpush1.bf16.msra.mxu0 0
      %659 = vmatprep.subr.bf16.mxu0 0
      %660 = vmatpush1.bf16.msra.mxu0 0
      %661 = vmatprep.subr.bf16.mxu0 0
      %662 = vmatpush1.bf16.msra.mxu0 0
      %663 = vmatprep.mubr.bf16.mxu0 0
      %664 = vmatmul.mubr.bf16.gmra.mrb[0].mxu0 %v629
      %v665 = vpop.f32.mrb[0].mxu0
      %v666 = vadd.f32 0.0, %v665
      %v667 = vpop.f32.mrb[0].mxu0
      %v668 = vadd.f32 0.0, %v667
      %v669 = vpop.f32.mrb[0].mxu0
      %v670 = vadd.f32 0.0, %v669
      %v671 = vpop.f32.mrb[0].mxu0
      %v672 = vadd.f32 0.0, %v671
      %673 = vdwg.mxu0
      %v674 = vadd.f32 %v616, %v666
      %v675 = vadd.f32 %v617, %v668
      %v676 = vadd.f32 %v618, %v670
      %v677 = vadd.f32 %v619, %v672
      %v678 = vld [vmem:[#allocation2 + $0x8] sm:$0xff]
      %v679 = vld [vmem:[#allocation2 + $0x10] sm:$0xff]
      %v680 = vld [vmem:[#allocation2 + $0x18] sm:$0xff]
      %681 = vrot.lane.b32.xlu0 %v447, 1
      %v682 = vpop.permute.xlu0 %681
      %683 = vrot.lane.b32.xlu0 %v451, 1
      %v684 = vpop.permute.xlu0 %683
      %v685 = vsel %vm565, %v682, %v684
      %vm686 = vcmp.ne.s16.totalorder %v682, 0
      %vm687 = vcmp.ne.s16.totalorder %v685, 0
      %vm688 = vcmp.ne.s16.totalorder %v684, 0
      %v689 = vsel %vm686, %v678, 0
      %v690 = vsel %vm687, %v679, 0
      %v691 = vsel %vm688, %v680, 0
      %s692 = scalar_lea.vmem %s1, 40
      %v693 = vld [vmem:[%s692] sm:$0xf]
      %v694 = vld [vmem:[%s692 + $0x4] sm:$0xf]
      %v697 = vunpack.c.l.b16 %v693
      %v698 = vunpack.c.l.b16 %v694
      %v699 = vpack.c.b16 %v698, %v697
      %703 = vrot.lane.b32.xlu0 %v689, 127
      %v704 = vpop.permute.xlu0 %703
      %705 = vrot.lane.b32.xlu0 %v690, 127
      %v706 = vpop.permute.xlu0 %705
      %707 = vrot.lane.b32.xlu0 %v691, 127
      %v708 = vpop.permute.xlu0 %707
      %v709 = vsel %vm540, %v704, %v706
      %v710 = vsel %vm540, %v706, %v708
      %v714 = vsel %vm326, %v699, 0
      %716 = vmatprep.subr.bf16.mxu0 %v710
      %717 = vmatpush1.bf16.msra.mxu0 %v709
      %718 = vmatprep.subr.bf16.mxu0 0
      %719 = vmatpush1.bf16.msra.mxu0 0
      %720 = vmatprep.subr.bf16.mxu0 0
      %721 = vmatpush1.bf16.msra.mxu0 0
      %722 = vmatprep.subr.bf16.mxu0 0
      %723 = vmatpush1.bf16.msra.mxu0 0
      %724 = vmatprep.subr.bf16.mxu0 0
      %725 = vmatpush1.bf16.msra.mxu0 0
      %726 = vmatprep.subr.bf16.mxu0 0
      %727 = vmatpush1.bf16.msra.mxu0 0
      %728 = vmatprep.subr.bf16.mxu0 0
      %729 = vmatpush1.bf16.msra.mxu0 0
      %730 = vmatprep.subr.bf16.mxu0 0
      %731 = vmatpush1.bf16.msra.mxu0 0
      %732 = vmatprep.subr.bf16.mxu0 0
      %733 = vmatpush1.bf16.msra.mxu0 0
      %734 = vmatprep.subr.bf16.mxu0 0
      %735 = vmatpush1.bf16.msra.mxu0 0
      %736 = vmatprep.subr.bf16.mxu0 0
      %737 = vmatpush1.bf16.msra.mxu0 0
      %738 = vmatprep.subr.bf16.mxu0 0
      %739 = vmatpush1.bf16.msra.mxu0 0
      %740 = vmatprep.subr.bf16.mxu0 0
      %741 = vmatpush1.bf16.msra.mxu0 0
      %742 = vmatprep.subr.bf16.mxu0 0
      %743 = vmatpush1.bf16.msra.mxu0 0
      %744 = vmatprep.subr.bf16.mxu0 0
      %745 = vmatpush1.bf16.msra.mxu0 0
      %746 = vmatprep.subr.bf16.mxu0 0
      %747 = vmatpush1.bf16.msra.mxu0 0
      %748 = vmatprep.mubr.bf16.mxu0 0
      %749 = vmatmul.mubr.bf16.gmra.mrb[0].mxu0 %v714
      %v750 = vpop.f32.mrb[0].mxu0
      %v751 = vadd.f32 0.0, %v750
      %v752 = vpop.f32.mrb[0].mxu0
      %v753 = vadd.f32 0.0, %v752
      %v754 = vpop.f32.mrb[0].mxu0
      %v755 = vadd.f32 0.0, %v754
      %v756 = vpop.f32.mrb[0].mxu0
      %v757 = vadd.f32 0.0, %v756
      %758 = vdwg.mxu0
      %v759 = vadd.f32 %v674, %v751
      %v760 = vadd.f32 %v675, %v753
      %v761 = vadd.f32 %v676, %v755
      %v762 = vadd.f32 %v677, %v757
      %763 = vrot.lane.b32.xlu0 %v285, 15
      %v764 = vpop.permute.xlu0 %763
      %765 = vrot.lane.b32.xlu0 %v289, 15
      %v766 = vpop.permute.xlu0 %765
      %v767 = vsel %vm481, %v764, %v766
      %vm768 = vcmp.ne.s16.totalorder %v764, 0
      %vm769 = vcmp.ne.s16.totalorder %v767, 0
      %vm770 = vcmp.ne.s16.totalorder %v766, 0
      %v771 = vsel %vm768, %v678, 0
      %v772 = vsel %vm769, %v679, 0
      %v773 = vsel %vm770, %v680, 0
      %s774 = scalar_lea.vmem %s1, 48
      %v775 = vld [vmem:[%s774] sm:$0xf]
      %v776 = vld [vmem:[%s774 + $0x4] sm:$0xf]
      %v779 = vunpack.c.l.b16 %v775
      %v780 = vunpack.c.l.b16 %v776
      %v781 = vpack.c.b16 %v780, %v779
      %785 = vrot.lane.b32.xlu0 %v771, 113
      %v786 = vpop.permute.xlu0 %785
      %787 = vrot.lane.b32.xlu0 %v772, 113
      %v788 = vpop.permute.xlu0 %787
      %789 = vrot.lane.b32.xlu0 %v773, 113
      %v790 = vpop.permute.xlu0 %789
      %v791 = vsel %vm456, %v786, %v788
      %v792 = vsel %vm456, %v788, %v790
      %v796 = vsel %vm326, %v781, 0
      %798 = vmatprep.subr.bf16.mxu0 %v792
      %799 = vmatpush1.bf16.msra.mxu0 %v791
      %800 = vmatprep.subr.bf16.mxu0 0
      %801 = vmatpush1.bf16.msra.mxu0 0
      %802 = vmatprep.subr.bf16.mxu0 0
      %803 = vmatpush1.bf16.msra.mxu0 0
      %804 = vmatprep.subr.bf16.mxu0 0
      %805 = vmatpush1.bf16.msra.mxu0 0
      %806 = vmatprep.subr.bf16.mxu0 0
      %807 = vmatpush1.bf16.msra.mxu0 0
      %808 = vmatprep.subr.bf16.mxu0 0
      %809 = vmatpush1.bf16.msra.mxu0 0
      %810 = vmatprep.subr.bf16.mxu0 0
      %811 = vmatpush1.bf16.msra.mxu0 0
      %812 = vmatprep.subr.bf16.mxu0 0
      %813 = vmatpush1.bf16.msra.mxu0 0
      %814 = vmatprep.subr.bf16.mxu0 0
      %815 = vmatpush1.bf16.msra.mxu0 0
      %816 = vmatprep.subr.bf16.mxu0 0
      %817 = vmatpush1.bf16.msra.mxu0 0
      %818 = vmatprep.subr.bf16.mxu0 0
      %819 = vmatpush1.bf16.msra.mxu0 0
      %820 = vmatprep.subr.bf16.mxu0 0
      %821 = vmatpush1.bf16.msra.mxu0 0
      %822 = vmatprep.subr.bf16.mxu0 0
      %823 = vmatpush1.bf16.msra.mxu0 0
      %824 = vmatprep.subr.bf16.mxu0 0
      %825 = vmatpush1.bf16.msra.mxu0 0
      %826 = vmatprep.subr.bf16.mxu0 0
      %827 = vmatpush1.bf16.msra.mxu0 0
      %828 = vmatprep.subr.bf16.mxu0 0
      %829 = vmatpush1.bf16.msra.mxu0 0
      %830 = vmatprep.mubr.bf16.mxu0 0
      %831 = vmatmul.mubr.bf16.gmra.mrb[0].mxu0 %v796
      %v832 = vpop.f32.mrb[0].mxu0
      %v833 = vadd.f32 0.0, %v832
      %v834 = vpop.f32.mrb[0].mxu0
      %v835 = vadd.f32 0.0, %v834
      %v836 = vpop.f32.mrb[0].mxu0
      %v837 = vadd.f32 0.0, %v836
      %v838 = vpop.f32.mrb[0].mxu0
      %v839 = vadd.f32 0.0, %v838
      %840 = vdwg.mxu0
      %v841 = vadd.f32 %v759, %v833
      %v842 = vadd.f32 %v760, %v835
      %v843 = vadd.f32 %v761, %v837
      %v844 = vadd.f32 %v762, %v839
      %s845 = scalar_lea.vmem %s1, 56
      %v846 = vld [vmem:[%s845] sm:$0xf]
      %v847 = vld [vmem:[%s845 + $0x4] sm:$0xf]
      %v850 = vunpack.c.l.b16 %v846
      %v851 = vunpack.c.l.b16 %v847
      %v852 = vpack.c.b16 %v851, %v850
      %856 = vrot.lane.b32.xlu0 %v678, 112
      %v857 = vpop.permute.xlu0 %856
      %858 = vrot.lane.b32.xlu0 %v679, 112
      %v859 = vpop.permute.xlu0 %858
      %860 = vrot.lane.b32.xlu0 %v680, 112
      %v861 = vpop.permute.xlu0 %860
      %vm862 = vcmask 916480
      %v863 = vsel %vm862, %v857, %v859
      %v864 = vsel %vm862, %v859, %v861
      %v868 = vsel %vm326, %v852, 0
      %870 = vmatprep.subr.bf16.mxu0 %v864
      %871 = vmatpush1.bf16.msra.mxu0 %v863
      %872 = vmatprep.subr.bf16.mxu0 0
      %873 = vmatpush1.bf16.msra.mxu0 0
      %874 = vmatprep.subr.bf16.mxu0 0
      %875 = vmatpush1.bf16.msra.mxu0 0
      %876 = vmatprep.subr.bf16.mxu0 0
      %877 = vmatpush1.bf16.msra.mxu0 0
      %878 = vmatprep.subr.bf16.mxu0 0
      %879 = vmatpush1.bf16.msra.mxu0 0
      %880 = vmatprep.subr.bf16.mxu0 0
      %881 = vmatpush1.bf16.msra.mxu0 0
      %882 = vmatprep.subr.bf16.mxu0 0
      %883 = vmatpush1.bf16.msra.mxu0 0
      %884 = vmatprep.subr.bf16.mxu0 0
      %885 = vmatpush1.bf16.msra.mxu0 0
      %886 = vmatprep.subr.bf16.mxu0 0
      %887 = vmatpush1.bf16.msra.mxu0 0
      %888 = vmatprep.subr.bf16.mxu0 0
      %889 = vmatpush1.bf16.msra.mxu0 0
      %890 = vmatprep.subr.bf16.mxu0 0
      %891 = vmatpush1.bf16.msra.mxu0 0
      %892 = vmatprep.subr.bf16.mxu0 0
      %893 = vmatpush1.bf16.msra.mxu0 0
      %894 = vmatprep.subr.bf16.mxu0 0
      %895 = vmatpush1.bf16.msra.mxu0 0
      %896 = vmatprep.subr.bf16.mxu0 0
      %897 = vmatpush1.bf16.msra.mxu0 0
      %898 = vmatprep.subr.bf16.mxu0 0
      %899 = vmatpush1.bf16.msra.mxu0 0
      %900 = vmatprep.subr.bf16.mxu0 0
      %901 = vmatpush1.bf16.msra.mxu0 0
      %902 = vmatprep.mubr.bf16.mxu0 0
      %903 = vmatmul.mubr.bf16.gmra.mrb[0].mxu0 %v868
      %v904 = vpop.f32.mrb[0].mxu0
      %v905 = vadd.f32 0.0, %v904
      %v906 = vpop.f32.mrb[0].mxu0
      %v907 = vadd.f32 0.0, %v906
      %v908 = vpop.f32.mrb[0].mxu0
      %v909 = vadd.f32 0.0, %v908
      %v910 = vpop.f32.mrb[0].mxu0
      %v911 = vadd.f32 0.0, %v910
      %912 = vdwg.mxu0
      %v913 = vadd.f32 %v841, %v905
      %v914 = vadd.f32 %v842, %v907
      %v915 = vadd.f32 %v843, %v909
      %v916 = vadd.f32 %v844, %v911
      %917 = vrot.lane.b32.xlu0 %v447, 17
      %v918 = vpop.permute.xlu0 %917
      %919 = vrot.lane.b32.xlu0 %v451, 17
      %v920 = vpop.permute.xlu0 %919
      %v921 = vsel %vm387, %v918, %v920
      %vm922 = vcmp.ne.s16.totalorder %v918, 0
      %vm923 = vcmp.ne.s16.totalorder %v921, 0
      %vm924 = vcmp.ne.s16.totalorder %v920, 0
      %v925 = vsel %vm922, %v678, 0
      %v926 = vsel %vm923, %v679, 0
      %v927 = vsel %vm924, %v680, 0
      %s928 = scalar_lea.vmem %s1, 64
      %v929 = vld [vmem:[%s928] sm:$0xf]
      %v930 = vld [vmem:[%s928 + $0x4] sm:$0xf]
      %v933 = vunpack.c.l.b16 %v929
      %v934 = vunpack.c.l.b16 %v930
      %v935 = vpack.c.b16 %v934, %v933
      %939 = vrot.lane.b32.xlu0 %v925, 111
      %v940 = vpop.permute.xlu0 %939
      %941 = vrot.lane.b32.xlu0 %v926, 111
      %v942 = vpop.permute.xlu0 %941
      %943 = vrot.lane.b32.xlu0 %v927, 111
      %v944 = vpop.permute.xlu0 %943
      %v945 = vsel %vm294, %v940, %v942
      %v946 = vsel %vm294, %v942, %v944
      %v950 = vsel %vm326, %v935, 0
      %952 = vmatprep.subr.bf16.mxu0 %v946
      %953 = vmatpush1.bf16.msra.mxu0 %v945
      %954 = vmatprep.subr.bf16.mxu0 0
      %955 = vmatpush1.bf16.msra.mxu0 0
      %956 = vmatprep.subr.bf16.mxu0 0
      %957 = vmatpush1.bf16.msra.mxu0 0
      %958 = vmatprep.subr.bf16.mxu0 0
      %959 = vmatpush1.bf16.msra.mxu0 0
      %960 = vmatprep.subr.bf16.mxu0 0
      %961 = vmatpush1.bf16.msra.mxu0 0
      %962 = vmatprep.subr.bf16.mxu0 0
      %963 = vmatpush1.bf16.msra.mxu0 0
      %964 = vmatprep.subr.bf16.mxu0 0
      %965 = vmatpush1.bf16.msra.mxu0 0
      %966 = vmatprep.subr.bf16.mxu0 0
      %967 = vmatpush1.bf16.msra.mxu0 0
      %968 = vmatprep.subr.bf16.mxu0 0
      %969 = vmatpush1.bf16.msra.mxu0 0
      %970 = vmatprep.subr.bf16.mxu0 0
      %971 = vmatpush1.bf16.msra.mxu0 0
      %972 = vmatprep.subr.bf16.mxu0 0
      %973 = vmatpush1.bf16.msra.mxu0 0
      %974 = vmatprep.subr.bf16.mxu0 0
      %975 = vmatpush1.bf16.msra.mxu0 0
      %976 = vmatprep.subr.bf16.mxu0 0
      %977 = vmatpush1.bf16.msra.mxu0 0
      %978 = vmatprep.subr.bf16.mxu0 0
      %979 = vmatpush1.bf16.msra.mxu0 0
      %980 = vmatprep.subr.bf16.mxu0 0
      %981 = vmatpush1.bf16.msra.mxu0 0
      %982 = vmatprep.subr.bf16.mxu0 0
      %983 = vmatpush1.bf16.msra.mxu0 0
      %984 = vmatprep.mubr.bf16.mxu0 0
      %985 = vmatmul.mubr.bf16.gmra.mrb[0].mxu0 %v950
      %v986 = vpop.f32.mrb[0].mxu0
      %v987 = vadd.f32 0.0, %v986
      %v988 = vpop.f32.mrb[0].mxu0
      %v989 = vadd.f32 0.0, %v988
      %v990 = vpop.f32.mrb[0].mxu0
      %v991 = vadd.f32 0.0, %v990
      %v992 = vpop.f32.mrb[0].mxu0
      %v993 = vadd.f32 0.0, %v992
      %994 = vdwg.mxu0
      %v995 = vadd.f32 %v913, %v987
      %v996 = vadd.f32 %v914, %v989
      %v997 = vadd.f32 %v915, %v991
      %v998 = vadd.f32 %v916, %v993
      %v999 = vadd.f32 %v995, %v996
      %1000 = vadd.xlane.f32.xlu0 %v999
      %v1001 = vpop.xlane.xlu0 %1000
      %v1002 = vadd.f32 %v997, %v998
      %1003 = vadd.xlane.f32.xlu0 %v1002
      %v1004 = vpop.xlane.xlu0 %1003
      %vm1005 = vcmask 7168
      %1006 = vst.msk [vmem:[%s217] sm:$0xff] %vm1005, %v1001
      %1007 = vst.msk [vmem:[%s217 + $0x8] sm:$0xff] %vm1005, %v1004
      %v1008 = vmul.f32 %v995, %v995
      %v1009 = vmul.f32 %v996, %v996
      %v1010 = vmul.f32 %v997, %v997
      %v1011 = vmul.f32 %v998, %v998
      %v1012 = vadd.f32 %v1008, %v1009
      %1013 = vadd.xlane.f32.xlu0 %v1012
      %v1014 = vpop.xlane.xlu0 %1013
      %v1015 = vadd.f32 %v1010, %v1011
      %1016 = vadd.xlane.f32.xlu0 %v1015
      %v1017 = vpop.xlane.xlu0 %1016
      %1018 = vst.msk [vmem:[%s222] sm:$0xff] %vm1005, %v1014
      %1019 = vst.msk [vmem:[%s222 + $0x8] sm:$0xff] %vm1005, %v1017
      %v1020 = vpack.c.bf16 %v997, %v995
      %v1021 = vpack.c.bf16 %v998, %v996
      %v1024 = vunpack.c.l.b16 %v1020
      %v1025 = vunpack.c.l.b16 %v1021
      %v1026 = vunpack.c.h.b16 %v1020
      %v1027 = vunpack.c.h.b16 %v1021
      %v1028 = vpack.c.b16 %v1025, %v1024
      %v1029 = vpack.c.b16 %v1027, %v1026
      %1032 = vst [vmem:[%s212] sm:$0xff] %v1028
      %1033 = vst [vmem:[%s212 + $0x8] sm:$0xff] %v1029
      %p1034 = scmp.lt.s32.totalorder %s16, 1
      %s1035 = scalar_select %p1034, %s16, 1
      %s1036 = smul.addr %s1035, 4
      %s1037 = smul.addr %s1036, 4
      %s1038 = scalar_lea.vmem %s2, %s1037
      %p1039 = scmp.lt.s32.totalorder %s16, 1
      %s1040 = scalar_select %p1039, %s16, 1
      %s1041 = smul.addr %s1040, 2
      %s1042 = smul.addr %s1041, 8
      %s1043 = scalar_lea.vmem %s3, %s1042
      %p1044 = scmp.lt.s32.totalorder %s16, 1
      %s1045 = scalar_select %p1044, %s16, 1
      %s1046 = smul.addr %s1045, 2
      %s1047 = smul.addr %s1046, 8
      %s1048 = scalar_lea.vmem %s4, %s1047
      // Predicated region
      $region29: #{no_relu_basic_resnet_unit.3} parent=27 // pred_check
        %p1049 = pneg %p81
      $region30: #{no_relu_basic_resnet_unit.3} parent=27 // pred_check_branch
        %1051 = sbr.rel (%p1049) target = $region32
      $region31: #{no_relu_basic_resnet_unit.3} parent=27 // pred_region
        _
      $region32: #{no_relu_basic_resnet_unit.3} parent=27 // pred_fallthru
        _
      // Predicated region
      $region33: #{no_relu_basic_resnet_unit.3} parent=27 // pred_check
        %p1052 = pneg %p107
      $region34: #{no_relu_basic_resnet_unit.3} parent=27 // pred_check_branch
        %1054 = sbr.rel (%p1052) target = $region36
      $region35: #{no_relu_basic_resnet_unit.3} parent=27 // pred_region
        _
      $region36: #{no_relu_basic_resnet_unit.3} parent=27 // pred_fallthru
        _
      // Predicated region
      $region37: #{no_relu_basic_resnet_unit.3} parent=27 // pred_check
        %p1055 = pneg %p133
      $region38: #{no_relu_basic_resnet_unit.3} parent=27 // pred_check_branch
        %1057 = sbr.rel (%p1055) target = $region40
      $region39: #{no_relu_basic_resnet_unit.3} parent=27 // pred_region
        _
      $region40: #{no_relu_basic_resnet_unit.3} parent=27 // pred_fallthru
        _
    $region28: #{no_relu_basic_resnet_unit.3} parent=5 // pred_fallthru
      _
    %p1058 = scmp.le.s32.totalorder 2, %s11
    // Predicated region
    $region41: #{no_relu_basic_resnet_unit.3} parent=5 // pred_check
      %p1059 = pneg %p1058
    $region42: #{no_relu_basic_resnet_unit.3} parent=5 // pred_check_branch
      %1061 = sbr.rel (%p1059) target = $region44
    $region43: #{no_relu_basic_resnet_unit.3} parent=5 // pred_region
      %s1062 = ssub.s32 %s11, 2
      // Predicated region
      $region45: #{no_relu_basic_resnet_unit.3} parent=43 // pred_check
        %p1063 = pneg %p87
      $region46: #{no_relu_basic_resnet_unit.3} parent=43 // pred_check_branch
        %1065 = sbr.rel (%p1063) target = $region48
      $region47: #{no_relu_basic_resnet_unit.3} parent=43 // pred_region
        %p1066 = scmp.lt.s32.totalorder %s17, 1
        %s1067 = scalar_select %p1066, %s17, 1
        %s1068 = smul.addr %s1067, 4
        %s1069 = smul.addr %s1068, 4
        %s1070 = scalar_lea.vmem %s2, %s1069
      $region48: #{no_relu_basic_resnet_unit.3} parent=43 // pred_fallthru
        _
      // Predicated region
      $region49: #{no_relu_basic_resnet_unit.3} parent=43 // pred_check
        %p1071 = pneg %p113
      $region50: #{no_relu_basic_resnet_unit.3} parent=43 // pred_check_branch
        %1073 = sbr.rel (%p1071) target = $region52
      $region51: #{no_relu_basic_resnet_unit.3} parent=43 // pred_region
        %p1074 = scmp.lt.s32.totalorder %s17, 1
        %s1075 = scalar_select %p1074, %s17, 1
        %s1076 = smul.addr %s1075, 2
        %s1077 = smul.addr %s1076, 8
        %s1078 = scalar_lea.vmem %s3, %s1077
      $region52: #{no_relu_basic_resnet_unit.3} parent=43 // pred_fallthru
        _
      // Predicated region
      $region53: #{no_relu_basic_resnet_unit.3} parent=43 // pred_check
        %p1079 = pneg %p139
      $region54: #{no_relu_basic_resnet_unit.3} parent=43 // pred_check_branch
        %1081 = sbr.rel (%p1079) target = $region56
      $region55: #{no_relu_basic_resnet_unit.3} parent=43 // pred_region
        %p1082 = scmp.lt.s32.totalorder %s17, 1
        %s1083 = scalar_select %p1082, %s17, 1
        %s1084 = smul.addr %s1083, 2
        %s1085 = smul.addr %s1084, 8
        %s1086 = scalar_lea.vmem %s4, %s1085
      $region56: #{no_relu_basic_resnet_unit.3} parent=43 // pred_fallthru
        _
    $region44: #{no_relu_basic_resnet_unit.3} parent=5 // pred_fallthru
      _
  $region6: #{no_relu_basic_resnet_unit.3} parent=0 // loop_footer
    %s15 = sadd.s32 1, %s11
  $region7: #{no_relu_basic_resnet_unit.3} parent=0 // loop_footer_branch
    %10 = sbr.rel target = $region3
  $region8: #{no_relu_basic_resnet_unit.3} parent=0 // loop_exit
    _

</llo_original>
